<compile_context>
chip_gen: v6e
topology: v6e:2x2x1
jax: 0.10.0
libtpu: 0.0.40
codegen_flags: <defaults>
</compile_context>

<pallas_src>
import functools

import jax
import jax.numpy as jnp
from jax.experimental import pallas as pl
from jax.experimental.pallas import tpu as pltpu

EPS = 1e-5
P = 4                   # dim_scale
NCHUNK = P * P * P      # 64 output tokens per input token


def _expand_ln_kernel(x_ref, w_ref, s_ref, st_ref, g_ref, b_ref, o_ref, *, inv_c):
    # x_ref : (TM, dim)     bf16
    # w_ref : (dim, 64*c)   bf16   (c == dim)
    # s_ref : (64*c, 64)    f32    block-diagonal pooling: S[j, k] = 1 if j // c == k
    # st_ref: (64, 64*c)    f32    S transposed (broadcast-back matrix)
    # g_ref : (1, 64*c)     f32    gamma tiled 64x
    # b_ref : (1, 64*c)     f32    beta  tiled 64x
    # o_ref : (TM, 64*c)    f32
    y = jnp.dot(x_ref[...], w_ref[...], preferred_element_type=jnp.float32)     # (TM, 64c)

    s = s_ref[...]
    st = st_ref[...]

    # per-chunk LayerNorm, two-pass, stats at width 64 (not 64c)
    mean64 = jnp.dot(y, s, preferred_element_type=jnp.float32) * inv_c          # (TM, 64)
    mean_b = jnp.dot(mean64, st, preferred_element_type=jnp.float32)            # (TM, 64c)
    yc = y - mean_b
    var64 = jnp.dot(yc * yc, s, preferred_element_type=jnp.float32) * inv_c     # (TM, 64)
    rstd64 = jax.lax.rsqrt(var64 + EPS)                                          # (TM, 64)
    rstd_b = jnp.dot(rstd64, st, preferred_element_type=jnp.float32)            # (TM, 64c)

    o_ref[...] = (yc * rstd_b * g_ref[...] + b_ref[...]).astype(o_ref.dtype)


def _choose_tile(M, dim):
    """Largest token tile that fits a conservative VMEM budget with >= 2 grid steps."""
    c64 = NCHUNK * dim
    budget = 26 * 2**20
    # double-buffered resident operands (w bf16, S/ST f32, gamma/beta f32)
    resident = 2 * dim * c64 * 2 + 2 * c64 * NCHUNK * 4 + 2 * NCHUNK * c64 * 4 + 4 * c64 * 4

    def footprint(tm):
        per_step = 2 * tm * dim * 2 + 2 * tm * c64 * 4    # double-buffered in/out tiles
        temps = 3 * tm * c64 * 4                          # y / yc / rstd_b live values
        return resident + per_step + temps

    chosen = 8
    for tm in (1024, 512, 256, 128, 64, 32, 16, 8):
        if footprint(tm) <= budget and pl.cdiv(M, tm) >= 2:
            chosen = tm
            break
    return chosen, footprint(chosen)


def final_patch_expand_x4_forward(x, w_expand, gamma, beta, input_resolution):
    """x: (B, L, dim) f32; w_expand: (dim, 64*dim) = Linear weight transposed;
       gamma/beta: (dim,). Returns (B, 64*L, dim) f32."""
    D, H, W = input_resolution
    B, L, dim = x.shape
    assert L == D * H * W, "Input feature has wrong size"
    c = dim
    c64 = NCHUNK * c
    assert w_expand.shape == (dim, c64)

    M = B * L
    TM, vmem_est = _choose_tile(M, dim)
    M_pad = pl.cdiv(M, TM) * TM

    # bf16 matmul operands (f32 accumulation in-kernel): halves DMA bytes, 2x MXU rate
    x2d = x.reshape(M, dim).astype(jnp.bfloat16)
    if M_pad != M:
        x2d = jnp.pad(x2d, ((0, M_pad - M), (0, 0)))
    w_bf16 = w_expand.astype(jnp.bfloat16)

    # block-diagonal pooling matrices for per-chunk (size-c) statistics
    S = (jnp.arange(c64)[:, None] // c == jnp.arange(NCHUNK)[None, :]).astype(jnp.float32)
    ST = S.T
    gamma_full = jnp.tile(gamma.astype(jnp.float32), NCHUNK).reshape(1, c64)
    beta_full = jnp.tile(beta.astype(jnp.float32), NCHUNK).reshape(1, c64)

    grid = (M_pad // TM,)
    kernel = functools.partial(_expand_ln_kernel, inv_c=1.0 / float(c))

    cost = pl.CostEstimate(
        flops=int(2 * M_pad * dim * c64 + 4 * 2 * M_pad * c64 * NCHUNK),
        transcendentals=int(M_pad * NCHUNK),
        bytes_accessed=int(M_pad * dim * 2 + dim * c64 * 2 + M_pad * c64 * 4
                           + 2 * c64 * NCHUNK * 4 + 2 * c64 * 4),
    )
    vmem_limit = int(min(48 * 2**20, max(32 * 2**20, int(1.3 * vmem_est))))

    y = pl.pallas_call(
        kernel,
        out_shape=jax.ShapeDtypeStruct((M_pad, c64), jnp.float32),
        grid_spec=pltpu.PrefetchScalarGridSpec(
            num_scalar_prefetch=0,
            grid=grid,
            in_specs=[
                pl.BlockSpec((TM, dim), lambda i: (i, 0)),
                pl.BlockSpec((dim, c64), lambda i: (0, 0)),
                pl.BlockSpec((c64, NCHUNK), lambda i: (0, 0)),
                pl.BlockSpec((NCHUNK, c64), lambda i: (0, 0)),
                pl.BlockSpec((1, c64), lambda i: (0, 0)),
                pl.BlockSpec((1, c64), lambda i: (0, 0)),
            ],
            out_specs=pl.BlockSpec((TM, c64), lambda i: (i, 0)),
        ),
        compiler_params=pltpu.CompilerParams(
            dimension_semantics=("parallel",),
            vmem_limit_bytes=vmem_limit,
        ),
        cost_estimate=cost,
    )(x2d, w_bf16, S, ST, gamma_full, beta_full)

    y = y[:M]
    # TODO(synk): the spatial (p1,p2,p3) rearrange below is a pure index shuffle; fusing it
    # into out_specs would require an in-kernel lane->sublane relayout of every 64*dim row,
    # so it is left to XLA (one extra HBM pass) for lowering robustness.
    y = y.reshape(B, D, H, W, P, P, P, c)
    y = jnp.transpose(y, (0, 1, 4, 2, 5, 3, 6, 7))
    return y.reshape(B, NCHUNK * L, c)


# ------------------------------- pure-JAX references -------------------------------

def _layernorm_ref(y, gamma, beta):
    mean = jnp.mean(y, axis=-1, keepdims=True)
    var = jnp.mean((y - mean) ** 2, axis=-1, keepdims=True)
    return (y - mean) * jax.lax.rsqrt(var + EPS) * gamma + beta


def final_patch_expand_x4_ref(x, w_expand, gamma, beta, input_resolution,
                              matmul_dtype=jnp.float32):
    D, H, W = input_resolution
    B, L, dim = x.shape
    c = dim
    y = jnp.dot(x.astype(matmul_dtype), w_expand.astype(matmul_dtype),
                preferred_element_type=jnp.float32)
    y = y.reshape(B, D, H, W, P, P, P, c)
    y = jnp.transpose(y, (0, 1, 4, 2, 5, 3, 6, 7)).reshape(B, NCHUNK * L, c)
    return _layernorm_ref(y, gamma.astype(jnp.float32), beta.astype(jnp.float32))


if __name__ == "__main__":
    key = jax.random.PRNGKey(0)
    B, dim = 2, 32
    D = H = W = 4
    L = D * H * W

    k1, k2, k3, k4 = jax.random.split(key, 4)
    x = jax.random.normal(k1, (B, L, dim), dtype=jnp.float32)
    # nn.Linear(dim, 64*dim, bias=False): weight is (64*dim, dim); we store its transpose.
    w_expand = jax.random.normal(k2, (dim, NCHUNK * dim), dtype=jnp.float32) * 0.02
    # LayerNorm(dim) affine params (non-default values to exercise the affine path)
    gamma = 1.0 + 0.1 * jax.random.normal(k3, (dim,), dtype=jnp.float32)
    beta = 0.1 * jax.random.normal(k4, (dim,), dtype=jnp.float32)

    out = final_patch_expand_x4_forward(x, w_expand, gamma, beta, (D, H, W))
    out = jax.block_until_ready(out)
    assert out.shape == (B, NCHUNK * L, dim), out.shape
    assert bool(jnp.isfinite(out).all()), "non-finite values in kernel output"

    # exact-semantics (f32 matmul) reference: loose tolerance accounts for bf16 operands
    ref_f32 = final_patch_expand_x4_ref(x, w_expand, gamma, beta, (D, H, W))
    assert jnp.allclose(out, ref_f32, atol=3e-2, rtol=3e-2), (
        "mismatch vs f32 reference, max abs err = %e"
        % float(jnp.max(jnp.abs(out - ref_f32))))

    # bf16-operand-matched reference: tight tolerance validates the fused LayerNorm path
    ref_bf16 = final_patch_expand_x4_ref(x, w_expand, gamma, beta, (D, H, W),
                                         matmul_dtype=jnp.bfloat16)
    assert jnp.allclose(out, ref_bf16, atol=2e-4, rtol=2e-4), (
        "mismatch vs bf16-matched reference, max abs err = %e"
        % float(jnp.max(jnp.abs(out - ref_bf16))))

    print("KERNEL_OK")
</pallas_src>

<mosaic_0001>
module attributes {stable_mosaic.version = 11 : i64} {
  func.func @_expand_ln_kernel(%arg0: i32, %arg1: memref<64x32xbf16, #tpu.memory_space<vmem>>, %arg2: memref<32x2048xbf16, #tpu.memory_space<vmem>>, %arg3: memref<2048x64xf32, #tpu.memory_space<vmem>>, %arg4: memref<64x2048xf32, #tpu.memory_space<vmem>>, %arg5: memref<1x2048xf32, #tpu.memory_space<vmem>>, %arg6: memref<1x2048xf32, #tpu.memory_space<vmem>>, %arg7: memref<64x2048xf32, #tpu.memory_space<vmem>>) attributes {dimension_semantics = [#tpu.dimension_semantics<parallel>], iteration_bounds = array<i64: 2>, scalar_prefetch = 0 : i64, scratch_operands = 0 : i64, tpu.core_type = #tpu.core_type<tc>, window_params = [{transform_indices = @transform_0, window_bounds = array<i64: 64, 32>}, {pipeline_mode = #tpu.pipeline_mode<synchronous>, transform_indices = @transform_1, window_bounds = array<i64: 32, 2048>}, {pipeline_mode = #tpu.pipeline_mode<synchronous>, transform_indices = @transform_2, window_bounds = array<i64: 2048, 64>}, {pipeline_mode = #tpu.pipeline_mode<synchronous>, transform_indices = @transform_3, window_bounds = array<i64: 64, 2048>}, {pipeline_mode = #tpu.pipeline_mode<synchronous>, transform_indices = @transform_4, window_bounds = array<i64: 1, 2048>}, {pipeline_mode = #tpu.pipeline_mode<synchronous>, transform_indices = @transform_5, window_bounds = array<i64: 1, 2048>}, {transform_indices = @transform_6, window_bounds = array<i64: 64, 2048>}]} {
    %c0 = arith.constant 0 : index
    %c0_0 = arith.constant 0 : index
    %0 = vector.load %arg1[%c0, %c0_0] : memref<64x32xbf16, #tpu.memory_space<vmem>>, vector<64x32xbf16>
    %c0_1 = arith.constant 0 : index
    %c0_2 = arith.constant 0 : index
    %1 = vector.load %arg2[%c0_1, %c0_2] : memref<32x2048xbf16, #tpu.memory_space<vmem>>, vector<32x2048xbf16>
    %cst = arith.constant dense<0.000000e+00> : vector<64x2048xf32>
    %2 = tpu.matmul %0, %1, %cst {dimension_numbers = #tpu.dot_dimension_numbers<[1], [0], [0], [1], [0, 0, 1, 1], [], []>} : vector<64x32xbf16>, vector<32x2048xbf16>, vector<64x2048xf32> -> vector<64x2048xf32>
    %c0_3 = arith.constant 0 : index
    %c0_4 = arith.constant 0 : index
    %3 = vector.load %arg3[%c0_3, %c0_4] : memref<2048x64xf32, #tpu.memory_space<vmem>>, vector<2048x64xf32>
    %c0_5 = arith.constant 0 : index
    %c0_6 = arith.constant 0 : index
    %4 = vector.load %arg4[%c0_5, %c0_6] : memref<64x2048xf32, #tpu.memory_space<vmem>>, vector<64x2048xf32>
    %cst_7 = arith.constant dense<0.000000e+00> : vector<64x64xf32>
    %5 = tpu.matmul %2, %3, %cst_7 {dimension_numbers = #tpu.dot_dimension_numbers<[1], [0], [0], [1], [0, 0, 1, 1], [], []>} : vector<64x2048xf32>, vector<2048x64xf32>, vector<64x64xf32> -> vector<64x64xf32>
    %cst_8 = arith.constant 3.125000e-02 : f32
    %6 = vector.broadcast %cst_8 : f32 to vector<64x64xf32>
    %7 = arith.mulf %5, %6 : vector<64x64xf32>
    %cst_9 = arith.constant dense<0.000000e+00> : vector<64x2048xf32>
    %8 = tpu.matmul %7, %4, %cst_9 {dimension_numbers = #tpu.dot_dimension_numbers<[1], [0], [0], [1], [0, 0, 1, 1], [], []>} : vector<64x64xf32>, vector<64x2048xf32>, vector<64x2048xf32> -> vector<64x2048xf32>
    %9 = arith.subf %2, %8 : vector<64x2048xf32>
    %10 = arith.mulf %9, %9 : vector<64x2048xf32>
    %cst_10 = arith.constant dense<0.000000e+00> : vector<64x64xf32>
    %11 = tpu.matmul %10, %3, %cst_10 {dimension_numbers = #tpu.dot_dimension_numbers<[1], [0], [0], [1], [0, 0, 1, 1], [], []>} : vector<64x2048xf32>, vector<2048x64xf32>, vector<64x64xf32> -> vector<64x64xf32>
    %cst_11 = arith.constant 3.125000e-02 : f32
    %12 = vector.broadcast %cst_11 : f32 to vector<64x64xf32>
    %13 = arith.mulf %11, %12 : vector<64x64xf32>
    %cst_12 = arith.constant 9.99999974E-6 : f32
    %14 = vector.broadcast %cst_12 : f32 to vector<64x64xf32>
    %15 = arith.addf %13, %14 : vector<64x64xf32>
    %16 = math.rsqrt %15 : vector<64x64xf32>
    %cst_13 = arith.constant dense<0.000000e+00> : vector<64x2048xf32>
    %17 = tpu.matmul %16, %4, %cst_13 {dimension_numbers = #tpu.dot_dimension_numbers<[1], [0], [0], [1], [0, 0, 1, 1], [], []>} : vector<64x64xf32>, vector<64x2048xf32>, vector<64x2048xf32> -> vector<64x2048xf32>
    %18 = arith.mulf %9, %17 : vector<64x2048xf32>
    %c0_14 = arith.constant 0 : index
    %c0_15 = arith.constant 0 : index
    %19 = vector.load %arg5[%c0_14, %c0_15] : memref<1x2048xf32, #tpu.memory_space<vmem>>, vector<1x2048xf32>
    %20 = vector.broadcast %19 : vector<1x2048xf32> to vector<64x2048xf32>
    %21 = arith.mulf %18, %20 : vector<64x2048xf32>
    %c0_16 = arith.constant 0 : index
    %c0_17 = arith.constant 0 : index
    %22 = vector.load %arg6[%c0_16, %c0_17] : memref<1x2048xf32, #tpu.memory_space<vmem>>, vector<1x2048xf32>
    %23 = vector.broadcast %22 : vector<1x2048xf32> to vector<64x2048xf32>
    %24 = arith.addf %21, %23 : vector<64x2048xf32>
    %c0_18 = arith.constant 0 : index
    %c0_19 = arith.constant 0 : index
    %25 = vector.load %arg7[%c0_18, %c0_19] : memref<64x2048xf32, #tpu.memory_space<vmem>>, vector<64x2048xf32>
    tpu.vector_store %arg7[%c0_18, %c0_19], %24 {strides = array<i32>} : memref<64x2048xf32, #tpu.memory_space<vmem>>, vector<64x2048xf32>,
    return
  }
  func.func @transform_0(%arg0: i32) -> (i32, i32) {
    %c0_i32 = arith.constant 0 : i32
    %c0_i32_0 = arith.constant 0 : i32
    return %arg0, %c0_i32 : i32, i32
  }
  func.func @transform_1(%arg0: i32) -> (i32, i32) {
    %c0_i32 = arith.constant 0 : i32
    %c0_i32_0 = arith.constant 0 : i32
    %c0_i32_1 = arith.constant 0 : i32
    return %c0_i32, %c0_i32_0 : i32, i32
  }
  func.func @transform_2(%arg0: i32) -> (i32, i32) {
    %c0_i32 = arith.constant 0 : i32
    %c0_i32_0 = arith.constant 0 : i32
    %c0_i32_1 = arith.constant 0 : i32
    return %c0_i32, %c0_i32_0 : i32, i32
  }
  func.func @transform_3(%arg0: i32) -> (i32, i32) {
    %c0_i32 = arith.constant 0 : i32
    %c0_i32_0 = arith.constant 0 : i32
    %c0_i32_1 = arith.constant 0 : i32
    return %c0_i32, %c0_i32_0 : i32, i32
  }
  func.func @transform_4(%arg0: i32) -> (i32, i32) {
    %c0_i32 = arith.constant 0 : i32
    %c0_i32_0 = arith.constant 0 : i32
    %c0_i32_1 = arith.constant 0 : i32
    return %c0_i32, %c0_i32_0 : i32, i32
  }
  func.func @transform_5(%arg0: i32) -> (i32, i32) {
    %c0_i32 = arith.constant 0 : i32
    %c0_i32_0 = arith.constant 0 : i32
    %c0_i32_1 = arith.constant 0 : i32
    return %c0_i32, %c0_i32_0 : i32, i32
  }
  func.func @transform_6(%arg0: i32) -> (i32, i32) {
    %c0_i32 = arith.constant 0 : i32
    %c0_i32_0 = arith.constant 0 : i32
    return %arg0, %c0_i32 : i32, i32
  }
}

</mosaic_0001>

<llo_original>
// kernel: tpu_custom_call.1
$region0: #{tpu_custom_call.1}
  #allocation0 [shape = 'u32[]', space=smem, size = 0x4, offset = 0x4, fixed_abs, tag = 'smem constant byte address 0x4 - core index']
  #allocation1 [shape = 'u32[144,128]{1,0:T(1,128)}', space=vmem, size = 0x12000, scoped, tag = 'internal scratch']
  %s0 = inlined_call_operand.vmem [shape: bf16[128,32], index: 0, kind: input, shape index: {}]
  %s1 = inlined_call_operand.vmem [shape: bf16[32,2048], index: 1, kind: input, shape index: {}]
  %s2 = inlined_call_operand.vmem [shape: f32[2048,64], index: 2, kind: input, shape index: {}]
  %s3 = inlined_call_operand.vmem [shape: f32[64,2048], index: 3, kind: input, shape index: {}]
  %s4 = inlined_call_operand.vmem [shape: f32[1,2048], index: 4, kind: input, shape index: {}]
  %s5 = inlined_call_operand.vmem [shape: f32[1,2048], index: 5, kind: input, shape index: {}]
  %s6 = inlined_call_operand.hbm [shape: f32[128,2048], index: 6, kind: output, shape index: {}]
  %s7 = sld [smem:[#allocation0]]
  $region57: #{tpu_custom_call.1} parent=0
    _
  %s9 = ssub.s32 1, %s7
  %s10 = scalar_select 0, %s9, %s7
  $region1: #{tpu_custom_call.1} parent=0
    #allocation2 [shape = 'u8[1048576]{0}', space=vmem, size = 0x100000, scoped, tag = 'output window, operand 0']
    #allocation3 [shape = 's32[2]{0}', space=sflag, size = 0x8, scoped, tag = 'scoped memory for tpu_custom_call.1']
    %11 = vsyncpa [#allocation3], 0
    %s12 = scalar_lea.sflag [#allocation3], 1
    %13 = vsyncpa %s12, 0
    loop: start=0, step=1, limit=4
    $region2: #{tpu_custom_call.1} parent=1 // loop_pre_header
      _
    $region3: #{tpu_custom_call.1} parent=1 // loop_header
      %s15 = sphi 0, %s19
      %p16 = scmp.ge.s32.totalorder %s15, 4
      %s25 = sphi 0, %s27
      %s28 = sphi 0, %s25
      %s29 = sphi 0, %s28
      %s45 = sphi 0, %s29
      %s49 = sphi 0, %s49
      %s51 = sphi 0, %s49
      %s52 = sphi 0, %s51
      %s66 = sphi 0, %s52
      %s70 = sphi 0, %s70
      %s72 = sphi 0, %s70
      %s73 = sphi 0, %s72
      %s87 = sphi 0, %s73
      %s91 = sphi 0, %s91
      %s93 = sphi 0, %s91
      %s94 = sphi 0, %s93
      %s108 = sphi 0, %s94
      %s112 = sphi 0, %s112
      %s114 = sphi 0, %s112
      %s115 = sphi 0, %s114
      %s129 = sphi 0, %s115
      %s133 = sphi 0, %s133
      %s135 = sphi 0, %s133
      %s136 = sphi 0, %s135
      %s150 = sphi 0, %s136
      %s156 = sphi 0, %s158
      %s159 = sphi 0, %s156
      %s160 = sphi 0, %s159
      %s176 = sphi 0, %s160
    $region4: #{tpu_custom_call.1} parent=1 // loop_header_branch
      %18 = sbr.rel (%p16) target = $region8
    $region5: #{tpu_custom_call.1} parent=1 // loop_body
      %s20 = ssub.s32 %s15, 1
      %s21 = ssub.s32 %s15, 2
      %s22 = sadd.s32 %s15, 1
      %s23 = ssub.s32 %s15, %s22
      %p24 = scmp.eq.s32.totalorder %s23, 0
      %s26 = sadd.s32 %s25, 1
      %s27 = scalar_select %p24, %s25, %s26
      %p30 = pneg %p24
      %p31 = scmp.eq.s32.totalorder %s15, 1
      %p32 = por %p30, %p31
      %p33 = scmp.ne.s32.totalorder %s25, %s28
      %p34 = scmp.eq.s32.totalorder %s15, 0
      %p35 = por %p33, %p34
      %p36 = scmp.ne.s32.totalorder %s25, %s28
      %p37 = scmp.eq.s32.totalorder %s20, 1
      %p38 = por %p36, %p37
      %p39 = scmp.ne.s32.totalorder %s28, %s29
      %p40 = scmp.eq.s32.totalorder %s20, 0
      %p41 = por %p39, %p40
      %p42 = scmp.ne.s32.totalorder %s28, %s29
      %p43 = scmp.eq.s32.totalorder %s21, 1
      %p44 = por %p42, %p43
      %p46 = scmp.ne.s32.totalorder %s29, %s45
      %p47 = scmp.eq.s32.totalorder %s21, 0
      %p48 = por %p46, %p47
      %s50 = sadd.s32 %s49, 1
      %p53 = scmp.eq.s32.totalorder %s15, 1
      %p54 = scmp.ne.s32.totalorder %s49, %s51
      %p55 = scmp.eq.s32.totalorder %s15, 0
      %p56 = por %p54, %p55
      %p57 = scmp.ne.s32.totalorder %s49, %s51
      %p58 = scmp.eq.s32.totalorder %s20, 1
      %p59 = por %p57, %p58
      %p60 = scmp.ne.s32.totalorder %s51, %s52
      %p61 = scmp.eq.s32.totalorder %s20, 0
      %p62 = por %p60, %p61
      %p63 = scmp.ne.s32.totalorder %s51, %s52
      %p64 = scmp.eq.s32.totalorder %s21, 1
      %p65 = por %p63, %p64
      %p67 = scmp.ne.s32.totalorder %s52, %s66
      %p68 = scmp.eq.s32.totalorder %s21, 0
      %p69 = por %p67, %p68
      %s71 = sadd.s32 %s70, 1
      %p74 = scmp.eq.s32.totalorder %s15, 1
      %p75 = scmp.ne.s32.totalorder %s70, %s72
      %p76 = scmp.eq.s32.totalorder %s15, 0
      %p77 = por %p75, %p76
      %p78 = scmp.ne.s32.totalorder %s70, %s72
      %p79 = scmp.eq.s32.totalorder %s20, 1
      %p80 = por %p78, %p79
      %p81 = scmp.ne.s32.totalorder %s72, %s73
      %p82 = scmp.eq.s32.totalorder %s20, 0
      %p83 = por %p81, %p82
      %p84 = scmp.ne.s32.totalorder %s72, %s73
      %p85 = scmp.eq.s32.totalorder %s21, 1
      %p86 = por %p84, %p85
      %p88 = scmp.ne.s32.totalorder %s73, %s87
      %p89 = scmp.eq.s32.totalorder %s21, 0
      %p90 = por %p88, %p89
      %s92 = sadd.s32 %s91, 1
      %p95 = scmp.eq.s32.totalorder %s15, 1
      %p96 = scmp.ne.s32.totalorder %s91, %s93
      %p97 = scmp.eq.s32.totalorder %s15, 0
      %p98 = por %p96, %p97
      %p99 = scmp.ne.s32.totalorder %s91, %s93
      %p100 = scmp.eq.s32.totalorder %s20, 1
      %p101 = por %p99, %p100
      %p102 = scmp.ne.s32.totalorder %s93, %s94
      %p103 = scmp.eq.s32.totalorder %s20, 0
      %p104 = por %p102, %p103
      %p105 = scmp.ne.s32.totalorder %s93, %s94
      %p106 = scmp.eq.s32.totalorder %s21, 1
      %p107 = por %p105, %p106
      %p109 = scmp.ne.s32.totalorder %s94, %s108
      %p110 = scmp.eq.s32.totalorder %s21, 0
      %p111 = por %p109, %p110
      %s113 = sadd.s32 %s112, 1
      %p116 = scmp.eq.s32.totalorder %s15, 1
      %p117 = scmp.ne.s32.totalorder %s112, %s114
      %p118 = scmp.eq.s32.totalorder %s15, 0
      %p119 = por %p117, %p118
      %p120 = scmp.ne.s32.totalorder %s112, %s114
      %p121 = scmp.eq.s32.totalorder %s20, 1
      %p122 = por %p120, %p121
      %p123 = scmp.ne.s32.totalorder %s114, %s115
      %p124 = scmp.eq.s32.totalorder %s20, 0
      %p125 = por %p123, %p124
      %p126 = scmp.ne.s32.totalorder %s114, %s115
      %p127 = scmp.eq.s32.totalorder %s21, 1
      %p128 = por %p126, %p127
      %p130 = scmp.ne.s32.totalorder %s115, %s129
      %p131 = scmp.eq.s32.totalorder %s21, 0
      %p132 = por %p130, %p131
      %s134 = sadd.s32 %s133, 1
      %p137 = scmp.eq.s32.totalorder %s15, 1
      %p138 = scmp.ne.s32.totalorder %s133, %s135
      %p139 = scmp.eq.s32.totalorder %s15, 0
      %p140 = por %p138, %p139
      %p141 = scmp.ne.s32.totalorder %s133, %s135
      %p142 = scmp.eq.s32.totalorder %s20, 1
      %p143 = por %p141, %p142
      %p144 = scmp.ne.s32.totalorder %s135, %s136
      %p145 = scmp.eq.s32.totalorder %s20, 0
      %p146 = por %p144, %p145
      %p147 = scmp.ne.s32.totalorder %s135, %s136
      %p148 = scmp.eq.s32.totalorder %s21, 1
      %p149 = por %p147, %p148
      %p151 = scmp.ne.s32.totalorder %s136, %s150
      %p152 = scmp.eq.s32.totalorder %s21, 0
      %p153 = por %p151, %p152
      %s154 = ssub.s32 %s15, %s22
      %p155 = scmp.eq.s32.totalorder %s154, 0
      %s157 = sadd.s32 %s156, 1
      %s158 = scalar_select %p155, %s156, %s157
      %p161 = pneg %p155
      %p162 = scmp.eq.s32.totalorder %s15, 1
      %p163 = por %p161, %p162
      %p164 = scmp.ne.s32.totalorder %s156, %s159
      %p165 = scmp.eq.s32.totalorder %s15, 0
      %p166 = por %p164, %p165
      %p167 = scmp.ne.s32.totalorder %s156, %s159
      %p168 = scmp.eq.s32.totalorder %s20, 1
      %p169 = por %p167, %p168
      %p170 = scmp.ne.s32.totalorder %s159, %s160
      %p171 = scmp.eq.s32.totalorder %s20, 0
      %p172 = por %p170, %p171
      %p173 = scmp.ne.s32.totalorder %s159, %s160
      %p174 = scmp.eq.s32.totalorder %s21, 1
      %p175 = por %p173, %p174
      %p177 = scmp.ne.s32.totalorder %s160, %s176
      %p178 = scmp.eq.s32.totalorder %s21, 0
      %p179 = por %p177, %p178
      %p180 = scmp.le.s32.totalorder 1, %s15
      %p181 = scmp.lt.s32.totalorder %s15, 3
      %p182 = pnand %p180, %p181
      %p183 = pneg %p182
      // Predicated region
      $region9: #{tpu_custom_call.1} parent=5 // pred_check
        _
      $region10: #{tpu_custom_call.1} parent=5 // pred_check_branch
        %185 = sbr.rel (%p182) target = $region12
      $region11: #{tpu_custom_call.1} parent=5 // pred_region
        %s186 = ssub.s32 %s15, 1
        // Predicated region
        $region13: #{tpu_custom_call.1} parent=11 // pred_check
          %p187 = pneg %p62
        $region14: #{tpu_custom_call.1} parent=11 // pred_check_branch
          %189 = sbr.rel (%p187) target = $region16
        $region15: #{tpu_custom_call.1} parent=11 // pred_region
          _
        $region16: #{tpu_custom_call.1} parent=11 // pred_fallthru
          _
        // Predicated region
        $region17: #{tpu_custom_call.1} parent=11 // pred_check
          %p190 = pneg %p83
        $region18: #{tpu_custom_call.1} parent=11 // pred_check_branch
          %192 = sbr.rel (%p190) target = $region20
        $region19: #{tpu_custom_call.1} parent=11 // pred_region
          _
        $region20: #{tpu_custom_call.1} parent=11 // pred_fallthru
          _
        // Predicated region
        $region21: #{tpu_custom_call.1} parent=11 // pred_check
          %p193 = pneg %p104
        $region22: #{tpu_custom_call.1} parent=11 // pred_check_branch
          %195 = sbr.rel (%p193) target = $region24
        $region23: #{tpu_custom_call.1} parent=11 // pred_region
          _
        $region24: #{tpu_custom_call.1} parent=11 // pred_fallthru
          _
        // Predicated region
        $region25: #{tpu_custom_call.1} parent=11 // pred_check
          %p196 = pneg %p125
        $region26: #{tpu_custom_call.1} parent=11 // pred_check_branch
          %198 = sbr.rel (%p196) target = $region28
        $region27: #{tpu_custom_call.1} parent=11 // pred_region
          _
        $region28: #{tpu_custom_call.1} parent=11 // pred_fallthru
          _
        // Predicated region
        $region29: #{tpu_custom_call.1} parent=11 // pred_check
          %p199 = pneg %p146
        $region30: #{tpu_custom_call.1} parent=11 // pred_check_branch
          %201 = sbr.rel (%p199) target = $region32
        $region31: #{tpu_custom_call.1} parent=11 // pred_region
          _
        $region32: #{tpu_custom_call.1} parent=11 // pred_fallthru
          _
      $region12: #{tpu_custom_call.1} parent=5 // pred_fallthru
        _
      %p202 = scmp.lt.s32.totalorder %s15, 2
      // Predicated region
      $region33: #{tpu_custom_call.1} parent=5 // pred_check
        %p203 = pneg %p202
      $region34: #{tpu_custom_call.1} parent=5 // pred_check_branch
        %205 = sbr.rel (%p203) target = $region36
      $region35: #{tpu_custom_call.1} parent=5 // pred_region
        // Predicated region
        $region37: #{tpu_custom_call.1} parent=35 // pred_check
          %p206 = pneg %p35
        $region38: #{tpu_custom_call.1} parent=35 // pred_check_branch
          %208 = sbr.rel (%p206) target = $region40
        $region39: #{tpu_custom_call.1} parent=35 // pred_region
          %s209 = smul.u32 8, %s15
          %p210 = scmp.lt.s32.totalorder %s209, 15
          %s211 = scalar_select %p210, %s209, 15
          %s212 = smul.addr %s211, 4
          %s213 = scalar_lea.vmem %s0, %s212
          %s214 = smul.u32 8, %s15
        $region40: #{tpu_custom_call.1} parent=35 // pred_fallthru
          _
      $region36: #{tpu_custom_call.1} parent=5 // pred_fallthru
        _
      %p215 = scmp.le.s32.totalorder 1, %s15
      %p216 = scmp.lt.s32.totalorder %s15, 3
      %p217 = pnand %p215, %p216
      %p218 = pneg %p217
      // Predicated region
      $region41: #{tpu_custom_call.1} parent=5 // pred_check
        _
      $region42: #{tpu_custom_call.1} parent=5 // pred_check_branch
        %220 = sbr.rel (%p217) target = $region44
      $region43: #{tpu_custom_call.1} parent=5 // pred_region
        %s221 = ssub.s32 %s15, 1
        %s222 = smul.u32 8, %s20
        %p223 = scmp.lt.s32.totalorder %s222, 15
        %s224 = scalar_select %p223, %s222, 15
        %s225 = smul.addr %s224, 4
        %s226 = scalar_lea.vmem %s0, %s225
        %p227 = pneg %p41
        %p228 = pneg %p38
        %p229 = pneg %p62
        %p230 = pneg %p59
        %p231 = pneg %p83
        %p232 = pneg %p80
        %p233 = pneg %p104
        %p234 = pneg %p101
        %p235 = pneg %p125
        %p236 = pneg %p122
        %p237 = pneg %p146
        %p238 = pneg %p143
        %p239 = pneg %p172
        %p240 = pneg %p169
        %s241 = sand.u32 %s159, 1
        %s242 = scalar_lea.sflag [#allocation3], %s241
        %s243 = sand.u32 %s159, 1
        %s244 = smul.addr %s243, 1024
        %s245 = scalar_lea.vmem [#allocation2], %s244
        %s246 = smul.u32 8, %s20
        %p247 = scmp.lt.s32.totalorder %s246, 15
        %s248 = scalar_select %p247, %s246, 15
        %s249 = smul.addr %s248, 4
        %s250 = scalar_lea.vmem %s0, %s249
        %s251 = smul.u32 8, %s20
        %s252 = smul.u32 8, %s20
        %v254 = vld [vmem:[%s250] sm:$0xf]
        %v255 = vld [vmem:[%s250 + $0x4] sm:$0xf]
        %v256 = vld [vmem:[%s250 + $0x8] sm:$0xf]
        %v257 = vld [vmem:[%s250 + $0xc] sm:$0xf]
        %v258 = vld [vmem:[%s250 + $0x10] sm:$0xf]
        %v259 = vld [vmem:[%s250 + $0x14] sm:$0xf]
        %v260 = vld [vmem:[%s250 + $0x18] sm:$0xf]
        %v261 = vld [vmem:[%s250 + $0x1c] sm:$0xf]
        %v262 = vld [vmem:[%s1] sm:$0xff]
        %v263 = vld [vmem:[%s1 + $0x8] sm:$0xff]
        %v264 = vld [vmem:[%s1 + $0x10] sm:$0xff]
        %v265 = vld [vmem:[%s1 + $0x18] sm:$0xff]
        %v266 = vld [vmem:[%s1 + $0x20] sm:$0xff]
        %v267 = vld [vmem:[%s1 + $0x28] sm:$0xff]
        %v268 = vld [vmem:[%s1 + $0x30] sm:$0xff]
        %v269 = vld [vmem:[%s1 + $0x38] sm:$0xff]
        %v270 = vld [vmem:[%s1 + $0x40] sm:$0xff]
        %v271 = vld [vmem:[%s1 + $0x48] sm:$0xff]
        %v272 = vld [vmem:[%s1 + $0x50] sm:$0xff]
        %v273 = vld [vmem:[%s1 + $0x58] sm:$0xff]
        %v274 = vld [vmem:[%s1 + $0x60] sm:$0xff]
        %v275 = vld [vmem:[%s1 + $0x68] sm:$0xff]
        %v276 = vld [vmem:[%s1 + $0x70] sm:$0xff]
        %v277 = vld [vmem:[%s1 + $0x78] sm:$0xff]
        %v278 = vld [vmem:[%s1 + $0x80] sm:$0xff]
        %v279 = vld [vmem:[%s1 + $0x88] sm:$0xff]
        %v280 = vld [vmem:[%s1 + $0x90] sm:$0xff]
        %v281 = vld [vmem:[%s1 + $0x98] sm:$0xff]
        %v282 = vld [vmem:[%s1 + $0xa0] sm:$0xff]
        %v283 = vld [vmem:[%s1 + $0xa8] sm:$0xff]
        %v284 = vld [vmem:[%s1 + $0xb0] sm:$0xff]
        %v285 = vld [vmem:[%s1 + $0xb8] sm:$0xff]
        %v286 = vld [vmem:[%s1 + $0xc0] sm:$0xff]
        %v287 = vld [vmem:[%s1 + $0xc8] sm:$0xff]
        %v288 = vld [vmem:[%s1 + $0xd0] sm:$0xff]
        %v289 = vld [vmem:[%s1 + $0xd8] sm:$0xff]
        %v290 = vld [vmem:[%s1 + $0xe0] sm:$0xff]
        %v291 = vld [vmem:[%s1 + $0xe8] sm:$0xff]
        %v292 = vld [vmem:[%s1 + $0xf0] sm:$0xff]
        %v293 = vld [vmem:[%s1 + $0xf8] sm:$0xff]
        %v302 = vunpack.c.l.b16 %v254
        %v303 = vunpack.c.l.b16 %v255
        %v304 = vunpack.c.l.b16 %v256
        %v305 = vunpack.c.l.b16 %v257
        %v306 = vunpack.c.l.b16 %v258
        %v307 = vunpack.c.l.b16 %v259
        %v308 = vunpack.c.l.b16 %v260
        %v309 = vunpack.c.l.b16 %v261
        %v310 = vpack.c.b16 %v303, %v302
        %v311 = vpack.c.b16 %v305, %v304
        %v312 = vpack.c.b16 %v307, %v306
        %v313 = vpack.c.b16 %v309, %v308
        %v346 = vunpack.c.l.b16 %v262
        %v347 = vunpack.c.h.b16 %v262
        %v348 = vunpack.c.l.b16 %v263
        %v349 = vunpack.c.h.b16 %v263
        %v350 = vunpack.c.l.b16 %v264
        %v351 = vunpack.c.h.b16 %v264
        %v352 = vunpack.c.l.b16 %v265
        %v353 = vunpack.c.h.b16 %v265
        %v354 = vunpack.c.l.b16 %v266
        %v355 = vunpack.c.h.b16 %v266
        %v356 = vunpack.c.l.b16 %v267
        %v357 = vunpack.c.h.b16 %v267
        %v358 = vunpack.c.l.b16 %v268
        %v359 = vunpack.c.h.b16 %v268
        %v360 = vunpack.c.l.b16 %v269
        %v361 = vunpack.c.h.b16 %v269
        %v362 = vunpack.c.l.b16 %v270
        %v363 = vunpack.c.h.b16 %v270
        %v364 = vunpack.c.l.b16 %v271
        %v365 = vunpack.c.h.b16 %v271
        %v366 = vunpack.c.l.b16 %v272
        %v367 = vunpack.c.h.b16 %v272
        %v368 = vunpack.c.l.b16 %v273
        %v369 = vunpack.c.h.b16 %v273
        %v370 = vunpack.c.l.b16 %v274
        %v371 = vunpack.c.h.b16 %v274
        %v372 = vunpack.c.l.b16 %v275
        %v373 = vunpack.c.h.b16 %v275
        %v374 = vunpack.c.l.b16 %v276
        %v375 = vunpack.c.h.b16 %v276
        %v376 = vunpack.c.l.b16 %v277
        %v377 = vunpack.c.h.b16 %v277
        %v378 = vunpack.c.l.b16 %v278
        %v379 = vunpack.c.h.b16 %v278
        %v380 = vunpack.c.l.b16 %v279
        %v381 = vunpack.c.h.b16 %v279
        %v382 = vunpack.c.l.b16 %v280
        %v383 = vunpack.c.h.b16 %v280
        %v384 = vunpack.c.l.b16 %v281
        %v385 = vunpack.c.h.b16 %v281
        %v386 = vunpack.c.l.b16 %v282
        %v387 = vunpack.c.h.b16 %v282
        %v388 = vunpack.c.l.b16 %v283
        %v389 = vunpack.c.h.b16 %v283
        %v390 = vunpack.c.l.b16 %v284
        %v391 = vunpack.c.h.b16 %v284
        %v392 = vunpack.c.l.b16 %v285
        %v393 = vunpack.c.h.b16 %v285
        %v394 = vunpack.c.l.b16 %v286
        %v395 = vunpack.c.h.b16 %v286
        %v396 = vunpack.c.l.b16 %v287
        %v397 = vunpack.c.h.b16 %v287
        %v398 = vunpack.c.l.b16 %v288
        %v399 = vunpack.c.h.b16 %v288
        %v400 = vunpack.c.l.b16 %v289
        %v401 = vunpack.c.h.b16 %v289
        %v402 = vunpack.c.l.b16 %v290
        %v403 = vunpack.c.h.b16 %v290
        %v404 = vunpack.c.l.b16 %v291
        %v405 = vunpack.c.h.b16 %v291
        %v406 = vunpack.c.l.b16 %v292
        %v407 = vunpack.c.h.b16 %v292
        %v408 = vunpack.c.l.b16 %v293
        %v409 = vunpack.c.h.b16 %v293
        %v410 = vpack.c.b16 %v362, %v346
        %v411 = vpack.c.b16 %v363, %v347
        %v412 = vpack.c.b16 %v364, %v348
        %v413 = vpack.c.b16 %v365, %v349
        %v414 = vpack.c.b16 %v366, %v350
        %v415 = vpack.c.b16 %v367, %v351
        %v416 = vpack.c.b16 %v368, %v352
        %v417 = vpack.c.b16 %v369, %v353
        %v418 = vpack.c.b16 %v370, %v354
        %v419 = vpack.c.b16 %v371, %v355
        %v420 = vpack.c.b16 %v372, %v356
        %v421 = vpack.c.b16 %v373, %v357
        %v422 = vpack.c.b16 %v374, %v358
        %v423 = vpack.c.b16 %v375, %v359
        %v424 = vpack.c.b16 %v376, %v360
        %v425 = vpack.c.b16 %v377, %v361
        %v426 = vpack.c.b16 %v394, %v378
        %v427 = vpack.c.b16 %v395, %v379
        %v428 = vpack.c.b16 %v396, %v380
        %v429 = vpack.c.b16 %v397, %v381
        %v430 = vpack.c.b16 %v398, %v382
        %v431 = vpack.c.b16 %v399, %v383
        %v432 = vpack.c.b16 %v400, %v384
        %v433 = vpack.c.b16 %v401, %v385
        %v434 = vpack.c.b16 %v402, %v386
        %v435 = vpack.c.b16 %v403, %v387
        %v436 = vpack.c.b16 %v404, %v388
        %v437 = vpack.c.b16 %v405, %v389
        %v438 = vpack.c.b16 %v406, %v390
        %v439 = vpack.c.b16 %v407, %v391
        %v440 = vpack.c.b16 %v408, %v392
        %v441 = vpack.c.b16 %v409, %v393
        %vm474 = vcmask 261120
        %v476 = vsel %vm474, %v310, 0
        %v479 = vsel %vm474, %v311, 0
        %v482 = vsel %vm474, %v312, 0
        %v485 = vsel %vm474, %v313, 0
        %487 = vmatprep.subr.bf16.mxu0 0
        %488 = vmatpush1.bf16.msra.mxu0 0
        %489 = vmatprep.subr.bf16.mxu0 0
        %490 = vmatpush1.bf16.msra.mxu0 0
        %491 = vmatprep.subr.bf16.mxu0 0
        %492 = vmatpush1.bf16.msra.mxu0 0
        %493 = vmatprep.subr.bf16.mxu0 0
        %494 = vmatpush1.bf16.msra.mxu0 0
        %495 = vmatprep.subr.bf16.mxu0 0
        %496 = vmatpush1.bf16.msra.mxu0 0
        %497 = vmatprep.subr.bf16.mxu0 0
        %498 = vmatpush1.bf16.msra.mxu0 0
        %499 = vmatprep.subr.bf16.mxu0 %v427
        %500 = vmatpush1.bf16.msra.mxu0 %v426
        %501 = vmatprep.subr.bf16.mxu0 %v411
        %502 = vmatpush1.bf16.msra.mxu0 %v410
        %503 = vmatprep.subr.bf16.mxu0 0
        %504 = vmatpush2.bf16.msra.mxu0 0
        %505 = vmatprep.subr.bf16.mxu0 0
        %506 = vmatpush2.bf16.msra.mxu0 0
        %507 = vmatprep.subr.bf16.mxu0 0
        %508 = vmatpush2.bf16.msra.mxu0 0
        %509 = vmatprep.subr.bf16.mxu0 0
        %510 = vmatpush2.bf16.msra.mxu0 0
        %511 = vmatprep.subr.bf16.mxu0 0
        %512 = vmatpush2.bf16.msra.mxu0 0
        %513 = vmatprep.subr.bf16.mxu0 0
        %514 = vmatpush2.bf16.msra.mxu0 0
        %515 = vmatprep.subr.bf16.mxu0 0
        %516 = vmatpush2.bf16.msra.mxu0 0
        %517 = vmatprep.subr.bf16.mxu0 0
        %518 = vmatpush2.bf16.msra.mxu0 0
        %519 = vmatprep.mubr.bf16.mxu0 0
        %520 = vmatmul.mubr.bf16.gmra.mxu0 %v476
        %v521 = vpop.f32.mrf.mxu0
        %v522 = vadd.f32 0.0, %v521
        %v523 = vpop.f32.mrf.mxu0
        %v524 = vadd.f32 0.0, %v523
        %v525 = vpop.f32.mrf.mxu0
        %v526 = vadd.f32 0.0, %v525
        %v527 = vpop.f32.mrf.mxu0
        %v528 = vadd.f32 0.0, %v527
        %529 = vmatprep.mubr.bf16.mxu0 0
        %530 = vmatmul.mubr.bf16.gmra.mxu0 %v479
        %v531 = vpop.f32.mrf.mxu0
        %v532 = vadd.f32 0.0, %v531
        %v533 = vpop.f32.mrf.mxu0
        %v534 = vadd.f32 0.0, %v533
        %v535 = vpop.f32.mrf.mxu0
        %v536 = vadd.f32 0.0, %v535
        %v537 = vpop.f32.mrf.mxu0
        %v538 = vadd.f32 0.0, %v537
        %539 = vmatprep.mubr.bf16.mxu0 0
        %540 = vmatmul.mubr.bf16.gmra.mxu0 %v482
        %v541 = vpop.f32.mrf.mxu0
        %v542 = vadd.f32 0.0, %v541
        %v543 = vpop.f32.mrf.mxu0
        %v544 = vadd.f32 0.0, %v543
        %v545 = vpop.f32.mrf.mxu0
        %v546 = vadd.f32 0.0, %v545
        %v547 = vpop.f32.mrf.mxu0
        %v548 = vadd.f32 0.0, %v547
        %549 = vmatprep.mubr.bf16.mxu0 0
        %550 = vmatmul.mubr.bf16.gmra.mxu0 %v485
        %v551 = vpop.f32.mrf.mxu0
        %v552 = vadd.f32 0.0, %v551
        %v553 = vpop.f32.mrf.mxu0
        %v554 = vadd.f32 0.0, %v553
        %v555 = vpop.f32.mrf.mxu0
        %v556 = vadd.f32 0.0, %v555
        %v557 = vpop.f32.mrf.mxu0
        %v558 = vadd.f32 0.0, %v557
        %559 = vdwg.mxu0
        %560 = vmatprep.subr.bf16.mxu0 0
        %561 = vmatpush1.bf16.msra.mxu0 0
        %562 = vmatprep.subr.bf16.mxu0 0
        %563 = vmatpush1.bf16.msra.mxu0 0
        %564 = vmatprep.subr.bf16.mxu0 0
        %565 = vmatpush1.bf16.msra.mxu0 0
        %566 = vmatprep.subr.bf16.mxu0 0
        %567 = vmatpush1.bf16.msra.mxu0 0
        %568 = vmatprep.subr.bf16.mxu0 0
        %569 = vmatpush1.bf16.msra.mxu0 0
        %570 = vmatprep.subr.bf16.mxu0 0
        %571 = vmatpush1.bf16.msra.mxu0 0
        %572 = vmatprep.subr.bf16.mxu0 %v429
        %573 = vmatpush1.bf16.msra.mxu0 %v428
        %574 = vmatprep.subr.bf16.mxu0 %v413
        %575 = vmatpush1.bf16.msra.mxu0 %v412
        %576 = vmatprep.subr.bf16.mxu0 0
        %577 = vmatpush2.bf16.msra.mxu0 0
        %578 = vmatprep.subr.bf16.mxu0 0
        %579 = vmatpush2.bf16.msra.mxu0 0
        %580 = vmatprep.subr.bf16.mxu0 0
        %581 = vmatpush2.bf16.msra.mxu0 0
        %582 = vmatprep.subr.bf16.mxu0 0
        %583 = vmatpush2.bf16.msra.mxu0 0
        %584 = vmatprep.subr.bf16.mxu0 0
        %585 = vmatpush2.bf16.msra.mxu0 0
        %586 = vmatprep.subr.bf16.mxu0 0
        %587 = vmatpush2.bf16.msra.mxu0 0
        %588 = vmatprep.subr.bf16.mxu0 0
        %589 = vmatpush2.bf16.msra.mxu0 0
        %590 = vmatprep.subr.bf16.mxu0 0
        %591 = vmatpush2.bf16.msra.mxu0 0
        %592 = vmatprep.mubr.bf16.mxu0 0
        %593 = vmatmul.mubr.bf16.gmra.mxu0 %v476
        %v594 = vpop.f32.mrf.mxu0
        %v595 = vadd.f32 0.0, %v594
        %v596 = vpop.f32.mrf.mxu0
        %v597 = vadd.f32 0.0, %v596
        %v598 = vpop.f32.mrf.mxu0
        %v599 = vadd.f32 0.0, %v598
        %v600 = vpop.f32.mrf.mxu0
        %v601 = vadd.f32 0.0, %v600
        %602 = vmatprep.mubr.bf16.mxu0 0
        %603 = vmatmul.mubr.bf16.gmra.mxu0 %v479
        %v604 = vpop.f32.mrf.mxu0
        %v605 = vadd.f32 0.0, %v604
        %v606 = vpop.f32.mrf.mxu0
        %v607 = vadd.f32 0.0, %v606
        %v608 = vpop.f32.mrf.mxu0
        %v609 = vadd.f32 0.0, %v608
        %v610 = vpop.f32.mrf.mxu0
        %v611 = vadd.f32 0.0, %v610
        %612 = vmatprep.mubr.bf16.mxu0 0
        %613 = vmatmul.mubr.bf16.gmra.mxu0 %v482
        %v614 = vpop.f32.mrf.mxu0
        %v615 = vadd.f32 0.0, %v614
        %v616 = vpop.f32.mrf.mxu0
        %v617 = vadd.f32 0.0, %v616
        %v618 = vpop.f32.mrf.mxu0
        %v619 = vadd.f32 0.0, %v618
        %v620 = vpop.f32.mrf.mxu0
        %v621 = vadd.f32 0.0, %v620
        %622 = vmatprep.mubr.bf16.mxu0 0
        %623 = vmatmul.mubr.bf16.gmra.mxu0 %v485
        %v624 = vpop.f32.mrf.mxu0
        %v625 = vadd.f32 0.0, %v624
        %v626 = vpop.f32.mrf.mxu0
        %v627 = vadd.f32 0.0, %v626
        %v628 = vpop.f32.mrf.mxu0
        %v629 = vadd.f32 0.0, %v628
        %v630 = vpop.f32.mrf.mxu0
        %v631 = vadd.f32 0.0, %v630
        %632 = vdwg.mxu0
        %633 = vmatprep.subr.bf16.mxu0 0
        %634 = vmatpush1.bf16.msra.mxu0 0
        %635 = vmatprep.subr.bf16.mxu0 0
        %636 = vmatpush1.bf16.msra.mxu0 0
        %637 = vmatprep.subr.bf16.mxu0 0
        %638 = vmatpush1.bf16.msra.mxu0 0
        %639 = vmatprep.subr.bf16.mxu0 0
        %640 = vmatpush1.bf16.msra.mxu0 0
        %641 = vmatprep.subr.bf16.mxu0 0
        %642 = vmatpush1.bf16.msra.mxu0 0
        %643 = vmatprep.subr.bf16.mxu0 0
        %644 = vmatpush1.bf16.msra.mxu0 0
        %645 = vmatprep.subr.bf16.mxu0 %v431
        %646 = vmatpush1.bf16.msra.mxu0 %v430
        %647 = vmatprep.subr.bf16.mxu0 %v415
        %648 = vmatpush1.bf16.msra.mxu0 %v414
        %649 = vmatprep.subr.bf16.mxu0 0
        %650 = vmatpush2.bf16.msra.mxu0 0
        %651 = vmatprep.subr.bf16.mxu0 0
        %652 = vmatpush2.bf16.msra.mxu0 0
        %653 = vmatprep.subr.bf16.mxu0 0
        %654 = vmatpush2.bf16.msra.mxu0 0
        %655 = vmatprep.subr.bf16.mxu0 0
        %656 = vmatpush2.bf16.msra.mxu0 0
        %657 = vmatprep.subr.bf16.mxu0 0
        %658 = vmatpush2.bf16.msra.mxu0 0
        %659 = vmatprep.subr.bf16.mxu0 0
        %660 = vmatpush2.bf16.msra.mxu0 0
        %661 = vmatprep.subr.bf16.mxu0 0
        %662 = vmatpush2.bf16.msra.mxu0 0
        %663 = vmatprep.subr.bf16.mxu0 0
        %664 = vmatpush2.bf16.msra.mxu0 0
        %665 = vmatprep.mubr.bf16.mxu0 0
        %666 = vmatmul.mubr.bf16.gmra.mxu0 %v476
        %v667 = vpop.f32.mrf.mxu0
        %v668 = vadd.f32 0.0, %v667
        %v669 = vpop.f32.mrf.mxu0
        %v670 = vadd.f32 0.0, %v669
        %v671 = vpop.f32.mrf.mxu0
        %v672 = vadd.f32 0.0, %v671
        %v673 = vpop.f32.mrf.mxu0
        %v674 = vadd.f32 0.0, %v673
        %675 = vmatprep.mubr.bf16.mxu0 0
        %676 = vmatmul.mubr.bf16.gmra.mxu0 %v479
        %v677 = vpop.f32.mrf.mxu0
        %v678 = vadd.f32 0.0, %v677
        %v679 = vpop.f32.mrf.mxu0
        %v680 = vadd.f32 0.0, %v679
        %v681 = vpop.f32.mrf.mxu0
        %v682 = vadd.f32 0.0, %v681
        %v683 = vpop.f32.mrf.mxu0
        %v684 = vadd.f32 0.0, %v683
        %685 = vmatprep.mubr.bf16.mxu0 0
        %686 = vmatmul.mubr.bf16.gmra.mxu0 %v482
        %v687 = vpop.f32.mrf.mxu0
        %v688 = vadd.f32 0.0, %v687
        %v689 = vpop.f32.mrf.mxu0
        %v690 = vadd.f32 0.0, %v689
        %v691 = vpop.f32.mrf.mxu0
        %v692 = vadd.f32 0.0, %v691
        %v693 = vpop.f32.mrf.mxu0
        %v694 = vadd.f32 0.0, %v693
        %695 = vmatprep.mubr.bf16.mxu0 0
        %696 = vmatmul.mubr.bf16.gmra.mxu0 %v485
        %v697 = vpop.f32.mrf.mxu0
        %v698 = vadd.f32 0.0, %v697
        %v699 = vpop.f32.mrf.mxu0
        %v700 = vadd.f32 0.0, %v699
        %v701 = vpop.f32.mrf.mxu0
        %v702 = vadd.f32 0.0, %v701
        %v703 = vpop.f32.mrf.mxu0
        %v704 = vadd.f32 0.0, %v703
        %705 = vdwg.mxu0
        %706 = vmatprep.subr.bf16.mxu0 0
        %707 = vmatpush1.bf16.msra.mxu0 0
        %708 = vmatprep.subr.bf16.mxu0 0
        %709 = vmatpush1.bf16.msra.mxu0 0
        %710 = vmatprep.subr.bf16.mxu0 0
        %711 = vmatpush1.bf16.msra.mxu0 0
        %712 = vmatprep.subr.bf16.mxu0 0
        %713 = vmatpush1.bf16.msra.mxu0 0
        %714 = vmatprep.subr.bf16.mxu0 0
        %715 = vmatpush1.bf16.msra.mxu0 0
        %716 = vmatprep.subr.bf16.mxu0 0
        %717 = vmatpush1.bf16.msra.mxu0 0
        %718 = vmatprep.subr.bf16.mxu0 %v433
        %719 = vmatpush1.bf16.msra.mxu0 %v432
        %720 = vmatprep.subr.bf16.mxu0 %v417
        %721 = vmatpush1.bf16.msra.mxu0 %v416
        %722 = vmatprep.subr.bf16.mxu0 0
        %723 = vmatpush2.bf16.msra.mxu0 0
        %724 = vmatprep.subr.bf16.mxu0 0
        %725 = vmatpush2.bf16.msra.mxu0 0
        %726 = vmatprep.subr.bf16.mxu0 0
        %727 = vmatpush2.bf16.msra.mxu0 0
        %728 = vmatprep.subr.bf16.mxu0 0
        %729 = vmatpush2.bf16.msra.mxu0 0
        %730 = vmatprep.subr.bf16.mxu0 0
        %731 = vmatpush2.bf16.msra.mxu0 0
        %732 = vmatprep.subr.bf16.mxu0 0
        %733 = vmatpush2.bf16.msra.mxu0 0
        %734 = vmatprep.subr.bf16.mxu0 0
        %735 = vmatpush2.bf16.msra.mxu0 0
        %736 = vmatprep.subr.bf16.mxu0 0
        %737 = vmatpush2.bf16.msra.mxu0 0
        %738 = vmatprep.mubr.bf16.mxu0 0
        %739 = vmatmul.mubr.bf16.gmra.mxu0 %v476
        %v740 = vpop.f32.mrf.mxu0
        %v741 = vadd.f32 0.0, %v740
        %v742 = vpop.f32.mrf.mxu0
        %v743 = vadd.f32 0.0, %v742
        %v744 = vpop.f32.mrf.mxu0
        %v745 = vadd.f32 0.0, %v744
        %v746 = vpop.f32.mrf.mxu0
        %v747 = vadd.f32 0.0, %v746
        %748 = vmatprep.mubr.bf16.mxu0 0
        %749 = vmatmul.mubr.bf16.gmra.mxu0 %v479
        %v750 = vpop.f32.mrf.mxu0
        %v751 = vadd.f32 0.0, %v750
        %v752 = vpop.f32.mrf.mxu0
        %v753 = vadd.f32 0.0, %v752
        %v754 = vpop.f32.mrf.mxu0
        %v755 = vadd.f32 0.0, %v754
        %v756 = vpop.f32.mrf.mxu0
        %v757 = vadd.f32 0.0, %v756
        %758 = vmatprep.mubr.bf16.mxu0 0
        %759 = vmatmul.mubr.bf16.gmra.mxu0 %v482
        %v760 = vpop.f32.mrf.mxu0
        %v761 = vadd.f32 0.0, %v760
        %v762 = vpop.f32.mrf.mxu0
        %v763 = vadd.f32 0.0, %v762
        %v764 = vpop.f32.mrf.mxu0
        %v765 = vadd.f32 0.0, %v764
        %v766 = vpop.f32.mrf.mxu0
        %v767 = vadd.f32 0.0, %v766
        %768 = vmatprep.mubr.bf16.mxu0 0
        %769 = vmatmul.mubr.bf16.gmra.mxu0 %v485
        %v770 = vpop.f32.mrf.mxu0
        %v771 = vadd.f32 0.0, %v770
        %v772 = vpop.f32.mrf.mxu0
        %v773 = vadd.f32 0.0, %v772
        %v774 = vpop.f32.mrf.mxu0
        %v775 = vadd.f32 0.0, %v774
        %v776 = vpop.f32.mrf.mxu0
        %v777 = vadd.f32 0.0, %v776
        %778 = vdwg.mxu0
        %779 = vmatprep.subr.bf16.mxu0 0
        %780 = vmatpush1.bf16.msra.mxu0 0
        %781 = vmatprep.subr.bf16.mxu0 0
        %782 = vmatpush1.bf16.msra.mxu0 0
        %783 = vmatprep.subr.bf16.mxu0 0
        %784 = vmatpush1.bf16.msra.mxu0 0
        %785 = vmatprep.subr.bf16.mxu0 0
        %786 = vmatpush1.bf16.msra.mxu0 0
        %787 = vmatprep.subr.bf16.mxu0 0
        %788 = vmatpush1.bf16.msra.mxu0 0
        %789 = vmatprep.subr.bf16.mxu0 0
        %790 = vmatpush1.bf16.msra.mxu0 0
        %791 = vmatprep.subr.bf16.mxu0 %v435
        %792 = vmatpush1.bf16.msra.mxu0 %v434
        %793 = vmatprep.subr.bf16.mxu0 %v419
        %794 = vmatpush1.bf16.msra.mxu0 %v418
        %795 = vmatprep.subr.bf16.mxu0 0
        %796 = vmatpush2.bf16.msra.mxu0 0
        %797 = vmatprep.subr.bf16.mxu0 0
        %798 = vmatpush2.bf16.msra.mxu0 0
        %799 = vmatprep.subr.bf16.mxu0 0
        %800 = vmatpush2.bf16.msra.mxu0 0
        %801 = vmatprep.subr.bf16.mxu0 0
        %802 = vmatpush2.bf16.msra.mxu0 0
        %803 = vmatprep.subr.bf16.mxu0 0
        %804 = vmatpush2.bf16.msra.mxu0 0
        %805 = vmatprep.subr.bf16.mxu0 0
        %806 = vmatpush2.bf16.msra.mxu0 0
        %807 = vmatprep.subr.bf16.mxu0 0
        %808 = vmatpush2.bf16.msra.mxu0 0
        %809 = vmatprep.subr.bf16.mxu0 0
        %810 = vmatpush2.bf16.msra.mxu0 0
        %811 = vmatprep.mubr.bf16.mxu0 0
        %812 = vmatmul.mubr.bf16.gmra.mxu0 %v476
        %v813 = vpop.f32.mrf.mxu0
        %v814 = vadd.f32 0.0, %v813
        %v815 = vpop.f32.mrf.mxu0
        %v816 = vadd.f32 0.0, %v815
        %v817 = vpop.f32.mrf.mxu0
        %v818 = vadd.f32 0.0, %v817
        %v819 = vpop.f32.mrf.mxu0
        %v820 = vadd.f32 0.0, %v819
        %821 = vmatprep.mubr.bf16.mxu0 0
        %822 = vmatmul.mubr.bf16.gmra.mxu0 %v479
        %v823 = vpop.f32.mrf.mxu0
        %v824 = vadd.f32 0.0, %v823
        %v825 = vpop.f32.mrf.mxu0
        %v826 = vadd.f32 0.0, %v825
        %v827 = vpop.f32.mrf.mxu0
        %v828 = vadd.f32 0.0, %v827
        %v829 = vpop.f32.mrf.mxu0
        %v830 = vadd.f32 0.0, %v829
        %831 = vmatprep.mubr.bf16.mxu0 0
        %832 = vmatmul.mubr.bf16.gmra.mxu0 %v482
        %v833 = vpop.f32.mrf.mxu0
        %v834 = vadd.f32 0.0, %v833
        %v835 = vpop.f32.mrf.mxu0
        %v836 = vadd.f32 0.0, %v835
        %v837 = vpop.f32.mrf.mxu0
        %v838 = vadd.f32 0.0, %v837
        %v839 = vpop.f32.mrf.mxu0
        %v840 = vadd.f32 0.0, %v839
        %841 = vmatprep.mubr.bf16.mxu0 0
        %842 = vmatmul.mubr.bf16.gmra.mxu0 %v485
        %v843 = vpop.f32.mrf.mxu0
        %v844 = vadd.f32 0.0, %v843
        %v845 = vpop.f32.mrf.mxu0
        %v846 = vadd.f32 0.0, %v845
        %v847 = vpop.f32.mrf.mxu0
        %v848 = vadd.f32 0.0, %v847
        %v849 = vpop.f32.mrf.mxu0
        %v850 = vadd.f32 0.0, %v849
        %851 = vdwg.mxu0
        %852 = vmatprep.subr.bf16.mxu0 0
        %853 = vmatpush1.bf16.msra.mxu0 0
        %854 = vmatprep.subr.bf16.mxu0 0
        %855 = vmatpush1.bf16.msra.mxu0 0
        %856 = vmatprep.subr.bf16.mxu0 0
        %857 = vmatpush1.bf16.msra.mxu0 0
        %858 = vmatprep.subr.bf16.mxu0 0
        %859 = vmatpush1.bf16.msra.mxu0 0
        %860 = vmatprep.subr.bf16.mxu0 0
        %861 = vmatpush1.bf16.msra.mxu0 0
        %862 = vmatprep.subr.bf16.mxu0 0
        %863 = vmatpush1.bf16.msra.mxu0 0
        %864 = vmatprep.subr.bf16.mxu0 %v437
        %865 = vmatpush1.bf16.msra.mxu0 %v436
        %866 = vmatprep.subr.bf16.mxu0 %v421
        %867 = vmatpush1.bf16.msra.mxu0 %v420
        %868 = vmatprep.subr.bf16.mxu0 0
        %869 = vmatpush2.bf16.msra.mxu0 0
        %870 = vmatprep.subr.bf16.mxu0 0
        %871 = vmatpush2.bf16.msra.mxu0 0
        %872 = vmatprep.subr.bf16.mxu0 0
        %873 = vmatpush2.bf16.msra.mxu0 0
        %874 = vmatprep.subr.bf16.mxu0 0
        %875 = vmatpush2.bf16.msra.mxu0 0
        %876 = vmatprep.subr.bf16.mxu0 0
        %877 = vmatpush2.bf16.msra.mxu0 0
        %878 = vmatprep.subr.bf16.mxu0 0
        %879 = vmatpush2.bf16.msra.mxu0 0
        %880 = vmatprep.subr.bf16.mxu0 0
        %881 = vmatpush2.bf16.msra.mxu0 0
        %882 = vmatprep.subr.bf16.mxu0 0
        %883 = vmatpush2.bf16.msra.mxu0 0
        %884 = vmatprep.mubr.bf16.mxu0 0
        %885 = vmatmul.mubr.bf16.gmra.mxu0 %v476
        %v886 = vpop.f32.mrf.mxu0
        %v887 = vadd.f32 0.0, %v886
        %v888 = vpop.f32.mrf.mxu0
        %v889 = vadd.f32 0.0, %v888
        %v890 = vpop.f32.mrf.mxu0
        %v891 = vadd.f32 0.0, %v890
        %v892 = vpop.f32.mrf.mxu0
        %v893 = vadd.f32 0.0, %v892
        %894 = vmatprep.mubr.bf16.mxu0 0
        %895 = vmatmul.mubr.bf16.gmra.mxu0 %v479
        %v896 = vpop.f32.mrf.mxu0
        %v897 = vadd.f32 0.0, %v896
        %v898 = vpop.f32.mrf.mxu0
        %v899 = vadd.f32 0.0, %v898
        %v900 = vpop.f32.mrf.mxu0
        %v901 = vadd.f32 0.0, %v900
        %v902 = vpop.f32.mrf.mxu0
        %v903 = vadd.f32 0.0, %v902
        %904 = vmatprep.mubr.bf16.mxu0 0
        %905 = vmatmul.mubr.bf16.gmra.mxu0 %v482
        %v906 = vpop.f32.mrf.mxu0
        %v907 = vadd.f32 0.0, %v906
        %v908 = vpop.f32.mrf.mxu0
        %v909 = vadd.f32 0.0, %v908
        %v910 = vpop.f32.mrf.mxu0
        %v911 = vadd.f32 0.0, %v910
        %v912 = vpop.f32.mrf.mxu0
        %v913 = vadd.f32 0.0, %v912
        %914 = vmatprep.mubr.bf16.mxu0 0
        %915 = vmatmul.mubr.bf16.gmra.mxu0 %v485
        %v916 = vpop.f32.mrf.mxu0
        %v917 = vadd.f32 0.0, %v916
        %v918 = vpop.f32.mrf.mxu0
        %v919 = vadd.f32 0.0, %v918
        %v920 = vpop.f32.mrf.mxu0
        %v921 = vadd.f32 0.0, %v920
        %v922 = vpop.f32.mrf.mxu0
        %v923 = vadd.f32 0.0, %v922
        %924 = vdwg.mxu0
        %925 = vmatprep.subr.bf16.mxu0 0
        %926 = vmatpush1.bf16.msra.mxu0 0
        %927 = vmatprep.subr.bf16.mxu0 0
        %928 = vmatpush1.bf16.msra.mxu0 0
        %929 = vmatprep.subr.bf16.mxu0 0
        %930 = vmatpush1.bf16.msra.mxu0 0
        %931 = vmatprep.subr.bf16.mxu0 0
        %932 = vmatpush1.bf16.msra.mxu0 0
        %933 = vmatprep.subr.bf16.mxu0 0
        %934 = vmatpush1.bf16.msra.mxu0 0
        %935 = vmatprep.subr.bf16.mxu0 0
        %936 = vmatpush1.bf16.msra.mxu0 0
        %937 = vmatprep.subr.bf16.mxu0 %v439
        %938 = vmatpush1.bf16.msra.mxu0 %v438
        %939 = vmatprep.subr.bf16.mxu0 %v423
        %940 = vmatpush1.bf16.msra.mxu0 %v422
        %941 = vmatprep.subr.bf16.mxu0 0
        %942 = vmatpush2.bf16.msra.mxu0 0
        %943 = vmatprep.subr.bf16.mxu0 0
        %944 = vmatpush2.bf16.msra.mxu0 0
        %945 = vmatprep.subr.bf16.mxu0 0
        %946 = vmatpush2.bf16.msra.mxu0 0
        %947 = vmatprep.subr.bf16.mxu0 0
        %948 = vmatpush2.bf16.msra.mxu0 0
        %949 = vmatprep.subr.bf16.mxu0 0
        %950 = vmatpush2.bf16.msra.mxu0 0
        %951 = vmatprep.subr.bf16.mxu0 0
        %952 = vmatpush2.bf16.msra.mxu0 0
        %953 = vmatprep.subr.bf16.mxu0 0
        %954 = vmatpush2.bf16.msra.mxu0 0
        %955 = vmatprep.subr.bf16.mxu0 0
        %956 = vmatpush2.bf16.msra.mxu0 0
        %957 = vmatprep.mubr.bf16.mxu0 0
        %958 = vmatmul.mubr.bf16.gmra.mxu0 %v476
        %v959 = vpop.f32.mrf.mxu0
        %v960 = vadd.f32 0.0, %v959
        %v961 = vpop.f32.mrf.mxu0
        %v962 = vadd.f32 0.0, %v961
        %v963 = vpop.f32.mrf.mxu0
        %v964 = vadd.f32 0.0, %v963
        %v965 = vpop.f32.mrf.mxu0
        %v966 = vadd.f32 0.0, %v965
        %967 = vmatprep.mubr.bf16.mxu0 0
        %968 = vmatmul.mubr.bf16.gmra.mxu0 %v479
        %v969 = vpop.f32.mrf.mxu0
        %v970 = vadd.f32 0.0, %v969
        %v971 = vpop.f32.mrf.mxu0
        %v972 = vadd.f32 0.0, %v971
        %v973 = vpop.f32.mrf.mxu0
        %v974 = vadd.f32 0.0, %v973
        %v975 = vpop.f32.mrf.mxu0
        %v976 = vadd.f32 0.0, %v975
        %977 = vmatprep.mubr.bf16.mxu0 0
        %978 = vmatmul.mubr.bf16.gmra.mxu0 %v482
        %v979 = vpop.f32.mrf.mxu0
        %v980 = vadd.f32 0.0, %v979
        %v981 = vpop.f32.mrf.mxu0
        %v982 = vadd.f32 0.0, %v981
        %v983 = vpop.f32.mrf.mxu0
        %v984 = vadd.f32 0.0, %v983
        %v985 = vpop.f32.mrf.mxu0
        %v986 = vadd.f32 0.0, %v985
        %987 = vmatprep.mubr.bf16.mxu0 0
        %988 = vmatmul.mubr.bf16.gmra.mxu0 %v485
        %v989 = vpop.f32.mrf.mxu0
        %v990 = vadd.f32 0.0, %v989
        %v991 = vpop.f32.mrf.mxu0
        %v992 = vadd.f32 0.0, %v991
        %v993 = vpop.f32.mrf.mxu0
        %v994 = vadd.f32 0.0, %v993
        %v995 = vpop.f32.mrf.mxu0
        %v996 = vadd.f32 0.0, %v995
        %997 = vdwg.mxu0
        %998 = vmatprep.subr.bf16.mxu0 0
        %999 = vmatpush1.bf16.msra.mxu0 0
        %1000 = vmatprep.subr.bf16.mxu0 0
        %1001 = vmatpush1.bf16.msra.mxu0 0
        %1002 = vmatprep.subr.bf16.mxu0 0
        %1003 = vmatpush1.bf16.msra.mxu0 0
        %1004 = vmatprep.subr.bf16.mxu0 0
        %1005 = vmatpush1.bf16.msra.mxu0 0
        %1006 = vmatprep.subr.bf16.mxu0 0
        %1007 = vmatpush1.bf16.msra.mxu0 0
        %1008 = vmatprep.subr.bf16.mxu0 0
        %1009 = vmatpush1.bf16.msra.mxu0 0
        %1010 = vmatprep.subr.bf16.mxu0 %v441
        %1011 = vmatpush1.bf16.msra.mxu0 %v440
        %1012 = vmatprep.subr.bf16.mxu0 %v425
        %1013 = vmatpush1.bf16.msra.mxu0 %v424
        %1014 = vmatprep.subr.bf16.mxu0 0
        %1015 = vmatpush2.bf16.msra.mxu0 0
        %1016 = vmatprep.subr.bf16.mxu0 0
        %1017 = vmatpush2.bf16.msra.mxu0 0
        %1018 = vmatprep.subr.bf16.mxu0 0
        %1019 = vmatpush2.bf16.msra.mxu0 0
        %1020 = vmatprep.subr.bf16.mxu0 0
        %1021 = vmatpush2.bf16.msra.mxu0 0
        %1022 = vmatprep.subr.bf16.mxu0 0
        %1023 = vmatpush2.bf16.msra.mxu0 0
        %1024 = vmatprep.subr.bf16.mxu0 0
        %1025 = vmatpush2.bf16.msra.mxu0 0
        %1026 = vmatprep.subr.bf16.mxu0 0
        %1027 = vmatpush2.bf16.msra.mxu0 0
        %1028 = vmatprep.subr.bf16.mxu0 0
        %1029 = vmatpush2.bf16.msra.mxu0 0
        %1030 = vmatprep.mubr.bf16.mxu0 0
        %1031 = vmatmul.mubr.bf16.gmra.mxu0 %v476
        %v1032 = vpop.f32.mrf.mxu0
        %v1033 = vadd.f32 0.0, %v1032
        %v1034 = vpop.f32.mrf.mxu0
        %v1035 = vadd.f32 0.0, %v1034
        %v1036 = vpop.f32.mrf.mxu0
        %v1037 = vadd.f32 0.0, %v1036
        %v1038 = vpop.f32.mrf.mxu0
        %v1039 = vadd.f32 0.0, %v1038
        %1040 = vmatprep.mubr.bf16.mxu0 0
        %1041 = vmatmul.mubr.bf16.gmra.mxu0 %v479
        %v1042 = vpop.f32.mrf.mxu0
        %v1043 = vadd.f32 0.0, %v1042
        %v1044 = vpop.f32.mrf.mxu0
        %v1045 = vadd.f32 0.0, %v1044
        %v1046 = vpop.f32.mrf.mxu0
        %v1047 = vadd.f32 0.0, %v1046
        %v1048 = vpop.f32.mrf.mxu0
        %v1049 = vadd.f32 0.0, %v1048
        %1050 = vmatprep.mubr.bf16.mxu0 0
        %1051 = vmatmul.mubr.bf16.gmra.mxu0 %v482
        %v1052 = vpop.f32.mrf.mxu0
        %v1053 = vadd.f32 0.0, %v1052
        %v1054 = vpop.f32.mrf.mxu0
        %v1055 = vadd.f32 0.0, %v1054
        %v1056 = vpop.f32.mrf.mxu0
        %v1057 = vadd.f32 0.0, %v1056
        %v1058 = vpop.f32.mrf.mxu0
        %v1059 = vadd.f32 0.0, %v1058
        %1060 = vmatprep.mubr.bf16.mxu0 0
        %1061 = vmatmul.mubr.bf16.gmra.mxu0 %v485
        %v1062 = vpop.f32.mrf.mxu0
        %v1063 = vadd.f32 0.0, %v1062
        %v1064 = vpop.f32.mrf.mxu0
        %v1065 = vadd.f32 0.0, %v1064
        %v1066 = vpop.f32.mrf.mxu0
        %v1067 = vadd.f32 0.0, %v1066
        %v1068 = vpop.f32.mrf.mxu0
        %v1069 = vadd.f32 0.0, %v1068
        %1070 = vdwg.mxu0
        %v1071 = vld [vmem:[%s2] sm:$0xff]
        %v1072 = vld [vmem:[%s2 + $0x8] sm:$0xff]
        %v1073 = vld [vmem:[%s2 + $0x10] sm:$0xff]
        %v1074 = vld [vmem:[%s2 + $0x18] sm:$0xff]
        %v1075 = vld [vmem:[%s2 + $0x20] sm:$0xff]
        %v1076 = vld [vmem:[%s2 + $0x28] sm:$0xff]
        %v1077 = vld [vmem:[%s2 + $0x30] sm:$0xff]
        %v1078 = vld [vmem:[%s2 + $0x38] sm:$0xff]
        %v1079 = vld [vmem:[%s2 + $0x40] sm:$0xff]
        %v1080 = vld [vmem:[%s2 + $0x48] sm:$0xff]
        %v1081 = vld [vmem:[%s2 + $0x50] sm:$0xff]
        %v1082 = vld [vmem:[%s2 + $0x58] sm:$0xff]
        %v1083 = vld [vmem:[%s2 + $0x60] sm:$0xff]
        %v1084 = vld [vmem:[%s2 + $0x68] sm:$0xff]
        %v1085 = vld [vmem:[%s2 + $0x70] sm:$0xff]
        %v1086 = vld [vmem:[%s2 + $0x78] sm:$0xff]
        %v1087 = vld [vmem:[%s2 + $0x80] sm:$0xff]
        %v1088 = vld [vmem:[%s2 + $0x88] sm:$0xff]
        %v1089 = vld [vmem:[%s2 + $0x90] sm:$0xff]
        %v1090 = vld [vmem:[%s2 + $0x98] sm:$0xff]
        %v1091 = vld [vmem:[%s2 + $0xa0] sm:$0xff]
        %v1092 = vld [vmem:[%s2 + $0xa8] sm:$0xff]
        %v1093 = vld [vmem:[%s2 + $0xb0] sm:$0xff]
        %v1094 = vld [vmem:[%s2 + $0xb8] sm:$0xff]
        %v1095 = vld [vmem:[%s2 + $0xc0] sm:$0xff]
        %v1096 = vld [vmem:[%s2 + $0xc8] sm:$0xff]
        %v1097 = vld [vmem:[%s2 + $0xd0] sm:$0xff]
        %v1098 = vld [vmem:[%s2 + $0xd8] sm:$0xff]
        %v1099 = vld [vmem:[%s2 + $0xe0] sm:$0xff]
        %v1100 = vld [vmem:[%s2 + $0xe8] sm:$0xff]
        %v1101 = vld [vmem:[%s2 + $0xf0] sm:$0xff]
        %v1102 = vld [vmem:[%s2 + $0xf8] sm:$0xff]
        %v1103 = vld [vmem:[%s2 + $0x100] sm:$0xff]
        %v1104 = vld [vmem:[%s2 + $0x108] sm:$0xff]
        %v1105 = vld [vmem:[%s2 + $0x110] sm:$0xff]
        %v1106 = vld [vmem:[%s2 + $0x118] sm:$0xff]
        %v1107 = vld [vmem:[%s2 + $0x120] sm:$0xff]
        %v1108 = vld [vmem:[%s2 + $0x128] sm:$0xff]
        %v1109 = vld [vmem:[%s2 + $0x130] sm:$0xff]
        %v1110 = vld [vmem:[%s2 + $0x138] sm:$0xff]
        %v1111 = vld [vmem:[%s2 + $0x140] sm:$0xff]
        %v1112 = vld [vmem:[%s2 + $0x148] sm:$0xff]
        %v1113 = vld [vmem:[%s2 + $0x150] sm:$0xff]
        %v1114 = vld [vmem:[%s2 + $0x158] sm:$0xff]
        %v1115 = vld [vmem:[%s2 + $0x160] sm:$0xff]
        %v1116 = vld [vmem:[%s2 + $0x168] sm:$0xff]
        %v1117 = vld [vmem:[%s2 + $0x170] sm:$0xff]
        %v1118 = vld [vmem:[%s2 + $0x178] sm:$0xff]
        %v1119 = vld [vmem:[%s2 + $0x180] sm:$0xff]
        %v1120 = vld [vmem:[%s2 + $0x188] sm:$0xff]
        %v1121 = vld [vmem:[%s2 + $0x190] sm:$0xff]
        %v1122 = vld [vmem:[%s2 + $0x198] sm:$0xff]
        %v1123 = vld [vmem:[%s2 + $0x1a0] sm:$0xff]
        %v1124 = vld [vmem:[%s2 + $0x1a8] sm:$0xff]
        %v1125 = vld [vmem:[%s2 + $0x1b0] sm:$0xff]
        %v1126 = vld [vmem:[%s2 + $0x1b8] sm:$0xff]
        %v1127 = vld [vmem:[%s2 + $0x1c0] sm:$0xff]
        %v1128 = vld [vmem:[%s2 + $0x1c8] sm:$0xff]
        %v1129 = vld [vmem:[%s2 + $0x1d0] sm:$0xff]
        %v1130 = vld [vmem:[%s2 + $0x1d8] sm:$0xff]
        %v1131 = vld [vmem:[%s2 + $0x1e0] sm:$0xff]
        %v1132 = vld [vmem:[%s2 + $0x1e8] sm:$0xff]
        %v1133 = vld [vmem:[%s2 + $0x1f0] sm:$0xff]
        %v1134 = vld [vmem:[%s2 + $0x1f8] sm:$0xff]
        %v1135 = vld [vmem:[%s2 + $0x200] sm:$0xff]
        %v1136 = vld [vmem:[%s2 + $0x208] sm:$0xff]
        %v1137 = vld [vmem:[%s2 + $0x210] sm:$0xff]
        %v1138 = vld [vmem:[%s2 + $0x218] sm:$0xff]
        %v1139 = vld [vmem:[%s2 + $0x220] sm:$0xff]
        %v1140 = vld [vmem:[%s2 + $0x228] sm:$0xff]
        %v1141 = vld [vmem:[%s2 + $0x230] sm:$0xff]
        %v1142 = vld [vmem:[%s2 + $0x238] sm:$0xff]
        %v1143 = vld [vmem:[%s2 + $0x240] sm:$0xff]
        %v1144 = vld [vmem:[%s2 + $0x248] sm:$0xff]
        %v1145 = vld [vmem:[%s2 + $0x250] sm:$0xff]
        %v1146 = vld [vmem:[%s2 + $0x258] sm:$0xff]
        %v1147 = vld [vmem:[%s2 + $0x260] sm:$0xff]
        %v1148 = vld [vmem:[%s2 + $0x268] sm:$0xff]
        %v1149 = vld [vmem:[%s2 + $0x270] sm:$0xff]
        %v1150 = vld [vmem:[%s2 + $0x278] sm:$0xff]
        %v1151 = vld [vmem:[%s2 + $0x280] sm:$0xff]
        %v1152 = vld [vmem:[%s2 + $0x288] sm:$0xff]
        %v1153 = vld [vmem:[%s2 + $0x290] sm:$0xff]
        %v1154 = vld [vmem:[%s2 + $0x298] sm:$0xff]
        %v1155 = vld [vmem:[%s2 + $0x2a0] sm:$0xff]
        %v1156 = vld [vmem:[%s2 + $0x2a8] sm:$0xff]
        %v1157 = vld [vmem:[%s2 + $0x2b0] sm:$0xff]
        %v1158 = vld [vmem:[%s2 + $0x2b8] sm:$0xff]
        %v1159 = vld [vmem:[%s2 + $0x2c0] sm:$0xff]
        %v1160 = vld [vmem:[%s2 + $0x2c8] sm:$0xff]
        %v1161 = vld [vmem:[%s2 + $0x2d0] sm:$0xff]
        %v1162 = vld [vmem:[%s2 + $0x2d8] sm:$0xff]
        %v1163 = vld [vmem:[%s2 + $0x2e0] sm:$0xff]
        %v1164 = vld [vmem:[%s2 + $0x2e8] sm:$0xff]
        %v1165 = vld [vmem:[%s2 + $0x2f0] sm:$0xff]
        %v1166 = vld [vmem:[%s2 + $0x2f8] sm:$0xff]
        %v1167 = vld [vmem:[%s2 + $0x300] sm:$0xff]
        %v1168 = vld [vmem:[%s2 + $0x308] sm:$0xff]
        %v1169 = vld [vmem:[%s2 + $0x310] sm:$0xff]
        %v1170 = vld [vmem:[%s2 + $0x318] sm:$0xff]
        %v1171 = vld [vmem:[%s2 + $0x320] sm:$0xff]
        %v1172 = vld [vmem:[%s2 + $0x328] sm:$0xff]
        %v1173 = vld [vmem:[%s2 + $0x330] sm:$0xff]
        %v1174 = vld [vmem:[%s2 + $0x338] sm:$0xff]
        %v1175 = vld [vmem:[%s2 + $0x340] sm:$0xff]
        %v1176 = vld [vmem:[%s2 + $0x348] sm:$0xff]
        %v1177 = vld [vmem:[%s2 + $0x350] sm:$0xff]
        %v1178 = vld [vmem:[%s2 + $0x358] sm:$0xff]
        %v1179 = vld [vmem:[%s2 + $0x360] sm:$0xff]
        %v1180 = vld [vmem:[%s2 + $0x368] sm:$0xff]
        %v1181 = vld [vmem:[%s2 + $0x370] sm:$0xff]
        %v1182 = vld [vmem:[%s2 + $0x378] sm:$0xff]
        %v1183 = vld [vmem:[%s2 + $0x380] sm:$0xff]
        %v1184 = vld [vmem:[%s2 + $0x388] sm:$0xff]
        %v1185 = vld [vmem:[%s2 + $0x390] sm:$0xff]
        %v1186 = vld [vmem:[%s2 + $0x398] sm:$0xff]
        %v1187 = vld [vmem:[%s2 + $0x3a0] sm:$0xff]
        %v1188 = vld [vmem:[%s2 + $0x3a8] sm:$0xff]
        %v1189 = vld [vmem:[%s2 + $0x3b0] sm:$0xff]
        %v1190 = vld [vmem:[%s2 + $0x3b8] sm:$0xff]
        %v1191 = vld [vmem:[%s2 + $0x3c0] sm:$0xff]
        %v1192 = vld [vmem:[%s2 + $0x3c8] sm:$0xff]
        %v1193 = vld [vmem:[%s2 + $0x3d0] sm:$0xff]
        %v1194 = vld [vmem:[%s2 + $0x3d8] sm:$0xff]
        %v1195 = vld [vmem:[%s2 + $0x3e0] sm:$0xff]
        %v1196 = vld [vmem:[%s2 + $0x3e8] sm:$0xff]
        %v1197 = vld [vmem:[%s2 + $0x3f0] sm:$0xff]
        %v1198 = vld [vmem:[%s2 + $0x3f8] sm:$0xff]
        %v1199 = vld [vmem:[%s2 + $0x400] sm:$0xff]
        %v1200 = vld [vmem:[%s2 + $0x408] sm:$0xff]
        %v1201 = vld [vmem:[%s2 + $0x410] sm:$0xff]
        %v1202 = vld [vmem:[%s2 + $0x418] sm:$0xff]
        %v1203 = vld [vmem:[%s2 + $0x420] sm:$0xff]
        %v1204 = vld [vmem:[%s2 + $0x428] sm:$0xff]
        %v1205 = vld [vmem:[%s2 + $0x430] sm:$0xff]
        %v1206 = vld [vmem:[%s2 + $0x438] sm:$0xff]
        %v1207 = vld [vmem:[%s2 + $0x440] sm:$0xff]
        %v1208 = vld [vmem:[%s2 + $0x448] sm:$0xff]
        %v1209 = vld [vmem:[%s2 + $0x450] sm:$0xff]
        %v1210 = vld [vmem:[%s2 + $0x458] sm:$0xff]
        %v1211 = vld [vmem:[%s2 + $0x460] sm:$0xff]
        %v1212 = vld [vmem:[%s2 + $0x468] sm:$0xff]
        %v1213 = vld [vmem:[%s2 + $0x470] sm:$0xff]
        %v1214 = vld [vmem:[%s2 + $0x478] sm:$0xff]
        %v1215 = vld [vmem:[%s2 + $0x480] sm:$0xff]
        %v1216 = vld [vmem:[%s2 + $0x488] sm:$0xff]
        %v1217 = vld [vmem:[%s2 + $0x490] sm:$0xff]
        %v1218 = vld [vmem:[%s2 + $0x498] sm:$0xff]
        %v1219 = vld [vmem:[%s2 + $0x4a0] sm:$0xff]
        %v1220 = vld [vmem:[%s2 + $0x4a8] sm:$0xff]
        %v1221 = vld [vmem:[%s2 + $0x4b0] sm:$0xff]
        %v1222 = vld [vmem:[%s2 + $0x4b8] sm:$0xff]
        %v1223 = vld [vmem:[%s2 + $0x4c0] sm:$0xff]
        %v1224 = vld [vmem:[%s2 + $0x4c8] sm:$0xff]
        %v1225 = vld [vmem:[%s2 + $0x4d0] sm:$0xff]
        %v1226 = vld [vmem:[%s2 + $0x4d8] sm:$0xff]
        %v1227 = vld [vmem:[%s2 + $0x4e0] sm:$0xff]
        %v1228 = vld [vmem:[%s2 + $0x4e8] sm:$0xff]
        %v1229 = vld [vmem:[%s2 + $0x4f0] sm:$0xff]
        %v1230 = vld [vmem:[%s2 + $0x4f8] sm:$0xff]
        %v1231 = vld [vmem:[%s2 + $0x500] sm:$0xff]
        %v1232 = vld [vmem:[%s2 + $0x508] sm:$0xff]
        %v1233 = vld [vmem:[%s2 + $0x510] sm:$0xff]
        %v1234 = vld [vmem:[%s2 + $0x518] sm:$0xff]
        %v1235 = vld [vmem:[%s2 + $0x520] sm:$0xff]
        %v1236 = vld [vmem:[%s2 + $0x528] sm:$0xff]
        %v1237 = vld [vmem:[%s2 + $0x530] sm:$0xff]
        %v1238 = vld [vmem:[%s2 + $0x538] sm:$0xff]
        %v1239 = vld [vmem:[%s2 + $0x540] sm:$0xff]
        %v1240 = vld [vmem:[%s2 + $0x548] sm:$0xff]
        %v1241 = vld [vmem:[%s2 + $0x550] sm:$0xff]
        %v1242 = vld [vmem:[%s2 + $0x558] sm:$0xff]
        %v1243 = vld [vmem:[%s2 + $0x560] sm:$0xff]
        %v1244 = vld [vmem:[%s2 + $0x568] sm:$0xff]
        %v1245 = vld [vmem:[%s2 + $0x570] sm:$0xff]
        %v1246 = vld [vmem:[%s2 + $0x578] sm:$0xff]
        %v1247 = vld [vmem:[%s2 + $0x580] sm:$0xff]
        %v1248 = vld [vmem:[%s2 + $0x588] sm:$0xff]
        %v1249 = vld [vmem:[%s2 + $0x590] sm:$0xff]
        %v1250 = vld [vmem:[%s2 + $0x598] sm:$0xff]
        %v1251 = vld [vmem:[%s2 + $0x5a0] sm:$0xff]
        %v1252 = vld [vmem:[%s2 + $0x5a8] sm:$0xff]
        %v1253 = vld [vmem:[%s2 + $0x5b0] sm:$0xff]
        %v1254 = vld [vmem:[%s2 + $0x5b8] sm:$0xff]
        %v1255 = vld [vmem:[%s2 + $0x5c0] sm:$0xff]
        %v1256 = vld [vmem:[%s2 + $0x5c8] sm:$0xff]
        %v1257 = vld [vmem:[%s2 + $0x5d0] sm:$0xff]
        %v1258 = vld [vmem:[%s2 + $0x5d8] sm:$0xff]
        %v1259 = vld [vmem:[%s2 + $0x5e0] sm:$0xff]
        %v1260 = vld [vmem:[%s2 + $0x5e8] sm:$0xff]
        %v1261 = vld [vmem:[%s2 + $0x5f0] sm:$0xff]
        %v1262 = vld [vmem:[%s2 + $0x5f8] sm:$0xff]
        %v1263 = vld [vmem:[%s2 + $0x600] sm:$0xff]
        %v1264 = vld [vmem:[%s2 + $0x608] sm:$0xff]
        %v1265 = vld [vmem:[%s2 + $0x610] sm:$0xff]
        %v1266 = vld [vmem:[%s2 + $0x618] sm:$0xff]
        %v1267 = vld [vmem:[%s2 + $0x620] sm:$0xff]
        %v1268 = vld [vmem:[%s2 + $0x628] sm:$0xff]
        %v1269 = vld [vmem:[%s2 + $0x630] sm:$0xff]
        %v1270 = vld [vmem:[%s2 + $0x638] sm:$0xff]
        %v1271 = vld [vmem:[%s2 + $0x640] sm:$0xff]
        %v1272 = vld [vmem:[%s2 + $0x648] sm:$0xff]
        %v1273 = vld [vmem:[%s2 + $0x650] sm:$0xff]
        %v1274 = vld [vmem:[%s2 + $0x658] sm:$0xff]
        %v1275 = vld [vmem:[%s2 + $0x660] sm:$0xff]
        %v1276 = vld [vmem:[%s2 + $0x668] sm:$0xff]
        %v1277 = vld [vmem:[%s2 + $0x670] sm:$0xff]
        %v1278 = vld [vmem:[%s2 + $0x678] sm:$0xff]
        %v1279 = vld [vmem:[%s2 + $0x680] sm:$0xff]
        %v1280 = vld [vmem:[%s2 + $0x688] sm:$0xff]
        %v1281 = vld [vmem:[%s2 + $0x690] sm:$0xff]
        %v1282 = vld [vmem:[%s2 + $0x698] sm:$0xff]
        %v1283 = vld [vmem:[%s2 + $0x6a0] sm:$0xff]
        %v1284 = vld [vmem:[%s2 + $0x6a8] sm:$0xff]
        %v1285 = vld [vmem:[%s2 + $0x6b0] sm:$0xff]
        %v1286 = vld [vmem:[%s2 + $0x6b8] sm:$0xff]
        %v1287 = vld [vmem:[%s2 + $0x6c0] sm:$0xff]
        %v1288 = vld [vmem:[%s2 + $0x6c8] sm:$0xff]
        %v1289 = vld [vmem:[%s2 + $0x6d0] sm:$0xff]
        %v1290 = vld [vmem:[%s2 + $0x6d8] sm:$0xff]
        %v1291 = vld [vmem:[%s2 + $0x6e0] sm:$0xff]
        %v1292 = vld [vmem:[%s2 + $0x6e8] sm:$0xff]
        %v1293 = vld [vmem:[%s2 + $0x6f0] sm:$0xff]
        %v1294 = vld [vmem:[%s2 + $0x6f8] sm:$0xff]
        %v1295 = vld [vmem:[%s2 + $0x700] sm:$0xff]
        %v1296 = vld [vmem:[%s2 + $0x708] sm:$0xff]
        %v1297 = vld [vmem:[%s2 + $0x710] sm:$0xff]
        %v1298 = vld [vmem:[%s2 + $0x718] sm:$0xff]
        %v1299 = vld [vmem:[%s2 + $0x720] sm:$0xff]
        %v1300 = vld [vmem:[%s2 + $0x728] sm:$0xff]
        %v1301 = vld [vmem:[%s2 + $0x730] sm:$0xff]
        %v1302 = vld [vmem:[%s2 + $0x738] sm:$0xff]
        %v1303 = vld [vmem:[%s2 + $0x740] sm:$0xff]
        %v1304 = vld [vmem:[%s2 + $0x748] sm:$0xff]
        %v1305 = vld [vmem:[%s2 + $0x750] sm:$0xff]
        %v1306 = vld [vmem:[%s2 + $0x758] sm:$0xff]
        %v1307 = vld [vmem:[%s2 + $0x760] sm:$0xff]
        %v1308 = vld [vmem:[%s2 + $0x768] sm:$0xff]
        %v1309 = vld [vmem:[%s2 + $0x770] sm:$0xff]
        %v1310 = vld [vmem:[%s2 + $0x778] sm:$0xff]
        %v1311 = vld [vmem:[%s2 + $0x780] sm:$0xff]
        %v1312 = vld [vmem:[%s2 + $0x788] sm:$0xff]
        %v1313 = vld [vmem:[%s2 + $0x790] sm:$0xff]
        %v1314 = vld [vmem:[%s2 + $0x798] sm:$0xff]
        %v1315 = vld [vmem:[%s2 + $0x7a0] sm:$0xff]
        %v1316 = vld [vmem:[%s2 + $0x7a8] sm:$0xff]
        %v1317 = vld [vmem:[%s2 + $0x7b0] sm:$0xff]
        %v1318 = vld [vmem:[%s2 + $0x7b8] sm:$0xff]
        %v1319 = vld [vmem:[%s2 + $0x7c0] sm:$0xff]
        %v1320 = vld [vmem:[%s2 + $0x7c8] sm:$0xff]
        %v1321 = vld [vmem:[%s2 + $0x7d0] sm:$0xff]
        %v1322 = vld [vmem:[%s2 + $0x7d8] sm:$0xff]
        %v1323 = vld [vmem:[%s2 + $0x7e0] sm:$0xff]
        %v1324 = vld [vmem:[%s2 + $0x7e8] sm:$0xff]
        %v1325 = vld [vmem:[%s2 + $0x7f0] sm:$0xff]
        %v1326 = vld [vmem:[%s2 + $0x7f8] sm:$0xff]
        %v1327 = vld [vmem:[%s3] sm:$0xff]
        %v1328 = vld [vmem:[%s3 + $0x8] sm:$0xff]
        %v1329 = vld [vmem:[%s3 + $0x10] sm:$0xff]
        %v1330 = vld [vmem:[%s3 + $0x18] sm:$0xff]
        %v1331 = vld [vmem:[%s3 + $0x20] sm:$0xff]
        %v1332 = vld [vmem:[%s3 + $0x28] sm:$0xff]
        %v1333 = vld [vmem:[%s3 + $0x30] sm:$0xff]
        %v1334 = vld [vmem:[%s3 + $0x38] sm:$0xff]
        %v1335 = vld [vmem:[%s3 + $0x40] sm:$0xff]
        %v1336 = vld [vmem:[%s3 + $0x48] sm:$0xff]
        %v1337 = vld [vmem:[%s3 + $0x50] sm:$0xff]
        %v1338 = vld [vmem:[%s3 + $0x58] sm:$0xff]
        %v1339 = vld [vmem:[%s3 + $0x60] sm:$0xff]
        %v1340 = vld [vmem:[%s3 + $0x68] sm:$0xff]
        %v1341 = vld [vmem:[%s3 + $0x70] sm:$0xff]
        %v1342 = vld [vmem:[%s3 + $0x78] sm:$0xff]
        %v1343 = vld [vmem:[%s3 + $0x80] sm:$0xff]
        %v1344 = vld [vmem:[%s3 + $0x88] sm:$0xff]
        %v1345 = vld [vmem:[%s3 + $0x90] sm:$0xff]
        %v1346 = vld [vmem:[%s3 + $0x98] sm:$0xff]
        %v1347 = vld [vmem:[%s3 + $0xa0] sm:$0xff]
        %v1348 = vld [vmem:[%s3 + $0xa8] sm:$0xff]
        %v1349 = vld [vmem:[%s3 + $0xb0] sm:$0xff]
        %v1350 = vld [vmem:[%s3 + $0xb8] sm:$0xff]
        %v1351 = vld [vmem:[%s3 + $0xc0] sm:$0xff]
        %v1352 = vld [vmem:[%s3 + $0xc8] sm:$0xff]
        %v1353 = vld [vmem:[%s3 + $0xd0] sm:$0xff]
        %v1354 = vld [vmem:[%s3 + $0xd8] sm:$0xff]
        %v1355 = vld [vmem:[%s3 + $0xe0] sm:$0xff]
        %v1356 = vld [vmem:[%s3 + $0xe8] sm:$0xff]
        %v1357 = vld [vmem:[%s3 + $0xf0] sm:$0xff]
        %v1358 = vld [vmem:[%s3 + $0xf8] sm:$0xff]
        %v1359 = vld [vmem:[%s3 + $0x100] sm:$0xff]
        %v1360 = vld [vmem:[%s3 + $0x108] sm:$0xff]
        %v1361 = vld [vmem:[%s3 + $0x110] sm:$0xff]
        %v1362 = vld [vmem:[%s3 + $0x118] sm:$0xff]
        %v1363 = vld [vmem:[%s3 + $0x120] sm:$0xff]
        %v1364 = vld [vmem:[%s3 + $0x128] sm:$0xff]
        %v1365 = vld [vmem:[%s3 + $0x130] sm:$0xff]
        %v1366 = vld [vmem:[%s3 + $0x138] sm:$0xff]
        %v1367 = vld [vmem:[%s3 + $0x140] sm:$0xff]
        %v1368 = vld [vmem:[%s3 + $0x148] sm:$0xff]
        %v1369 = vld [vmem:[%s3 + $0x150] sm:$0xff]
        %v1370 = vld [vmem:[%s3 + $0x158] sm:$0xff]
        %v1371 = vld [vmem:[%s3 + $0x160] sm:$0xff]
        %v1372 = vld [vmem:[%s3 + $0x168] sm:$0xff]
        %v1373 = vld [vmem:[%s3 + $0x170] sm:$0xff]
        %v1374 = vld [vmem:[%s3 + $0x178] sm:$0xff]
        %v1375 = vld [vmem:[%s3 + $0x180] sm:$0xff]
        %v1376 = vld [vmem:[%s3 + $0x188] sm:$0xff]
        %v1377 = vld [vmem:[%s3 + $0x190] sm:$0xff]
        %v1378 = vld [vmem:[%s3 + $0x198] sm:$0xff]
        %v1379 = vld [vmem:[%s3 + $0x1a0] sm:$0xff]
        %v1380 = vld [vmem:[%s3 + $0x1a8] sm:$0xff]
        %v1381 = vld [vmem:[%s3 + $0x1b0] sm:$0xff]
        %v1382 = vld [vmem:[%s3 + $0x1b8] sm:$0xff]
        %v1383 = vld [vmem:[%s3 + $0x1c0] sm:$0xff]
        %v1384 = vld [vmem:[%s3 + $0x1c8] sm:$0xff]
        %v1385 = vld [vmem:[%s3 + $0x1d0] sm:$0xff]
        %v1386 = vld [vmem:[%s3 + $0x1d8] sm:$0xff]
        %v1387 = vld [vmem:[%s3 + $0x1e0] sm:$0xff]
        %v1388 = vld [vmem:[%s3 + $0x1e8] sm:$0xff]
        %v1389 = vld [vmem:[%s3 + $0x1f0] sm:$0xff]
        %v1390 = vld [vmem:[%s3 + $0x1f8] sm:$0xff]
        %v1391 = vld [vmem:[%s3 + $0x200] sm:$0xff]
        %v1392 = vld [vmem:[%s3 + $0x208] sm:$0xff]
        %v1393 = vld [vmem:[%s3 + $0x210] sm:$0xff]
        %v1394 = vld [vmem:[%s3 + $0x218] sm:$0xff]
        %v1395 = vld [vmem:[%s3 + $0x220] sm:$0xff]
        %v1396 = vld [vmem:[%s3 + $0x228] sm:$0xff]
        %v1397 = vld [vmem:[%s3 + $0x230] sm:$0xff]
        %v1398 = vld [vmem:[%s3 + $0x238] sm:$0xff]
        %v1399 = vld [vmem:[%s3 + $0x240] sm:$0xff]
        %v1400 = vld [vmem:[%s3 + $0x248] sm:$0xff]
        %v1401 = vld [vmem:[%s3 + $0x250] sm:$0xff]
        %v1402 = vld [vmem:[%s3 + $0x258] sm:$0xff]
        %v1403 = vld [vmem:[%s3 + $0x260] sm:$0xff]
        %v1404 = vld [vmem:[%s3 + $0x268] sm:$0xff]
        %v1405 = vld [vmem:[%s3 + $0x270] sm:$0xff]
        %v1406 = vld [vmem:[%s3 + $0x278] sm:$0xff]
        %v1407 = vld [vmem:[%s3 + $0x280] sm:$0xff]
        %v1408 = vld [vmem:[%s3 + $0x288] sm:$0xff]
        %v1409 = vld [vmem:[%s3 + $0x290] sm:$0xff]
        %v1410 = vld [vmem:[%s3 + $0x298] sm:$0xff]
        %v1411 = vld [vmem:[%s3 + $0x2a0] sm:$0xff]
        %v1412 = vld [vmem:[%s3 + $0x2a8] sm:$0xff]
        %v1413 = vld [vmem:[%s3 + $0x2b0] sm:$0xff]
        %v1414 = vld [vmem:[%s3 + $0x2b8] sm:$0xff]
        %v1415 = vld [vmem:[%s3 + $0x2c0] sm:$0xff]
        %v1416 = vld [vmem:[%s3 + $0x2c8] sm:$0xff]
        %v1417 = vld [vmem:[%s3 + $0x2d0] sm:$0xff]
        %v1418 = vld [vmem:[%s3 + $0x2d8] sm:$0xff]
        %v1419 = vld [vmem:[%s3 + $0x2e0] sm:$0xff]
        %v1420 = vld [vmem:[%s3 + $0x2e8] sm:$0xff]
        %v1421 = vld [vmem:[%s3 + $0x2f0] sm:$0xff]
        %v1422 = vld [vmem:[%s3 + $0x2f8] sm:$0xff]
        %v1423 = vld [vmem:[%s3 + $0x300] sm:$0xff]
        %v1424 = vld [vmem:[%s3 + $0x308] sm:$0xff]
        %v1425 = vld [vmem:[%s3 + $0x310] sm:$0xff]
        %v1426 = vld [vmem:[%s3 + $0x318] sm:$0xff]
        %v1427 = vld [vmem:[%s3 + $0x320] sm:$0xff]
        %v1428 = vld [vmem:[%s3 + $0x328] sm:$0xff]
        %v1429 = vld [vmem:[%s3 + $0x330] sm:$0xff]
        %v1430 = vld [vmem:[%s3 + $0x338] sm:$0xff]
        %v1431 = vld [vmem:[%s3 + $0x340] sm:$0xff]
        %v1432 = vld [vmem:[%s3 + $0x348] sm:$0xff]
        %v1433 = vld [vmem:[%s3 + $0x350] sm:$0xff]
        %v1434 = vld [vmem:[%s3 + $0x358] sm:$0xff]
        %v1435 = vld [vmem:[%s3 + $0x360] sm:$0xff]
        %v1436 = vld [vmem:[%s3 + $0x368] sm:$0xff]
        %v1437 = vld [vmem:[%s3 + $0x370] sm:$0xff]
        %v1438 = vld [vmem:[%s3 + $0x378] sm:$0xff]
        %v1439 = vld [vmem:[%s3 + $0x380] sm:$0xff]
        %v1440 = vld [vmem:[%s3 + $0x388] sm:$0xff]
        %v1441 = vld [vmem:[%s3 + $0x390] sm:$0xff]
        %v1442 = vld [vmem:[%s3 + $0x398] sm:$0xff]
        %v1443 = vld [vmem:[%s3 + $0x3a0] sm:$0xff]
        %v1444 = vld [vmem:[%s3 + $0x3a8] sm:$0xff]
        %v1445 = vld [vmem:[%s3 + $0x3b0] sm:$0xff]
        %v1446 = vld [vmem:[%s3 + $0x3b8] sm:$0xff]
        %v1447 = vld [vmem:[%s3 + $0x3c0] sm:$0xff]
        %v1448 = vld [vmem:[%s3 + $0x3c8] sm:$0xff]
        %v1449 = vld [vmem:[%s3 + $0x3d0] sm:$0xff]
        %v1450 = vld [vmem:[%s3 + $0x3d8] sm:$0xff]
        %v1451 = vld [vmem:[%s3 + $0x3e0] sm:$0xff]
        %v1452 = vld [vmem:[%s3 + $0x3e8] sm:$0xff]
        %v1453 = vld [vmem:[%s3 + $0x3f0] sm:$0xff]
        %v1454 = vld [vmem:[%s3 + $0x3f8] sm:$0xff]
        %1455 = vmatprep.subr.mxu0 0.0
        %1456 = vmatpush1.msra.mxu0 %v1086
        %1457 = vmatprep.subr.mxu0 0.0
        %1458 = vmatpush1.msra.mxu0 %v1085
        %1459 = vmatprep.subr.mxu0 0.0
        %1460 = vmatpush1.msra.mxu0 %v1084
        %1461 = vmatprep.subr.mxu0 0.0
        %1462 = vmatpush1.msra.mxu0 %v1083
        %1463 = vmatprep.subr.mxu0 0.0
        %1464 = vmatpush1.msra.mxu0 %v1082
        %1465 = vmatprep.subr.mxu0 0.0
        %1466 = vmatpush1.msra.mxu0 %v1081
        %1467 = vmatprep.subr.mxu0 0.0
        %1468 = vmatpush1.msra.mxu0 %v1080
        %1469 = vmatprep.subr.mxu0 0.0
        %1470 = vmatpush1.msra.mxu0 %v1079
        %1471 = vmatprep.subr.mxu0 0.0
        %1472 = vmatpush1.msra.mxu0 %v1078
        %1473 = vmatprep.subr.mxu0 0.0
        %1474 = vmatpush1.msra.mxu0 %v1077
        %1475 = vmatprep.subr.mxu0 0.0
        %1476 = vmatpush1.msra.mxu0 %v1076
        %1477 = vmatprep.subr.mxu0 0.0
        %1478 = vmatpush1.msra.mxu0 %v1075
        %1479 = vmatprep.subr.mxu0 0.0
        %1480 = vmatpush1.msra.mxu0 %v1074
        %1481 = vmatprep.subr.mxu0 0.0
        %1482 = vmatpush1.msra.mxu0 %v1073
        %1483 = vmatprep.subr.mxu0 0.0
        %1484 = vmatpush1.msra.mxu0 %v1072
        %1485 = vmatprep.subr.mxu0 0.0
        %1486 = vmatpush1.msra.mxu0 %v1071
        %1487 = vmatprep.subr.mxu0 0.0
        %1488 = vmatpush2.msra.mxu0 %v1102
        %1489 = vmatprep.subr.mxu0 0.0
        %1490 = vmatpush2.msra.mxu0 %v1101
        %1491 = vmatprep.subr.mxu0 0.0
        %1492 = vmatpush2.msra.mxu0 %v1100
        %1493 = vmatprep.subr.mxu0 0.0
        %1494 = vmatpush2.msra.mxu0 %v1099
        %1495 = vmatprep.subr.mxu0 0.0
        %1496 = vmatpush2.msra.mxu0 %v1098
        %1497 = vmatprep.subr.mxu0 0.0
        %1498 = vmatpush2.msra.mxu0 %v1097
        %1499 = vmatprep.subr.mxu0 0.0
        %1500 = vmatpush2.msra.mxu0 %v1096
        %1501 = vmatprep.subr.mxu0 0.0
        %1502 = vmatpush2.msra.mxu0 %v1095
        %1503 = vmatprep.subr.mxu0 0.0
        %1504 = vmatpush2.msra.mxu0 %v1094
        %1505 = vmatprep.subr.mxu0 0.0
        %1506 = vmatpush2.msra.mxu0 %v1093
        %1507 = vmatprep.subr.mxu0 0.0
        %1508 = vmatpush2.msra.mxu0 %v1092
        %1509 = vmatprep.subr.mxu0 0.0
        %1510 = vmatpush2.msra.mxu0 %v1091
        %1511 = vmatprep.subr.mxu0 0.0
        %1512 = vmatpush2.msra.mxu0 %v1090
        %1513 = vmatprep.subr.mxu0 0.0
        %1514 = vmatpush2.msra.mxu0 %v1089
        %1515 = vmatprep.subr.mxu0 0.0
        %1516 = vmatpush2.msra.mxu0 %v1088
        %1517 = vmatprep.subr.mxu0 0.0
        %1518 = vmatpush2.msra.mxu0 %v1087
        %1519 = vmatprep.mubr.f32.mxu0 %v524
        %1520 = vmatmul.mubr.f32.gmra.mxu0 %v522
        %v1521 = vpop.f32.mrf.mxu0
        %v1522 = vadd.f32 0.0, %v1521
        %v1523 = vpop.f32.mrf.mxu0
        %1524 = vmatprep.mubr.f32.mxu0 %v528
        %1525 = vmatmul.mubr.f32.gmra.mxu0 %v526
        %v1526 = vpop.f32.mrf.mxu0
        %v1527 = vadd.f32 0.0, %v1526
        %v1528 = vpop.f32.mrf.mxu0
        %1529 = vmatprep.mubr.f32.mxu0 %v534
        %1530 = vmatmul.mubr.f32.gmra.mxu0 %v532
        %v1531 = vpop.f32.mrf.mxu0
        %v1532 = vadd.f32 0.0, %v1531
        %v1533 = vpop.f32.mrf.mxu0
        %1534 = vmatprep.mubr.f32.mxu0 %v538
        %1535 = vmatmul.mubr.f32.gmra.mxu0 %v536
        %v1536 = vpop.f32.mrf.mxu0
        %v1537 = vadd.f32 0.0, %v1536
        %v1538 = vpop.f32.mrf.mxu0
        %1539 = vmatprep.mubr.f32.mxu0 %v544
        %1540 = vmatmul.mubr.f32.gmra.mxu0 %v542
        %v1541 = vpop.f32.mrf.mxu0
        %v1542 = vadd.f32 0.0, %v1541
        %v1543 = vpop.f32.mrf.mxu0
        %1544 = vmatprep.mubr.f32.mxu0 %v548
        %1545 = vmatmul.mubr.f32.gmra.mxu0 %v546
        %v1546 = vpop.f32.mrf.mxu0
        %v1547 = vadd.f32 0.0, %v1546
        %v1548 = vpop.f32.mrf.mxu0
        %1549 = vmatprep.mubr.f32.mxu0 %v554
        %1550 = vmatmul.mubr.f32.gmra.mxu0 %v552
        %v1551 = vpop.f32.mrf.mxu0
        %v1552 = vadd.f32 0.0, %v1551
        %v1553 = vpop.f32.mrf.mxu0
        %1554 = vmatprep.mubr.f32.mxu0 %v558
        %1555 = vmatmul.mubr.f32.gmra.mxu0 %v556
        %v1556 = vpop.f32.mrf.mxu0
        %v1557 = vadd.f32 0.0, %v1556
        %v1558 = vpop.f32.mrf.mxu0
        %1559 = vdwg.mxu0
        %1560 = vmatprep.subr.mxu0 0.0
        %1561 = vmatpush1.msra.mxu0 %v1118
        %1562 = vmatprep.subr.mxu0 0.0
        %1563 = vmatpush1.msra.mxu0 %v1117
        %1564 = vmatprep.subr.mxu0 0.0
        %1565 = vmatpush1.msra.mxu0 %v1116
        %1566 = vmatprep.subr.mxu0 0.0
        %1567 = vmatpush1.msra.mxu0 %v1115
        %1568 = vmatprep.subr.mxu0 0.0
        %1569 = vmatpush1.msra.mxu0 %v1114
        %1570 = vmatprep.subr.mxu0 0.0
        %1571 = vmatpush1.msra.mxu0 %v1113
        %1572 = vmatprep.subr.mxu0 0.0
        %1573 = vmatpush1.msra.mxu0 %v1112
        %1574 = vmatprep.subr.mxu0 0.0
        %1575 = vmatpush1.msra.mxu0 %v1111
        %1576 = vmatprep.subr.mxu0 0.0
        %1577 = vmatpush1.msra.mxu0 %v1110
        %1578 = vmatprep.subr.mxu0 0.0
        %1579 = vmatpush1.msra.mxu0 %v1109
        %1580 = vmatprep.subr.mxu0 0.0
        %1581 = vmatpush1.msra.mxu0 %v1108
        %1582 = vmatprep.subr.mxu0 0.0
        %1583 = vmatpush1.msra.mxu0 %v1107
        %1584 = vmatprep.subr.mxu0 0.0
        %1585 = vmatpush1.msra.mxu0 %v1106
        %1586 = vmatprep.subr.mxu0 0.0
        %1587 = vmatpush1.msra.mxu0 %v1105
        %1588 = vmatprep.subr.mxu0 0.0
        %1589 = vmatpush1.msra.mxu0 %v1104
        %1590 = vmatprep.subr.mxu0 0.0
        %1591 = vmatpush1.msra.mxu0 %v1103
        %1592 = vmatprep.subr.mxu0 0.0
        %1593 = vmatpush2.msra.mxu0 %v1134
        %1594 = vmatprep.subr.mxu0 0.0
        %1595 = vmatpush2.msra.mxu0 %v1133
        %1596 = vmatprep.subr.mxu0 0.0
        %1597 = vmatpush2.msra.mxu0 %v1132
        %1598 = vmatprep.subr.mxu0 0.0
        %1599 = vmatpush2.msra.mxu0 %v1131
        %1600 = vmatprep.subr.mxu0 0.0
        %1601 = vmatpush2.msra.mxu0 %v1130
        %1602 = vmatprep.subr.mxu0 0.0
        %1603 = vmatpush2.msra.mxu0 %v1129
        %1604 = vmatprep.subr.mxu0 0.0
        %1605 = vmatpush2.msra.mxu0 %v1128
        %1606 = vmatprep.subr.mxu0 0.0
        %1607 = vmatpush2.msra.mxu0 %v1127
        %1608 = vmatprep.subr.mxu0 0.0
        %1609 = vmatpush2.msra.mxu0 %v1126
        %1610 = vmatprep.subr.mxu0 0.0
        %1611 = vmatpush2.msra.mxu0 %v1125
        %1612 = vmatprep.subr.mxu0 0.0
        %1613 = vmatpush2.msra.mxu0 %v1124
        %1614 = vmatprep.subr.mxu0 0.0
        %1615 = vmatpush2.msra.mxu0 %v1123
        %1616 = vmatprep.subr.mxu0 0.0
        %1617 = vmatpush2.msra.mxu0 %v1122
        %1618 = vmatprep.subr.mxu0 0.0
        %1619 = vmatpush2.msra.mxu0 %v1121
        %1620 = vmatprep.subr.mxu0 0.0
        %1621 = vmatpush2.msra.mxu0 %v1120
        %1622 = vmatprep.subr.mxu0 0.0
        %1623 = vmatpush2.msra.mxu0 %v1119
        %1624 = vmatprep.mubr.f32.mxu0 %v597
        %1625 = vmatmul.mubr.f32.gmra.mxu0 %v595
        %v1626 = vpop.f32.mrf.mxu0
        %v1627 = vadd.f32 %v1522, %v1626
        %v1628 = vpop.f32.mrf.mxu0
        %1629 = vmatprep.mubr.f32.mxu0 %v601
        %1630 = vmatmul.mubr.f32.gmra.mxu0 %v599
        %v1631 = vpop.f32.mrf.mxu0
        %v1632 = vadd.f32 %v1527, %v1631
        %v1633 = vpop.f32.mrf.mxu0
        %1634 = vmatprep.mubr.f32.mxu0 %v607
        %1635 = vmatmul.mubr.f32.gmra.mxu0 %v605
        %v1636 = vpop.f32.mrf.mxu0
        %v1637 = vadd.f32 %v1532, %v1636
        %v1638 = vpop.f32.mrf.mxu0
        %1639 = vmatprep.mubr.f32.mxu0 %v611
        %1640 = vmatmul.mubr.f32.gmra.mxu0 %v609
        %v1641 = vpop.f32.mrf.mxu0
        %v1642 = vadd.f32 %v1537, %v1641
        %v1643 = vpop.f32.mrf.mxu0
        %1644 = vmatprep.mubr.f32.mxu0 %v617
        %1645 = vmatmul.mubr.f32.gmra.mxu0 %v615
        %v1646 = vpop.f32.mrf.mxu0
        %v1647 = vadd.f32 %v1542, %v1646
        %v1648 = vpop.f32.mrf.mxu0
        %1649 = vmatprep.mubr.f32.mxu0 %v621
        %1650 = vmatmul.mubr.f32.gmra.mxu0 %v619
        %v1651 = vpop.f32.mrf.mxu0
        %v1652 = vadd.f32 %v1547, %v1651
        %v1653 = vpop.f32.mrf.mxu0
        %1654 = vmatprep.mubr.f32.mxu0 %v627
        %1655 = vmatmul.mubr.f32.gmra.mxu0 %v625
        %v1656 = vpop.f32.mrf.mxu0
        %v1657 = vadd.f32 %v1552, %v1656
        %v1658 = vpop.f32.mrf.mxu0
        %1659 = vmatprep.mubr.f32.mxu0 %v631
        %1660 = vmatmul.mubr.f32.gmra.mxu0 %v629
        %v1661 = vpop.f32.mrf.mxu0
        %v1662 = vadd.f32 %v1557, %v1661
        %v1663 = vpop.f32.mrf.mxu0
        %1664 = vdwg.mxu0
        %1665 = vmatprep.subr.mxu0 0.0
        %1666 = vmatpush1.msra.mxu0 %v1150
        %1667 = vmatprep.subr.mxu0 0.0
        %1668 = vmatpush1.msra.mxu0 %v1149
        %1669 = vmatprep.subr.mxu0 0.0
        %1670 = vmatpush1.msra.mxu0 %v1148
        %1671 = vmatprep.subr.mxu0 0.0
        %1672 = vmatpush1.msra.mxu0 %v1147
        %1673 = vmatprep.subr.mxu0 0.0
        %1674 = vmatpush1.msra.mxu0 %v1146
        %1675 = vmatprep.subr.mxu0 0.0
        %1676 = vmatpush1.msra.mxu0 %v1145
        %1677 = vmatprep.subr.mxu0 0.0
        %1678 = vmatpush1.msra.mxu0 %v1144
        %1679 = vmatprep.subr.mxu0 0.0
        %1680 = vmatpush1.msra.mxu0 %v1143
        %1681 = vmatprep.subr.mxu0 0.0
        %1682 = vmatpush1.msra.mxu0 %v1142
        %1683 = vmatprep.subr.mxu0 0.0
        %1684 = vmatpush1.msra.mxu0 %v1141
        %1685 = vmatprep.subr.mxu0 0.0
        %1686 = vmatpush1.msra.mxu0 %v1140
        %1687 = vmatprep.subr.mxu0 0.0
        %1688 = vmatpush1.msra.mxu0 %v1139
        %1689 = vmatprep.subr.mxu0 0.0
        %1690 = vmatpush1.msra.mxu0 %v1138
        %1691 = vmatprep.subr.mxu0 0.0
        %1692 = vmatpush1.msra.mxu0 %v1137
        %1693 = vmatprep.subr.mxu0 0.0
        %1694 = vmatpush1.msra.mxu0 %v1136
        %1695 = vmatprep.subr.mxu0 0.0
        %1696 = vmatpush1.msra.mxu0 %v1135
        %1697 = vmatprep.subr.mxu0 0.0
        %1698 = vmatpush2.msra.mxu0 %v1166
        %1699 = vmatprep.subr.mxu0 0.0
        %1700 = vmatpush2.msra.mxu0 %v1165
        %1701 = vmatprep.subr.mxu0 0.0
        %1702 = vmatpush2.msra.mxu0 %v1164
        %1703 = vmatprep.subr.mxu0 0.0
        %1704 = vmatpush2.msra.mxu0 %v1163
        %1705 = vmatprep.subr.mxu0 0.0
        %1706 = vmatpush2.msra.mxu0 %v1162
        %1707 = vmatprep.subr.mxu0 0.0
        %1708 = vmatpush2.msra.mxu0 %v1161
        %1709 = vmatprep.subr.mxu0 0.0
        %1710 = vmatpush2.msra.mxu0 %v1160
        %1711 = vmatprep.subr.mxu0 0.0
        %1712 = vmatpush2.msra.mxu0 %v1159
        %1713 = vmatprep.subr.mxu0 0.0
        %1714 = vmatpush2.msra.mxu0 %v1158
        %1715 = vmatprep.subr.mxu0 0.0
        %1716 = vmatpush2.msra.mxu0 %v1157
        %1717 = vmatprep.subr.mxu0 0.0
        %1718 = vmatpush2.msra.mxu0 %v1156
        %1719 = vmatprep.subr.mxu0 0.0
        %1720 = vmatpush2.msra.mxu0 %v1155
        %1721 = vmatprep.subr.mxu0 0.0
        %1722 = vmatpush2.msra.mxu0 %v1154
        %1723 = vmatprep.subr.mxu0 0.0
        %1724 = vmatpush2.msra.mxu0 %v1153
        %1725 = vmatprep.subr.mxu0 0.0
        %1726 = vmatpush2.msra.mxu0 %v1152
        %1727 = vmatprep.subr.mxu0 0.0
        %1728 = vmatpush2.msra.mxu0 %v1151
        %1729 = vmatprep.mubr.f32.mxu0 %v670
        %1730 = vmatmul.mubr.f32.gmra.mxu0 %v668
        %v1731 = vpop.f32.mrf.mxu0
        %v1732 = vadd.f32 %v1627, %v1731
        %v1733 = vpop.f32.mrf.mxu0
        %1734 = vmatprep.mubr.f32.mxu0 %v674
        %1735 = vmatmul.mubr.f32.gmra.mxu0 %v672
        %v1736 = vpop.f32.mrf.mxu0
        %v1737 = vadd.f32 %v1632, %v1736
        %v1738 = vpop.f32.mrf.mxu0
        %1739 = vmatprep.mubr.f32.mxu0 %v680
        %1740 = vmatmul.mubr.f32.gmra.mxu0 %v678
        %v1741 = vpop.f32.mrf.mxu0
        %v1742 = vadd.f32 %v1637, %v1741
        %v1743 = vpop.f32.mrf.mxu0
        %1744 = vmatprep.mubr.f32.mxu0 %v684
        %1745 = vmatmul.mubr.f32.gmra.mxu0 %v682
        %v1746 = vpop.f32.mrf.mxu0
        %v1747 = vadd.f32 %v1642, %v1746
        %v1748 = vpop.f32.mrf.mxu0
        %1749 = vmatprep.mubr.f32.mxu0 %v690
        %1750 = vmatmul.mubr.f32.gmra.mxu0 %v688
        %v1751 = vpop.f32.mrf.mxu0
        %v1752 = vadd.f32 %v1647, %v1751
        %v1753 = vpop.f32.mrf.mxu0
        %1754 = vmatprep.mubr.f32.mxu0 %v694
        %1755 = vmatmul.mubr.f32.gmra.mxu0 %v692
        %v1756 = vpop.f32.mrf.mxu0
        %v1757 = vadd.f32 %v1652, %v1756
        %v1758 = vpop.f32.mrf.mxu0
        %1759 = vmatprep.mubr.f32.mxu0 %v700
        %1760 = vmatmul.mubr.f32.gmra.mxu0 %v698
        %v1761 = vpop.f32.mrf.mxu0
        %v1762 = vadd.f32 %v1657, %v1761
        %v1763 = vpop.f32.mrf.mxu0
        %1764 = vmatprep.mubr.f32.mxu0 %v704
        %1765 = vmatmul.mubr.f32.gmra.mxu0 %v702
        %v1766 = vpop.f32.mrf.mxu0
        %v1767 = vadd.f32 %v1662, %v1766
        %v1768 = vpop.f32.mrf.mxu0
        %1769 = vdwg.mxu0
        %1770 = vmatprep.subr.mxu0 0.0
        %1771 = vmatpush1.msra.mxu0 %v1182
        %1772 = vmatprep.subr.mxu0 0.0
        %1773 = vmatpush1.msra.mxu0 %v1181
        %1774 = vmatprep.subr.mxu0 0.0
        %1775 = vmatpush1.msra.mxu0 %v1180
        %1776 = vmatprep.subr.mxu0 0.0
        %1777 = vmatpush1.msra.mxu0 %v1179
        %1778 = vmatprep.subr.mxu0 0.0
        %1779 = vmatpush1.msra.mxu0 %v1178
        %1780 = vmatprep.subr.mxu0 0.0
        %1781 = vmatpush1.msra.mxu0 %v1177
        %1782 = vmatprep.subr.mxu0 0.0
        %1783 = vmatpush1.msra.mxu0 %v1176
        %1784 = vmatprep.subr.mxu0 0.0
        %1785 = vmatpush1.msra.mxu0 %v1175
        %1786 = vmatprep.subr.mxu0 0.0
        %1787 = vmatpush1.msra.mxu0 %v1174
        %1788 = vmatprep.subr.mxu0 0.0
        %1789 = vmatpush1.msra.mxu0 %v1173
        %1790 = vmatprep.subr.mxu0 0.0
        %1791 = vmatpush1.msra.mxu0 %v1172
        %1792 = vmatprep.subr.mxu0 0.0
        %1793 = vmatpush1.msra.mxu0 %v1171
        %1794 = vmatprep.subr.mxu0 0.0
        %1795 = vmatpush1.msra.mxu0 %v1170
        %1796 = vmatprep.subr.mxu0 0.0
        %1797 = vmatpush1.msra.mxu0 %v1169
        %1798 = vmatprep.subr.mxu0 0.0
        %1799 = vmatpush1.msra.mxu0 %v1168
        %1800 = vmatprep.subr.mxu0 0.0
        %1801 = vmatpush1.msra.mxu0 %v1167
        %1802 = vmatprep.subr.mxu0 0.0
        %1803 = vmatpush2.msra.mxu0 %v1198
        %1804 = vmatprep.subr.mxu0 0.0
        %1805 = vmatpush2.msra.mxu0 %v1197
        %1806 = vmatprep.subr.mxu0 0.0
        %1807 = vmatpush2.msra.mxu0 %v1196
        %1808 = vmatprep.subr.mxu0 0.0
        %1809 = vmatpush2.msra.mxu0 %v1195
        %1810 = vmatprep.subr.mxu0 0.0
        %1811 = vmatpush2.msra.mxu0 %v1194
        %1812 = vmatprep.subr.mxu0 0.0
        %1813 = vmatpush2.msra.mxu0 %v1193
        %1814 = vmatprep.subr.mxu0 0.0
        %1815 = vmatpush2.msra.mxu0 %v1192
        %1816 = vmatprep.subr.mxu0 0.0
        %1817 = vmatpush2.msra.mxu0 %v1191
        %1818 = vmatprep.subr.mxu0 0.0
        %1819 = vmatpush2.msra.mxu0 %v1190
        %1820 = vmatprep.subr.mxu0 0.0
        %1821 = vmatpush2.msra.mxu0 %v1189
        %1822 = vmatprep.subr.mxu0 0.0
        %1823 = vmatpush2.msra.mxu0 %v1188
        %1824 = vmatprep.subr.mxu0 0.0
        %1825 = vmatpush2.msra.mxu0 %v1187
        %1826 = vmatprep.subr.mxu0 0.0
        %1827 = vmatpush2.msra.mxu0 %v1186
        %1828 = vmatprep.subr.mxu0 0.0
        %1829 = vmatpush2.msra.mxu0 %v1185
        %1830 = vmatprep.subr.mxu0 0.0
        %1831 = vmatpush2.msra.mxu0 %v1184
        %1832 = vmatprep.subr.mxu0 0.0
        %1833 = vmatpush2.msra.mxu0 %v1183
        %1834 = vmatprep.mubr.f32.mxu0 %v743
        %1835 = vmatmul.mubr.f32.gmra.mxu0 %v741
        %v1836 = vpop.f32.mrf.mxu0
        %v1837 = vadd.f32 %v1732, %v1836
        %v1838 = vpop.f32.mrf.mxu0
        %1839 = vmatprep.mubr.f32.mxu0 %v747
        %1840 = vmatmul.mubr.f32.gmra.mxu0 %v745
        %v1841 = vpop.f32.mrf.mxu0
        %v1842 = vadd.f32 %v1737, %v1841
        %v1843 = vpop.f32.mrf.mxu0
        %1844 = vmatprep.mubr.f32.mxu0 %v753
        %1845 = vmatmul.mubr.f32.gmra.mxu0 %v751
        %v1846 = vpop.f32.mrf.mxu0
        %v1847 = vadd.f32 %v1742, %v1846
        %v1848 = vpop.f32.mrf.mxu0
        %1849 = vmatprep.mubr.f32.mxu0 %v757
        %1850 = vmatmul.mubr.f32.gmra.mxu0 %v755
        %v1851 = vpop.f32.mrf.mxu0
        %v1852 = vadd.f32 %v1747, %v1851
        %v1853 = vpop.f32.mrf.mxu0
        %1854 = vmatprep.mubr.f32.mxu0 %v763
        %1855 = vmatmul.mubr.f32.gmra.mxu0 %v761
        %v1856 = vpop.f32.mrf.mxu0
        %v1857 = vadd.f32 %v1752, %v1856
        %v1858 = vpop.f32.mrf.mxu0
        %1859 = vmatprep.mubr.f32.mxu0 %v767
        %1860 = vmatmul.mubr.f32.gmra.mxu0 %v765
        %v1861 = vpop.f32.mrf.mxu0
        %v1862 = vadd.f32 %v1757, %v1861
        %v1863 = vpop.f32.mrf.mxu0
        %1864 = vmatprep.mubr.f32.mxu0 %v773
        %1865 = vmatmul.mubr.f32.gmra.mxu0 %v771
        %v1866 = vpop.f32.mrf.mxu0
        %v1867 = vadd.f32 %v1762, %v1866
        %v1868 = vpop.f32.mrf.mxu0
        %1869 = vmatprep.mubr.f32.mxu0 %v777
        %1870 = vmatmul.mubr.f32.gmra.mxu0 %v775
        %v1871 = vpop.f32.mrf.mxu0
        %v1872 = vadd.f32 %v1767, %v1871
        %v1873 = vpop.f32.mrf.mxu0
        %1874 = vdwg.mxu0
        %1875 = vmatprep.subr.mxu0 0.0
        %1876 = vmatpush1.msra.mxu0 %v1214
        %1877 = vmatprep.subr.mxu0 0.0
        %1878 = vmatpush1.msra.mxu0 %v1213
        %1879 = vmatprep.subr.mxu0 0.0
        %1880 = vmatpush1.msra.mxu0 %v1212
        %1881 = vmatprep.subr.mxu0 0.0
        %1882 = vmatpush1.msra.mxu0 %v1211
        %1883 = vmatprep.subr.mxu0 0.0
        %1884 = vmatpush1.msra.mxu0 %v1210
        %1885 = vmatprep.subr.mxu0 0.0
        %1886 = vmatpush1.msra.mxu0 %v1209
        %1887 = vmatprep.subr.mxu0 0.0
        %1888 = vmatpush1.msra.mxu0 %v1208
        %1889 = vmatprep.subr.mxu0 0.0
        %1890 = vmatpush1.msra.mxu0 %v1207
        %1891 = vmatprep.subr.mxu0 0.0
        %1892 = vmatpush1.msra.mxu0 %v1206
        %1893 = vmatprep.subr.mxu0 0.0
        %1894 = vmatpush1.msra.mxu0 %v1205
        %1895 = vmatprep.subr.mxu0 0.0
        %1896 = vmatpush1.msra.mxu0 %v1204
        %1897 = vmatprep.subr.mxu0 0.0
        %1898 = vmatpush1.msra.mxu0 %v1203
        %1899 = vmatprep.subr.mxu0 0.0
        %1900 = vmatpush1.msra.mxu0 %v1202
        %1901 = vmatprep.subr.mxu0 0.0
        %1902 = vmatpush1.msra.mxu0 %v1201
        %1903 = vmatprep.subr.mxu0 0.0
        %1904 = vmatpush1.msra.mxu0 %v1200
        %1905 = vmatprep.subr.mxu0 0.0
        %1906 = vmatpush1.msra.mxu0 %v1199
        %1907 = vmatprep.subr.mxu0 0.0
        %1908 = vmatpush2.msra.mxu0 %v1230
        %1909 = vmatprep.subr.mxu0 0.0
        %1910 = vmatpush2.msra.mxu0 %v1229
        %1911 = vmatprep.subr.mxu0 0.0
        %1912 = vmatpush2.msra.mxu0 %v1228
        %1913 = vmatprep.subr.mxu0 0.0
        %1914 = vmatpush2.msra.mxu0 %v1227
        %1915 = vmatprep.subr.mxu0 0.0
        %1916 = vmatpush2.msra.mxu0 %v1226
        %1917 = vmatprep.subr.mxu0 0.0
        %1918 = vmatpush2.msra.mxu0 %v1225
        %1919 = vmatprep.subr.mxu0 0.0
        %1920 = vmatpush2.msra.mxu0 %v1224
        %1921 = vmatprep.subr.mxu0 0.0
        %1922 = vmatpush2.msra.mxu0 %v1223
        %1923 = vmatprep.subr.mxu0 0.0
        %1924 = vmatpush2.msra.mxu0 %v1222
        %1925 = vmatprep.subr.mxu0 0.0
        %1926 = vmatpush2.msra.mxu0 %v1221
        %1927 = vmatprep.subr.mxu0 0.0
        %1928 = vmatpush2.msra.mxu0 %v1220
        %1929 = vmatprep.subr.mxu0 0.0
        %1930 = vmatpush2.msra.mxu0 %v1219
        %1931 = vmatprep.subr.mxu0 0.0
        %1932 = vmatpush2.msra.mxu0 %v1218
        %1933 = vmatprep.subr.mxu0 0.0
        %1934 = vmatpush2.msra.mxu0 %v1217
        %1935 = vmatprep.subr.mxu0 0.0
        %1936 = vmatpush2.msra.mxu0 %v1216
        %1937 = vmatprep.subr.mxu0 0.0
        %1938 = vmatpush2.msra.mxu0 %v1215
        %1939 = vmatprep.mubr.f32.mxu0 %v816
        %1940 = vmatmul.mubr.f32.gmra.mxu0 %v814
        %v1941 = vpop.f32.mrf.mxu0
        %v1942 = vadd.f32 %v1837, %v1941
        %v1943 = vpop.f32.mrf.mxu0
        %1944 = vmatprep.mubr.f32.mxu0 %v820
        %1945 = vmatmul.mubr.f32.gmra.mxu0 %v818
        %v1946 = vpop.f32.mrf.mxu0
        %v1947 = vadd.f32 %v1842, %v1946
        %v1948 = vpop.f32.mrf.mxu0
        %1949 = vmatprep.mubr.f32.mxu0 %v826
        %1950 = vmatmul.mubr.f32.gmra.mxu0 %v824
        %v1951 = vpop.f32.mrf.mxu0
        %v1952 = vadd.f32 %v1847, %v1951
        %v1953 = vpop.f32.mrf.mxu0
        %1954 = vmatprep.mubr.f32.mxu0 %v830
        %1955 = vmatmul.mubr.f32.gmra.mxu0 %v828
        %v1956 = vpop.f32.mrf.mxu0
        %v1957 = vadd.f32 %v1852, %v1956
        %v1958 = vpop.f32.mrf.mxu0
        %1959 = vmatprep.mubr.f32.mxu0 %v836
        %1960 = vmatmul.mubr.f32.gmra.mxu0 %v834
        %v1961 = vpop.f32.mrf.mxu0
        %v1962 = vadd.f32 %v1857, %v1961
        %v1963 = vpop.f32.mrf.mxu0
        %1964 = vmatprep.mubr.f32.mxu0 %v840
        %1965 = vmatmul.mubr.f32.gmra.mxu0 %v838
        %v1966 = vpop.f32.mrf.mxu0
        %v1967 = vadd.f32 %v1862, %v1966
        %v1968 = vpop.f32.mrf.mxu0
        %1969 = vmatprep.mubr.f32.mxu0 %v846
        %1970 = vmatmul.mubr.f32.gmra.mxu0 %v844
        %v1971 = vpop.f32.mrf.mxu0
        %v1972 = vadd.f32 %v1867, %v1971
        %v1973 = vpop.f32.mrf.mxu0
        %1974 = vmatprep.mubr.f32.mxu0 %v850
        %1975 = vmatmul.mubr.f32.gmra.mxu0 %v848
        %v1976 = vpop.f32.mrf.mxu0
        %v1977 = vadd.f32 %v1872, %v1976
        %v1978 = vpop.f32.mrf.mxu0
        %1979 = vdwg.mxu0
        %1980 = vmatprep.subr.mxu0 0.0
        %1981 = vmatpush1.msra.mxu0 %v1246
        %1982 = vmatprep.subr.mxu0 0.0
        %1983 = vmatpush1.msra.mxu0 %v1245
        %1984 = vmatprep.subr.mxu0 0.0
        %1985 = vmatpush1.msra.mxu0 %v1244
        %1986 = vmatprep.subr.mxu0 0.0
        %1987 = vmatpush1.msra.mxu0 %v1243
        %1988 = vmatprep.subr.mxu0 0.0
        %1989 = vmatpush1.msra.mxu0 %v1242
        %1990 = vmatprep.subr.mxu0 0.0
        %1991 = vmatpush1.msra.mxu0 %v1241
        %1992 = vmatprep.subr.mxu0 0.0
        %1993 = vmatpush1.msra.mxu0 %v1240
        %1994 = vmatprep.subr.mxu0 0.0
        %1995 = vmatpush1.msra.mxu0 %v1239
        %1996 = vmatprep.subr.mxu0 0.0
        %1997 = vmatpush1.msra.mxu0 %v1238
        %1998 = vmatprep.subr.mxu0 0.0
        %1999 = vmatpush1.msra.mxu0 %v1237
        %2000 = vmatprep.subr.mxu0 0.0
        %2001 = vmatpush1.msra.mxu0 %v1236
        %2002 = vmatprep.subr.mxu0 0.0
        %2003 = vmatpush1.msra.mxu0 %v1235
        %2004 = vmatprep.subr.mxu0 0.0
        %2005 = vmatpush1.msra.mxu0 %v1234
        %2006 = vmatprep.subr.mxu0 0.0
        %2007 = vmatpush1.msra.mxu0 %v1233
        %2008 = vmatprep.subr.mxu0 0.0
        %2009 = vmatpush1.msra.mxu0 %v1232
        %2010 = vmatprep.subr.mxu0 0.0
        %2011 = vmatpush1.msra.mxu0 %v1231
        %2012 = vmatprep.subr.mxu0 0.0
        %2013 = vmatpush2.msra.mxu0 %v1262
        %2014 = vmatprep.subr.mxu0 0.0
        %2015 = vmatpush2.msra.mxu0 %v1261
        %2016 = vmatprep.subr.mxu0 0.0
        %2017 = vmatpush2.msra.mxu0 %v1260
        %2018 = vmatprep.subr.mxu0 0.0
        %2019 = vmatpush2.msra.mxu0 %v1259
        %2020 = vmatprep.subr.mxu0 0.0
        %2021 = vmatpush2.msra.mxu0 %v1258
        %2022 = vmatprep.subr.mxu0 0.0
        %2023 = vmatpush2.msra.mxu0 %v1257
        %2024 = vmatprep.subr.mxu0 0.0
        %2025 = vmatpush2.msra.mxu0 %v1256
        %2026 = vmatprep.subr.mxu0 0.0
        %2027 = vmatpush2.msra.mxu0 %v1255
        %2028 = vmatprep.subr.mxu0 0.0
        %2029 = vmatpush2.msra.mxu0 %v1254
        %2030 = vmatprep.subr.mxu0 0.0
        %2031 = vmatpush2.msra.mxu0 %v1253
        %2032 = vmatprep.subr.mxu0 0.0
        %2033 = vmatpush2.msra.mxu0 %v1252
        %2034 = vmatprep.subr.mxu0 0.0
        %2035 = vmatpush2.msra.mxu0 %v1251
        %2036 = vmatprep.subr.mxu0 0.0
        %2037 = vmatpush2.msra.mxu0 %v1250
        %2038 = vmatprep.subr.mxu0 0.0
        %2039 = vmatpush2.msra.mxu0 %v1249
        %2040 = vmatprep.subr.mxu0 0.0
        %2041 = vmatpush2.msra.mxu0 %v1248
        %2042 = vmatprep.subr.mxu0 0.0
        %2043 = vmatpush2.msra.mxu0 %v1247
        %2044 = vmatprep.mubr.f32.mxu0 %v889
        %2045 = vmatmul.mubr.f32.gmra.mxu0 %v887
        %v2046 = vpop.f32.mrf.mxu0
        %v2047 = vadd.f32 %v1942, %v2046
        %v2048 = vpop.f32.mrf.mxu0
        %2049 = vmatprep.mubr.f32.mxu0 %v893
        %2050 = vmatmul.mubr.f32.gmra.mxu0 %v891
        %v2051 = vpop.f32.mrf.mxu0
        %v2052 = vadd.f32 %v1947, %v2051
        %v2053 = vpop.f32.mrf.mxu0
        %2054 = vmatprep.mubr.f32.mxu0 %v899
        %2055 = vmatmul.mubr.f32.gmra.mxu0 %v897
        %v2056 = vpop.f32.mrf.mxu0
        %v2057 = vadd.f32 %v1952, %v2056
        %v2058 = vpop.f32.mrf.mxu0
        %2059 = vmatprep.mubr.f32.mxu0 %v903
        %2060 = vmatmul.mubr.f32.gmra.mxu0 %v901
        %v2061 = vpop.f32.mrf.mxu0
        %v2062 = vadd.f32 %v1957, %v2061
        %v2063 = vpop.f32.mrf.mxu0
        %2064 = vmatprep.mubr.f32.mxu0 %v909
        %2065 = vmatmul.mubr.f32.gmra.mxu0 %v907
        %v2066 = vpop.f32.mrf.mxu0
        %v2067 = vadd.f32 %v1962, %v2066
        %v2068 = vpop.f32.mrf.mxu0
        %2069 = vmatprep.mubr.f32.mxu0 %v913
        %2070 = vmatmul.mubr.f32.gmra.mxu0 %v911
        %v2071 = vpop.f32.mrf.mxu0
        %v2072 = vadd.f32 %v1967, %v2071
        %v2073 = vpop.f32.mrf.mxu0
        %2074 = vmatprep.mubr.f32.mxu0 %v919
        %2075 = vmatmul.mubr.f32.gmra.mxu0 %v917
        %v2076 = vpop.f32.mrf.mxu0
        %v2077 = vadd.f32 %v1972, %v2076
        %v2078 = vpop.f32.mrf.mxu0
        %2079 = vmatprep.mubr.f32.mxu0 %v923
        %2080 = vmatmul.mubr.f32.gmra.mxu0 %v921
        %v2081 = vpop.f32.mrf.mxu0
        %v2082 = vadd.f32 %v1977, %v2081
        %v2083 = vpop.f32.mrf.mxu0
        %2084 = vdwg.mxu0
        %2085 = vmatprep.subr.mxu0 0.0
        %2086 = vmatpush1.msra.mxu0 %v1278
        %2087 = vmatprep.subr.mxu0 0.0
        %2088 = vmatpush1.msra.mxu0 %v1277
        %2089 = vmatprep.subr.mxu0 0.0
        %2090 = vmatpush1.msra.mxu0 %v1276
        %2091 = vmatprep.subr.mxu0 0.0
        %2092 = vmatpush1.msra.mxu0 %v1275
        %2093 = vmatprep.subr.mxu0 0.0
        %2094 = vmatpush1.msra.mxu0 %v1274
        %2095 = vmatprep.subr.mxu0 0.0
        %2096 = vmatpush1.msra.mxu0 %v1273
        %2097 = vmatprep.subr.mxu0 0.0
        %2098 = vmatpush1.msra.mxu0 %v1272
        %2099 = vmatprep.subr.mxu0 0.0
        %2100 = vmatpush1.msra.mxu0 %v1271
        %2101 = vmatprep.subr.mxu0 0.0
        %2102 = vmatpush1.msra.mxu0 %v1270
        %2103 = vmatprep.subr.mxu0 0.0
        %2104 = vmatpush1.msra.mxu0 %v1269
        %2105 = vmatprep.subr.mxu0 0.0
        %2106 = vmatpush1.msra.mxu0 %v1268
        %2107 = vmatprep.subr.mxu0 0.0
        %2108 = vmatpush1.msra.mxu0 %v1267
        %2109 = vmatprep.subr.mxu0 0.0
        %2110 = vmatpush1.msra.mxu0 %v1266
        %2111 = vmatprep.subr.mxu0 0.0
        %2112 = vmatpush1.msra.mxu0 %v1265
        %2113 = vmatprep.subr.mxu0 0.0
        %2114 = vmatpush1.msra.mxu0 %v1264
        %2115 = vmatprep.subr.mxu0 0.0
        %2116 = vmatpush1.msra.mxu0 %v1263
        %2117 = vmatprep.subr.mxu0 0.0
        %2118 = vmatpush2.msra.mxu0 %v1294
        %2119 = vmatprep.subr.mxu0 0.0
        %2120 = vmatpush2.msra.mxu0 %v1293
        %2121 = vmatprep.subr.mxu0 0.0
        %2122 = vmatpush2.msra.mxu0 %v1292
        %2123 = vmatprep.subr.mxu0 0.0
        %2124 = vmatpush2.msra.mxu0 %v1291
        %2125 = vmatprep.subr.mxu0 0.0
        %2126 = vmatpush2.msra.mxu0 %v1290
        %2127 = vmatprep.subr.mxu0 0.0
        %2128 = vmatpush2.msra.mxu0 %v1289
        %2129 = vmatprep.subr.mxu0 0.0
        %2130 = vmatpush2.msra.mxu0 %v1288
        %2131 = vmatprep.subr.mxu0 0.0
        %2132 = vmatpush2.msra.mxu0 %v1287
        %2133 = vmatprep.subr.mxu0 0.0
        %2134 = vmatpush2.msra.mxu0 %v1286
        %2135 = vmatprep.subr.mxu0 0.0
        %2136 = vmatpush2.msra.mxu0 %v1285
        %2137 = vmatprep.subr.mxu0 0.0
        %2138 = vmatpush2.msra.mxu0 %v1284
        %2139 = vmatprep.subr.mxu0 0.0
        %2140 = vmatpush2.msra.mxu0 %v1283
        %2141 = vmatprep.subr.mxu0 0.0
        %2142 = vmatpush2.msra.mxu0 %v1282
        %2143 = vmatprep.subr.mxu0 0.0
        %2144 = vmatpush2.msra.mxu0 %v1281
        %2145 = vmatprep.subr.mxu0 0.0
        %2146 = vmatpush2.msra.mxu0 %v1280
        %2147 = vmatprep.subr.mxu0 0.0
        %2148 = vmatpush2.msra.mxu0 %v1279
        %2149 = vmatprep.mubr.f32.mxu0 %v962
        %2150 = vmatmul.mubr.f32.gmra.mxu0 %v960
        %v2151 = vpop.f32.mrf.mxu0
        %v2152 = vadd.f32 %v2047, %v2151
        %v2153 = vpop.f32.mrf.mxu0
        %2154 = vmatprep.mubr.f32.mxu0 %v966
        %2155 = vmatmul.mubr.f32.gmra.mxu0 %v964
        %v2156 = vpop.f32.mrf.mxu0
        %v2157 = vadd.f32 %v2052, %v2156
        %v2158 = vpop.f32.mrf.mxu0
        %2159 = vmatprep.mubr.f32.mxu0 %v972
        %2160 = vmatmul.mubr.f32.gmra.mxu0 %v970
        %v2161 = vpop.f32.mrf.mxu0
        %v2162 = vadd.f32 %v2057, %v2161
        %v2163 = vpop.f32.mrf.mxu0
        %2164 = vmatprep.mubr.f32.mxu0 %v976
        %2165 = vmatmul.mubr.f32.gmra.mxu0 %v974
        %v2166 = vpop.f32.mrf.mxu0
        %v2167 = vadd.f32 %v2062, %v2166
        %v2168 = vpop.f32.mrf.mxu0
        %2169 = vmatprep.mubr.f32.mxu0 %v982
        %2170 = vmatmul.mubr.f32.gmra.mxu0 %v980
        %v2171 = vpop.f32.mrf.mxu0
        %v2172 = vadd.f32 %v2067, %v2171
        %v2173 = vpop.f32.mrf.mxu0
        %2174 = vmatprep.mubr.f32.mxu0 %v986
        %2175 = vmatmul.mubr.f32.gmra.mxu0 %v984
        %v2176 = vpop.f32.mrf.mxu0
        %v2177 = vadd.f32 %v2072, %v2176
        %v2178 = vpop.f32.mrf.mxu0
        %2179 = vmatprep.mubr.f32.mxu0 %v992
        %2180 = vmatmul.mubr.f32.gmra.mxu0 %v990
        %v2181 = vpop.f32.mrf.mxu0
        %v2182 = vadd.f32 %v2077, %v2181
        %v2183 = vpop.f32.mrf.mxu0
        %2184 = vmatprep.mubr.f32.mxu0 %v996
        %2185 = vmatmul.mubr.f32.gmra.mxu0 %v994
        %v2186 = vpop.f32.mrf.mxu0
        %v2187 = vadd.f32 %v2082, %v2186
        %v2188 = vpop.f32.mrf.mxu0
        %2189 = vdwg.mxu0
        %2190 = vmatprep.subr.mxu0 0.0
        %2191 = vmatpush1.msra.mxu0 %v1310
        %2192 = vmatprep.subr.mxu0 0.0
        %2193 = vmatpush1.msra.mxu0 %v1309
        %2194 = vmatprep.subr.mxu0 0.0
        %2195 = vmatpush1.msra.mxu0 %v1308
        %2196 = vmatprep.subr.mxu0 0.0
        %2197 = vmatpush1.msra.mxu0 %v1307
        %2198 = vmatprep.subr.mxu0 0.0
        %2199 = vmatpush1.msra.mxu0 %v1306
        %2200 = vmatprep.subr.mxu0 0.0
        %2201 = vmatpush1.msra.mxu0 %v1305
        %2202 = vmatprep.subr.mxu0 0.0
        %2203 = vmatpush1.msra.mxu0 %v1304
        %2204 = vmatprep.subr.mxu0 0.0
        %2205 = vmatpush1.msra.mxu0 %v1303
        %2206 = vmatprep.subr.mxu0 0.0
        %2207 = vmatpush1.msra.mxu0 %v1302
        %2208 = vmatprep.subr.mxu0 0.0
        %2209 = vmatpush1.msra.mxu0 %v1301
        %2210 = vmatprep.subr.mxu0 0.0
        %2211 = vmatpush1.msra.mxu0 %v1300
        %2212 = vmatprep.subr.mxu0 0.0
        %2213 = vmatpush1.msra.mxu0 %v1299
        %2214 = vmatprep.subr.mxu0 0.0
        %2215 = vmatpush1.msra.mxu0 %v1298
        %2216 = vmatprep.subr.mxu0 0.0
        %2217 = vmatpush1.msra.mxu0 %v1297
        %2218 = vmatprep.subr.mxu0 0.0
        %2219 = vmatpush1.msra.mxu0 %v1296
        %2220 = vmatprep.subr.mxu0 0.0
        %2221 = vmatpush1.msra.mxu0 %v1295
        %2222 = vmatprep.subr.mxu0 0.0
        %2223 = vmatpush2.msra.mxu0 %v1326
        %2224 = vmatprep.subr.mxu0 0.0
        %2225 = vmatpush2.msra.mxu0 %v1325
        %2226 = vmatprep.subr.mxu0 0.0
        %2227 = vmatpush2.msra.mxu0 %v1324
        %2228 = vmatprep.subr.mxu0 0.0
        %2229 = vmatpush2.msra.mxu0 %v1323
        %2230 = vmatprep.subr.mxu0 0.0
        %2231 = vmatpush2.msra.mxu0 %v1322
        %2232 = vmatprep.subr.mxu0 0.0
        %2233 = vmatpush2.msra.mxu0 %v1321
        %2234 = vmatprep.subr.mxu0 0.0
        %2235 = vmatpush2.msra.mxu0 %v1320
        %2236 = vmatprep.subr.mxu0 0.0
        %2237 = vmatpush2.msra.mxu0 %v1319
        %2238 = vmatprep.subr.mxu0 0.0
        %2239 = vmatpush2.msra.mxu0 %v1318
        %2240 = vmatprep.subr.mxu0 0.0
        %2241 = vmatpush2.msra.mxu0 %v1317
        %2242 = vmatprep.subr.mxu0 0.0
        %2243 = vmatpush2.msra.mxu0 %v1316
        %2244 = vmatprep.subr.mxu0 0.0
        %2245 = vmatpush2.msra.mxu0 %v1315
        %2246 = vmatprep.subr.mxu0 0.0
        %2247 = vmatpush2.msra.mxu0 %v1314
        %2248 = vmatprep.subr.mxu0 0.0
        %2249 = vmatpush2.msra.mxu0 %v1313
        %2250 = vmatprep.subr.mxu0 0.0
        %2251 = vmatpush2.msra.mxu0 %v1312
        %2252 = vmatprep.subr.mxu0 0.0
        %2253 = vmatpush2.msra.mxu0 %v1311
        %2254 = vmatprep.mubr.f32.mxu0 %v1035
        %2255 = vmatmul.mubr.f32.gmra.mxu0 %v1033
        %v2256 = vpop.f32.mrf.mxu0
        %v2257 = vadd.f32 %v2152, %v2256
        %v2258 = vpop.f32.mrf.mxu0
        %2259 = vmatprep.mubr.f32.mxu0 %v1039
        %2260 = vmatmul.mubr.f32.gmra.mxu0 %v1037
        %v2261 = vpop.f32.mrf.mxu0
        %v2262 = vadd.f32 %v2157, %v2261
        %v2263 = vpop.f32.mrf.mxu0
        %2264 = vmatprep.mubr.f32.mxu0 %v1045
        %2265 = vmatmul.mubr.f32.gmra.mxu0 %v1043
        %v2266 = vpop.f32.mrf.mxu0
        %v2267 = vadd.f32 %v2162, %v2266
        %v2268 = vpop.f32.mrf.mxu0
        %2269 = vmatprep.mubr.f32.mxu0 %v1049
        %2270 = vmatmul.mubr.f32.gmra.mxu0 %v1047
        %v2271 = vpop.f32.mrf.mxu0
        %v2272 = vadd.f32 %v2167, %v2271
        %v2273 = vpop.f32.mrf.mxu0
        %2274 = vmatprep.mubr.f32.mxu0 %v1055
        %2275 = vmatmul.mubr.f32.gmra.mxu0 %v1053
        %v2276 = vpop.f32.mrf.mxu0
        %v2277 = vadd.f32 %v2172, %v2276
        %v2278 = vpop.f32.mrf.mxu0
        %2279 = vmatprep.mubr.f32.mxu0 %v1059
        %2280 = vmatmul.mubr.f32.gmra.mxu0 %v1057
        %v2281 = vpop.f32.mrf.mxu0
        %v2282 = vadd.f32 %v2177, %v2281
        %v2283 = vpop.f32.mrf.mxu0
        %2284 = vmatprep.mubr.f32.mxu0 %v1065
        %2285 = vmatmul.mubr.f32.gmra.mxu0 %v1063
        %v2286 = vpop.f32.mrf.mxu0
        %v2287 = vadd.f32 %v2182, %v2286
        %v2288 = vpop.f32.mrf.mxu0
        %2289 = vmatprep.mubr.f32.mxu0 %v1069
        %2290 = vmatmul.mubr.f32.gmra.mxu0 %v1067
        %v2291 = vpop.f32.mrf.mxu0
        %v2292 = vadd.f32 %v2187, %v2291
        %v2293 = vpop.f32.mrf.mxu0
        %2294 = vdwg.mxu0
        %v2295 = vmul.f32 %v2257, 0.03125
        %v2296 = vmul.f32 %v2262, 0.03125
        %v2297 = vmul.f32 %v2267, 0.03125
        %v2298 = vmul.f32 %v2272, 0.03125
        %v2299 = vmul.f32 %v2277, 0.03125
        %v2300 = vmul.f32 %v2282, 0.03125
        %v2301 = vmul.f32 %v2287, 0.03125
        %v2302 = vmul.f32 %v2292, 0.03125
        %vm2303 = vcmask 523264
        %v2305 = vsel %vm2303, %v2295, 0
        %v2308 = vsel %vm2303, %v2296, 0
        %v2311 = vsel %vm2303, %v2297, 0
        %v2314 = vsel %vm2303, %v2298, 0
        %v2317 = vsel %vm2303, %v2299, 0
        %v2320 = vsel %vm2303, %v2300, 0
        %v2323 = vsel %vm2303, %v2301, 0
        %v2326 = vsel %vm2303, %v2302, 0
        %2328 = vmatprep.subr.mxu0 0.0
        %2329 = vmatpush1.msra.mxu0 0.0
        %2330 = vmatprep.subr.mxu0 0.0
        %2331 = vmatpush1.msra.mxu0 0.0
        %2332 = vmatprep.subr.mxu0 0.0
        %2333 = vmatpush1.msra.mxu0 0.0
        %2334 = vmatprep.subr.mxu0 0.0
        %2335 = vmatpush1.msra.mxu0 0.0
        %2336 = vmatprep.subr.mxu0 0.0
        %2337 = vmatpush1.msra.mxu0 0.0
        %2338 = vmatprep.subr.mxu0 0.0
        %2339 = vmatpush1.msra.mxu0 0.0
        %2340 = vmatprep.subr.mxu0 0.0
        %2341 = vmatpush1.msra.mxu0 0.0
        %2342 = vmatprep.subr.mxu0 0.0
        %2343 = vmatpush1.msra.mxu0 0.0
        %2344 = vmatprep.subr.mxu0 %v1440
        %2345 = vmatpush1.msra.mxu0 %v1439
        %2346 = vmatprep.subr.mxu0 %v1424
        %2347 = vmatpush1.msra.mxu0 %v1423
        %2348 = vmatprep.subr.mxu0 %v1408
        %2349 = vmatpush1.msra.mxu0 %v1407
        %2350 = vmatprep.subr.mxu0 %v1392
        %2351 = vmatpush1.msra.mxu0 %v1391
        %2352 = vmatprep.subr.mxu0 %v1376
        %2353 = vmatpush1.msra.mxu0 %v1375
        %2354 = vmatprep.subr.mxu0 %v1360
        %2355 = vmatpush1.msra.mxu0 %v1359
        %2356 = vmatprep.subr.mxu0 %v1344
        %2357 = vmatpush1.msra.mxu0 %v1343
        %2358 = vmatprep.subr.mxu0 %v1328
        %2359 = vmatpush1.msra.mxu0 %v1327
        %2360 = vmatprep.subr.mxu0 0.0
        %2361 = vmatpush2.msra.mxu0 0.0
        %2362 = vmatprep.subr.mxu0 0.0
        %2363 = vmatpush2.msra.mxu0 0.0
        %2364 = vmatprep.subr.mxu0 0.0
        %2365 = vmatpush2.msra.mxu0 0.0
        %2366 = vmatprep.subr.mxu0 0.0
        %2367 = vmatpush2.msra.mxu0 0.0
        %2368 = vmatprep.subr.mxu0 0.0
        %2369 = vmatpush2.msra.mxu0 0.0
        %2370 = vmatprep.subr.mxu0 0.0
        %2371 = vmatpush2.msra.mxu0 0.0
        %2372 = vmatprep.subr.mxu0 0.0
        %2373 = vmatpush2.msra.mxu0 0.0
        %2374 = vmatprep.subr.mxu0 0.0
        %2375 = vmatpush2.msra.mxu0 0.0
        %2376 = vmatprep.subr.mxu0 0.0
        %2377 = vmatpush2.msra.mxu0 0.0
        %2378 = vmatprep.subr.mxu0 0.0
        %2379 = vmatpush2.msra.mxu0 0.0
        %2380 = vmatprep.subr.mxu0 0.0
        %2381 = vmatpush2.msra.mxu0 0.0
        %2382 = vmatprep.subr.mxu0 0.0
        %2383 = vmatpush2.msra.mxu0 0.0
        %2384 = vmatprep.subr.mxu0 0.0
        %2385 = vmatpush2.msra.mxu0 0.0
        %2386 = vmatprep.subr.mxu0 0.0
        %2387 = vmatpush2.msra.mxu0 0.0
        %2388 = vmatprep.subr.mxu0 0.0
        %2389 = vmatpush2.msra.mxu0 0.0
        %2390 = vmatprep.subr.mxu0 0.0
        %2391 = vmatpush2.msra.mxu0 0.0
        %2392 = vmatprep.mubr.f32.mxu0 0.0
        %2393 = vmatmul.mubr.f32.gmra.mxu0 %v2305
        %v2394 = vpop.f32.mrf.mxu0
        %v2395 = vadd.f32 0.0, %v2394
        %v2396 = vpop.f32.mrf.mxu0
        %v2397 = vadd.f32 0.0, %v2396
        %2398 = vmatprep.mubr.f32.mxu0 0.0
        %2399 = vmatmul.mubr.f32.gmra.mxu0 %v2308
        %v2400 = vpop.f32.mrf.mxu0
        %v2401 = vadd.f32 0.0, %v2400
        %v2402 = vpop.f32.mrf.mxu0
        %v2403 = vadd.f32 0.0, %v2402
        %2404 = vmatprep.mubr.f32.mxu0 0.0
        %2405 = vmatmul.mubr.f32.gmra.mxu0 %v2311
        %v2406 = vpop.f32.mrf.mxu0
        %v2407 = vadd.f32 0.0, %v2406
        %v2408 = vpop.f32.mrf.mxu0
        %v2409 = vadd.f32 0.0, %v2408
        %2410 = vmatprep.mubr.f32.mxu0 0.0
        %2411 = vmatmul.mubr.f32.gmra.mxu0 %v2314
        %v2412 = vpop.f32.mrf.mxu0
        %v2413 = vadd.f32 0.0, %v2412
        %v2414 = vpop.f32.mrf.mxu0
        %v2415 = vadd.f32 0.0, %v2414
        %2416 = vmatprep.mubr.f32.mxu0 0.0
        %2417 = vmatmul.mubr.f32.gmra.mxu0 %v2317
        %v2418 = vpop.f32.mrf.mxu0
        %v2419 = vadd.f32 0.0, %v2418
        %v2420 = vpop.f32.mrf.mxu0
        %v2421 = vadd.f32 0.0, %v2420
        %2422 = vmatprep.mubr.f32.mxu0 0.0
        %2423 = vmatmul.mubr.f32.gmra.mxu0 %v2320
        %v2424 = vpop.f32.mrf.mxu0
        %v2425 = vadd.f32 0.0, %v2424
        %v2426 = vpop.f32.mrf.mxu0
        %v2427 = vadd.f32 0.0, %v2426
        %2428 = vmatprep.mubr.f32.mxu0 0.0
        %2429 = vmatmul.mubr.f32.gmra.mxu0 %v2323
        %v2430 = vpop.f32.mrf.mxu0
        %v2431 = vadd.f32 0.0, %v2430
        %v2432 = vpop.f32.mrf.mxu0
        %v2433 = vadd.f32 0.0, %v2432
        %2434 = vmatprep.mubr.f32.mxu0 0.0
        %2435 = vmatmul.mubr.f32.gmra.mxu0 %v2326
        %v2436 = vpop.f32.mrf.mxu0
        %v2437 = vadd.f32 0.0, %v2436
        %v2438 = vpop.f32.mrf.mxu0
        %v2439 = vadd.f32 0.0, %v2438
        %2440 = vdwg.mxu0
        %2441 = vmatprep.subr.mxu0 0.0
        %2442 = vmatpush1.msra.mxu0 0.0
        %2443 = vmatprep.subr.mxu0 0.0
        %2444 = vmatpush1.msra.mxu0 0.0
        %2445 = vmatprep.subr.mxu0 0.0
        %2446 = vmatpush1.msra.mxu0 0.0
        %2447 = vmatprep.subr.mxu0 0.0
        %2448 = vmatpush1.msra.mxu0 0.0
        %2449 = vmatprep.subr.mxu0 0.0
        %2450 = vmatpush1.msra.mxu0 0.0
        %2451 = vmatprep.subr.mxu0 0.0
        %2452 = vmatpush1.msra.mxu0 0.0
        %2453 = vmatprep.subr.mxu0 0.0
        %2454 = vmatpush1.msra.mxu0 0.0
        %2455 = vmatprep.subr.mxu0 0.0
        %2456 = vmatpush1.msra.mxu0 0.0
        %2457 = vmatprep.subr.mxu0 %v1442
        %2458 = vmatpush1.msra.mxu0 %v1441
        %2459 = vmatprep.subr.mxu0 %v1426
        %2460 = vmatpush1.msra.mxu0 %v1425
        %2461 = vmatprep.subr.mxu0 %v1410
        %2462 = vmatpush1.msra.mxu0 %v1409
        %2463 = vmatprep.subr.mxu0 %v1394
        %2464 = vmatpush1.msra.mxu0 %v1393
        %2465 = vmatprep.subr.mxu0 %v1378
        %2466 = vmatpush1.msra.mxu0 %v1377
        %2467 = vmatprep.subr.mxu0 %v1362
        %2468 = vmatpush1.msra.mxu0 %v1361
        %2469 = vmatprep.subr.mxu0 %v1346
        %2470 = vmatpush1.msra.mxu0 %v1345
        %2471 = vmatprep.subr.mxu0 %v1330
        %2472 = vmatpush1.msra.mxu0 %v1329
        %2473 = vmatprep.subr.mxu0 0.0
        %2474 = vmatpush2.msra.mxu0 0.0
        %2475 = vmatprep.subr.mxu0 0.0
        %2476 = vmatpush2.msra.mxu0 0.0
        %2477 = vmatprep.subr.mxu0 0.0
        %2478 = vmatpush2.msra.mxu0 0.0
        %2479 = vmatprep.subr.mxu0 0.0
        %2480 = vmatpush2.msra.mxu0 0.0
        %2481 = vmatprep.subr.mxu0 0.0
        %2482 = vmatpush2.msra.mxu0 0.0
        %2483 = vmatprep.subr.mxu0 0.0
        %2484 = vmatpush2.msra.mxu0 0.0
        %2485 = vmatprep.subr.mxu0 0.0
        %2486 = vmatpush2.msra.mxu0 0.0
        %2487 = vmatprep.subr.mxu0 0.0
        %2488 = vmatpush2.msra.mxu0 0.0
        %2489 = vmatprep.subr.mxu0 0.0
        %2490 = vmatpush2.msra.mxu0 0.0
        %2491 = vmatprep.subr.mxu0 0.0
        %2492 = vmatpush2.msra.mxu0 0.0
        %2493 = vmatprep.subr.mxu0 0.0
        %2494 = vmatpush2.msra.mxu0 0.0
        %2495 = vmatprep.subr.mxu0 0.0
        %2496 = vmatpush2.msra.mxu0 0.0
        %2497 = vmatprep.subr.mxu0 0.0
        %2498 = vmatpush2.msra.mxu0 0.0
        %2499 = vmatprep.subr.mxu0 0.0
        %2500 = vmatpush2.msra.mxu0 0.0
        %2501 = vmatprep.subr.mxu0 0.0
        %2502 = vmatpush2.msra.mxu0 0.0
        %2503 = vmatprep.subr.mxu0 0.0
        %2504 = vmatpush2.msra.mxu0 0.0
        %2505 = vmatprep.mubr.f32.mxu0 0.0
        %2506 = vmatmul.mubr.f32.gmra.mxu0 %v2305
        %v2507 = vpop.f32.mrf.mxu0
        %v2508 = vadd.f32 0.0, %v2507
        %v2509 = vpop.f32.mrf.mxu0
        %v2510 = vadd.f32 0.0, %v2509
        %2511 = vmatprep.mubr.f32.mxu0 0.0
        %2512 = vmatmul.mubr.f32.gmra.mxu0 %v2308
        %v2513 = vpop.f32.mrf.mxu0
        %v2514 = vadd.f32 0.0, %v2513
        %v2515 = vpop.f32.mrf.mxu0
        %v2516 = vadd.f32 0.0, %v2515
        %2517 = vmatprep.mubr.f32.mxu0 0.0
        %2518 = vmatmul.mubr.f32.gmra.mxu0 %v2311
        %v2519 = vpop.f32.mrf.mxu0
        %v2520 = vadd.f32 0.0, %v2519
        %v2521 = vpop.f32.mrf.mxu0
        %v2522 = vadd.f32 0.0, %v2521
        %2523 = vmatprep.mubr.f32.mxu0 0.0
        %2524 = vmatmul.mubr.f32.gmra.mxu0 %v2314
        %v2525 = vpop.f32.mrf.mxu0
        %v2526 = vadd.f32 0.0, %v2525
        %v2527 = vpop.f32.mrf.mxu0
        %v2528 = vadd.f32 0.0, %v2527
        %2529 = vmatprep.mubr.f32.mxu0 0.0
        %2530 = vmatmul.mubr.f32.gmra.mxu0 %v2317
        %v2531 = vpop.f32.mrf.mxu0
        %v2532 = vadd.f32 0.0, %v2531
        %v2533 = vpop.f32.mrf.mxu0
        %v2534 = vadd.f32 0.0, %v2533
        %2535 = vmatprep.mubr.f32.mxu0 0.0
        %2536 = vmatmul.mubr.f32.gmra.mxu0 %v2320
        %v2537 = vpop.f32.mrf.mxu0
        %v2538 = vadd.f32 0.0, %v2537
        %v2539 = vpop.f32.mrf.mxu0
        %v2540 = vadd.f32 0.0, %v2539
        %2541 = vmatprep.mubr.f32.mxu0 0.0
        %2542 = vmatmul.mubr.f32.gmra.mxu0 %v2323
        %v2543 = vpop.f32.mrf.mxu0
        %v2544 = vadd.f32 0.0, %v2543
        %v2545 = vpop.f32.mrf.mxu0
        %v2546 = vadd.f32 0.0, %v2545
        %2547 = vmatprep.mubr.f32.mxu0 0.0
        %2548 = vmatmul.mubr.f32.gmra.mxu0 %v2326
        %v2549 = vpop.f32.mrf.mxu0
        %v2550 = vadd.f32 0.0, %v2549
        %v2551 = vpop.f32.mrf.mxu0
        %v2552 = vadd.f32 0.0, %v2551
        %2553 = vdwg.mxu0
        %2554 = vmatprep.subr.mxu0 0.0
        %2555 = vmatpush1.msra.mxu0 0.0
        %2556 = vmatprep.subr.mxu0 0.0
        %2557 = vmatpush1.msra.mxu0 0.0
        %2558 = vmatprep.subr.mxu0 0.0
        %2559 = vmatpush1.msra.mxu0 0.0
        %2560 = vmatprep.subr.mxu0 0.0
        %2561 = vmatpush1.msra.mxu0 0.0
        %2562 = vmatprep.subr.mxu0 0.0
        %2563 = vmatpush1.msra.mxu0 0.0
        %2564 = vmatprep.subr.mxu0 0.0
        %2565 = vmatpush1.msra.mxu0 0.0
        %2566 = vmatprep.subr.mxu0 0.0
        %2567 = vmatpush1.msra.mxu0 0.0
        %2568 = vmatprep.subr.mxu0 0.0
        %2569 = vmatpush1.msra.mxu0 0.0
        %2570 = vmatprep.subr.mxu0 %v1444
        %2571 = vmatpush1.msra.mxu0 %v1443
        %2572 = vmatprep.subr.mxu0 %v1428
        %2573 = vmatpush1.msra.mxu0 %v1427
        %2574 = vmatprep.subr.mxu0 %v1412
        %2575 = vmatpush1.msra.mxu0 %v1411
        %2576 = vmatprep.subr.mxu0 %v1396
        %2577 = vmatpush1.msra.mxu0 %v1395
        %2578 = vmatprep.subr.mxu0 %v1380
        %2579 = vmatpush1.msra.mxu0 %v1379
        %2580 = vmatprep.subr.mxu0 %v1364
        %2581 = vmatpush1.msra.mxu0 %v1363
        %2582 = vmatprep.subr.mxu0 %v1348
        %2583 = vmatpush1.msra.mxu0 %v1347
        %2584 = vmatprep.subr.mxu0 %v1332
        %2585 = vmatpush1.msra.mxu0 %v1331
        %2586 = vmatprep.subr.mxu0 0.0
        %2587 = vmatpush2.msra.mxu0 0.0
        %2588 = vmatprep.subr.mxu0 0.0
        %2589 = vmatpush2.msra.mxu0 0.0
        %2590 = vmatprep.subr.mxu0 0.0
        %2591 = vmatpush2.msra.mxu0 0.0
        %2592 = vmatprep.subr.mxu0 0.0
        %2593 = vmatpush2.msra.mxu0 0.0
        %2594 = vmatprep.subr.mxu0 0.0
        %2595 = vmatpush2.msra.mxu0 0.0
        %2596 = vmatprep.subr.mxu0 0.0
        %2597 = vmatpush2.msra.mxu0 0.0
        %2598 = vmatprep.subr.mxu0 0.0
        %2599 = vmatpush2.msra.mxu0 0.0
        %2600 = vmatprep.subr.mxu0 0.0
        %2601 = vmatpush2.msra.mxu0 0.0
        %2602 = vmatprep.subr.mxu0 0.0
        %2603 = vmatpush2.msra.mxu0 0.0
        %2604 = vmatprep.subr.mxu0 0.0
        %2605 = vmatpush2.msra.mxu0 0.0
        %2606 = vmatprep.subr.mxu0 0.0
        %2607 = vmatpush2.msra.mxu0 0.0
        %2608 = vmatprep.subr.mxu0 0.0
        %2609 = vmatpush2.msra.mxu0 0.0
        %2610 = vmatprep.subr.mxu0 0.0
        %2611 = vmatpush2.msra.mxu0 0.0
        %2612 = vmatprep.subr.mxu0 0.0
        %2613 = vmatpush2.msra.mxu0 0.0
        %2614 = vmatprep.subr.mxu0 0.0
        %2615 = vmatpush2.msra.mxu0 0.0
        %2616 = vmatprep.subr.mxu0 0.0
        %2617 = vmatpush2.msra.mxu0 0.0
        %2618 = vmatprep.mubr.f32.mxu0 0.0
        %2619 = vmatmul.mubr.f32.gmra.mxu0 %v2305
        %v2620 = vpop.f32.mrf.mxu0
        %v2621 = vadd.f32 0.0, %v2620
        %v2622 = vpop.f32.mrf.mxu0
        %v2623 = vadd.f32 0.0, %v2622
        %2624 = vmatprep.mubr.f32.mxu0 0.0
        %2625 = vmatmul.mubr.f32.gmra.mxu0 %v2308
        %v2626 = vpop.f32.mrf.mxu0
        %v2627 = vadd.f32 0.0, %v2626
        %v2628 = vpop.f32.mrf.mxu0
        %v2629 = vadd.f32 0.0, %v2628
        %2630 = vmatprep.mubr.f32.mxu0 0.0
        %2631 = vmatmul.mubr.f32.gmra.mxu0 %v2311
        %v2632 = vpop.f32.mrf.mxu0
        %v2633 = vadd.f32 0.0, %v2632
        %v2634 = vpop.f32.mrf.mxu0
        %v2635 = vadd.f32 0.0, %v2634
        %2636 = vmatprep.mubr.f32.mxu0 0.0
        %2637 = vmatmul.mubr.f32.gmra.mxu0 %v2314
        %v2638 = vpop.f32.mrf.mxu0
        %v2639 = vadd.f32 0.0, %v2638
        %v2640 = vpop.f32.mrf.mxu0
        %v2641 = vadd.f32 0.0, %v2640
        %2642 = vmatprep.mubr.f32.mxu0 0.0
        %2643 = vmatmul.mubr.f32.gmra.mxu0 %v2317
        %v2644 = vpop.f32.mrf.mxu0
        %v2645 = vadd.f32 0.0, %v2644
        %v2646 = vpop.f32.mrf.mxu0
        %v2647 = vadd.f32 0.0, %v2646
        %2648 = vmatprep.mubr.f32.mxu0 0.0
        %2649 = vmatmul.mubr.f32.gmra.mxu0 %v2320
        %v2650 = vpop.f32.mrf.mxu0
        %v2651 = vadd.f32 0.0, %v2650
        %v2652 = vpop.f32.mrf.mxu0
        %v2653 = vadd.f32 0.0, %v2652
        %2654 = vmatprep.mubr.f32.mxu0 0.0
        %2655 = vmatmul.mubr.f32.gmra.mxu0 %v2323
        %v2656 = vpop.f32.mrf.mxu0
        %v2657 = vadd.f32 0.0, %v2656
        %v2658 = vpop.f32.mrf.mxu0
        %v2659 = vadd.f32 0.0, %v2658
        %2660 = vmatprep.mubr.f32.mxu0 0.0
        %2661 = vmatmul.mubr.f32.gmra.mxu0 %v2326
        %v2662 = vpop.f32.mrf.mxu0
        %v2663 = vadd.f32 0.0, %v2662
        %v2664 = vpop.f32.mrf.mxu0
        %v2665 = vadd.f32 0.0, %v2664
        %2666 = vdwg.mxu0
        %2667 = vmatprep.subr.mxu0 0.0
        %2668 = vmatpush1.msra.mxu0 0.0
        %2669 = vmatprep.subr.mxu0 0.0
        %2670 = vmatpush1.msra.mxu0 0.0
        %2671 = vmatprep.subr.mxu0 0.0
        %2672 = vmatpush1.msra.mxu0 0.0
        %2673 = vmatprep.subr.mxu0 0.0
        %2674 = vmatpush1.msra.mxu0 0.0
        %2675 = vmatprep.subr.mxu0 0.0
        %2676 = vmatpush1.msra.mxu0 0.0
        %2677 = vmatprep.subr.mxu0 0.0
        %2678 = vmatpush1.msra.mxu0 0.0
        %2679 = vmatprep.subr.mxu0 0.0
        %2680 = vmatpush1.msra.mxu0 0.0
        %2681 = vmatprep.subr.mxu0 0.0
        %2682 = vmatpush1.msra.mxu0 0.0
        %2683 = vmatprep.subr.mxu0 %v1446
        %2684 = vmatpush1.msra.mxu0 %v1445
        %2685 = vmatprep.subr.mxu0 %v1430
        %2686 = vmatpush1.msra.mxu0 %v1429
        %2687 = vmatprep.subr.mxu0 %v1414
        %2688 = vmatpush1.msra.mxu0 %v1413
        %2689 = vmatprep.subr.mxu0 %v1398
        %2690 = vmatpush1.msra.mxu0 %v1397
        %2691 = vmatprep.subr.mxu0 %v1382
        %2692 = vmatpush1.msra.mxu0 %v1381
        %2693 = vmatprep.subr.mxu0 %v1366
        %2694 = vmatpush1.msra.mxu0 %v1365
        %2695 = vmatprep.subr.mxu0 %v1350
        %2696 = vmatpush1.msra.mxu0 %v1349
        %2697 = vmatprep.subr.mxu0 %v1334
        %2698 = vmatpush1.msra.mxu0 %v1333
        %2699 = vmatprep.subr.mxu0 0.0
        %2700 = vmatpush2.msra.mxu0 0.0
        %2701 = vmatprep.subr.mxu0 0.0
        %2702 = vmatpush2.msra.mxu0 0.0
        %2703 = vmatprep.subr.mxu0 0.0
        %2704 = vmatpush2.msra.mxu0 0.0
        %2705 = vmatprep.subr.mxu0 0.0
        %2706 = vmatpush2.msra.mxu0 0.0
        %2707 = vmatprep.subr.mxu0 0.0
        %2708 = vmatpush2.msra.mxu0 0.0
        %2709 = vmatprep.subr.mxu0 0.0
        %2710 = vmatpush2.msra.mxu0 0.0
        %2711 = vmatprep.subr.mxu0 0.0
        %2712 = vmatpush2.msra.mxu0 0.0
        %2713 = vmatprep.subr.mxu0 0.0
        %2714 = vmatpush2.msra.mxu0 0.0
        %2715 = vmatprep.subr.mxu0 0.0
        %2716 = vmatpush2.msra.mxu0 0.0
        %2717 = vmatprep.subr.mxu0 0.0
        %2718 = vmatpush2.msra.mxu0 0.0
        %2719 = vmatprep.subr.mxu0 0.0
        %2720 = vmatpush2.msra.mxu0 0.0
        %2721 = vmatprep.subr.mxu0 0.0
        %2722 = vmatpush2.msra.mxu0 0.0
        %2723 = vmatprep.subr.mxu0 0.0
        %2724 = vmatpush2.msra.mxu0 0.0
        %2725 = vmatprep.subr.mxu0 0.0
        %2726 = vmatpush2.msra.mxu0 0.0
        %2727 = vmatprep.subr.mxu0 0.0
        %2728 = vmatpush2.msra.mxu0 0.0
        %2729 = vmatprep.subr.mxu0 0.0
        %2730 = vmatpush2.msra.mxu0 0.0
        %2731 = vmatprep.mubr.f32.mxu0 0.0
        %2732 = vmatmul.mubr.f32.gmra.mxu0 %v2305
        %v2733 = vpop.f32.mrf.mxu0
        %v2734 = vadd.f32 0.0, %v2733
        %v2735 = vpop.f32.mrf.mxu0
        %v2736 = vadd.f32 0.0, %v2735
        %2737 = vmatprep.mubr.f32.mxu0 0.0
        %2738 = vmatmul.mubr.f32.gmra.mxu0 %v2308
        %v2739 = vpop.f32.mrf.mxu0
        %v2740 = vadd.f32 0.0, %v2739
        %v2741 = vpop.f32.mrf.mxu0
        %v2742 = vadd.f32 0.0, %v2741
        %2743 = vmatprep.mubr.f32.mxu0 0.0
        %2744 = vmatmul.mubr.f32.gmra.mxu0 %v2311
        %v2745 = vpop.f32.mrf.mxu0
        %v2746 = vadd.f32 0.0, %v2745
        %v2747 = vpop.f32.mrf.mxu0
        %v2748 = vadd.f32 0.0, %v2747
        %2749 = vmatprep.mubr.f32.mxu0 0.0
        %2750 = vmatmul.mubr.f32.gmra.mxu0 %v2314
        %v2751 = vpop.f32.mrf.mxu0
        %v2752 = vadd.f32 0.0, %v2751
        %v2753 = vpop.f32.mrf.mxu0
        %v2754 = vadd.f32 0.0, %v2753
        %2755 = vmatprep.mubr.f32.mxu0 0.0
        %2756 = vmatmul.mubr.f32.gmra.mxu0 %v2317
        %v2757 = vpop.f32.mrf.mxu0
        %v2758 = vadd.f32 0.0, %v2757
        %v2759 = vpop.f32.mrf.mxu0
        %v2760 = vadd.f32 0.0, %v2759
        %2761 = vmatprep.mubr.f32.mxu0 0.0
        %2762 = vmatmul.mubr.f32.gmra.mxu0 %v2320
        %v2763 = vpop.f32.mrf.mxu0
        %v2764 = vadd.f32 0.0, %v2763
        %v2765 = vpop.f32.mrf.mxu0
        %v2766 = vadd.f32 0.0, %v2765
        %2767 = vmatprep.mubr.f32.mxu0 0.0
        %2768 = vmatmul.mubr.f32.gmra.mxu0 %v2323
        %v2769 = vpop.f32.mrf.mxu0
        %v2770 = vadd.f32 0.0, %v2769
        %v2771 = vpop.f32.mrf.mxu0
        %v2772 = vadd.f32 0.0, %v2771
        %2773 = vmatprep.mubr.f32.mxu0 0.0
        %2774 = vmatmul.mubr.f32.gmra.mxu0 %v2326
        %v2775 = vpop.f32.mrf.mxu0
        %v2776 = vadd.f32 0.0, %v2775
        %v2777 = vpop.f32.mrf.mxu0
        %v2778 = vadd.f32 0.0, %v2777
        %2779 = vdwg.mxu0
        %2780 = vmatprep.subr.mxu0 0.0
        %2781 = vmatpush1.msra.mxu0 0.0
        %2782 = vmatprep.subr.mxu0 0.0
        %2783 = vmatpush1.msra.mxu0 0.0
        %2784 = vmatprep.subr.mxu0 0.0
        %2785 = vmatpush1.msra.mxu0 0.0
        %2786 = vmatprep.subr.mxu0 0.0
        %2787 = vmatpush1.msra.mxu0 0.0
        %2788 = vmatprep.subr.mxu0 0.0
        %2789 = vmatpush1.msra.mxu0 0.0
        %2790 = vmatprep.subr.mxu0 0.0
        %2791 = vmatpush1.msra.mxu0 0.0
        %2792 = vmatprep.subr.mxu0 0.0
        %2793 = vmatpush1.msra.mxu0 0.0
        %2794 = vmatprep.subr.mxu0 0.0
        %2795 = vmatpush1.msra.mxu0 0.0
        %2796 = vmatprep.subr.mxu0 %v1448
        %2797 = vmatpush1.msra.mxu0 %v1447
        %2798 = vmatprep.subr.mxu0 %v1432
        %2799 = vmatpush1.msra.mxu0 %v1431
        %2800 = vmatprep.subr.mxu0 %v1416
        %2801 = vmatpush1.msra.mxu0 %v1415
        %2802 = vmatprep.subr.mxu0 %v1400
        %2803 = vmatpush1.msra.mxu0 %v1399
        %2804 = vmatprep.subr.mxu0 %v1384
        %2805 = vmatpush1.msra.mxu0 %v1383
        %2806 = vmatprep.subr.mxu0 %v1368
        %2807 = vmatpush1.msra.mxu0 %v1367
        %2808 = vmatprep.subr.mxu0 %v1352
        %2809 = vmatpush1.msra.mxu0 %v1351
        %2810 = vmatprep.subr.mxu0 %v1336
        %2811 = vmatpush1.msra.mxu0 %v1335
        %2812 = vmatprep.subr.mxu0 0.0
        %2813 = vmatpush2.msra.mxu0 0.0
        %2814 = vmatprep.subr.mxu0 0.0
        %2815 = vmatpush2.msra.mxu0 0.0
        %2816 = vmatprep.subr.mxu0 0.0
        %2817 = vmatpush2.msra.mxu0 0.0
        %2818 = vmatprep.subr.mxu0 0.0
        %2819 = vmatpush2.msra.mxu0 0.0
        %2820 = vmatprep.subr.mxu0 0.0
        %2821 = vmatpush2.msra.mxu0 0.0
        %2822 = vmatprep.subr.mxu0 0.0
        %2823 = vmatpush2.msra.mxu0 0.0
        %2824 = vmatprep.subr.mxu0 0.0
        %2825 = vmatpush2.msra.mxu0 0.0
        %2826 = vmatprep.subr.mxu0 0.0
        %2827 = vmatpush2.msra.mxu0 0.0
        %2828 = vmatprep.subr.mxu0 0.0
        %2829 = vmatpush2.msra.mxu0 0.0
        %2830 = vmatprep.subr.mxu0 0.0
        %2831 = vmatpush2.msra.mxu0 0.0
        %2832 = vmatprep.subr.mxu0 0.0
        %2833 = vmatpush2.msra.mxu0 0.0
        %2834 = vmatprep.subr.mxu0 0.0
        %2835 = vmatpush2.msra.mxu0 0.0
        %2836 = vmatprep.subr.mxu0 0.0
        %2837 = vmatpush2.msra.mxu0 0.0
        %2838 = vmatprep.subr.mxu0 0.0
        %2839 = vmatpush2.msra.mxu0 0.0
        %2840 = vmatprep.subr.mxu0 0.0
        %2841 = vmatpush2.msra.mxu0 0.0
        %2842 = vmatprep.subr.mxu0 0.0
        %2843 = vmatpush2.msra.mxu0 0.0
        %2844 = vmatprep.mubr.f32.mxu0 0.0
        %2845 = vmatmul.mubr.f32.gmra.mxu0 %v2305
        %v2846 = vpop.f32.mrf.mxu0
        %v2847 = vadd.f32 0.0, %v2846
        %v2848 = vpop.f32.mrf.mxu0
        %v2849 = vadd.f32 0.0, %v2848
        %2850 = vmatprep.mubr.f32.mxu0 0.0
        %2851 = vmatmul.mubr.f32.gmra.mxu0 %v2308
        %v2852 = vpop.f32.mrf.mxu0
        %v2853 = vadd.f32 0.0, %v2852
        %v2854 = vpop.f32.mrf.mxu0
        %v2855 = vadd.f32 0.0, %v2854
        %2856 = vmatprep.mubr.f32.mxu0 0.0
        %2857 = vmatmul.mubr.f32.gmra.mxu0 %v2311
        %v2858 = vpop.f32.mrf.mxu0
        %v2859 = vadd.f32 0.0, %v2858
        %v2860 = vpop.f32.mrf.mxu0
        %v2861 = vadd.f32 0.0, %v2860
        %2862 = vmatprep.mubr.f32.mxu0 0.0
        %2863 = vmatmul.mubr.f32.gmra.mxu0 %v2314
        %v2864 = vpop.f32.mrf.mxu0
        %v2865 = vadd.f32 0.0, %v2864
        %v2866 = vpop.f32.mrf.mxu0
        %v2867 = vadd.f32 0.0, %v2866
        %2868 = vmatprep.mubr.f32.mxu0 0.0
        %2869 = vmatmul.mubr.f32.gmra.mxu0 %v2317
        %v2870 = vpop.f32.mrf.mxu0
        %v2871 = vadd.f32 0.0, %v2870
        %v2872 = vpop.f32.mrf.mxu0
        %v2873 = vadd.f32 0.0, %v2872
        %2874 = vmatprep.mubr.f32.mxu0 0.0
        %2875 = vmatmul.mubr.f32.gmra.mxu0 %v2320
        %v2876 = vpop.f32.mrf.mxu0
        %v2877 = vadd.f32 0.0, %v2876
        %v2878 = vpop.f32.mrf.mxu0
        %v2879 = vadd.f32 0.0, %v2878
        %2880 = vmatprep.mubr.f32.mxu0 0.0
        %2881 = vmatmul.mubr.f32.gmra.mxu0 %v2323
        %v2882 = vpop.f32.mrf.mxu0
        %v2883 = vadd.f32 0.0, %v2882
        %v2884 = vpop.f32.mrf.mxu0
        %v2885 = vadd.f32 0.0, %v2884
        %2886 = vmatprep.mubr.f32.mxu0 0.0
        %2887 = vmatmul.mubr.f32.gmra.mxu0 %v2326
        %v2888 = vpop.f32.mrf.mxu0
        %v2889 = vadd.f32 0.0, %v2888
        %v2890 = vpop.f32.mrf.mxu0
        %v2891 = vadd.f32 0.0, %v2890
        %2892 = vdwg.mxu0
        %2893 = vmatprep.subr.mxu0 0.0
        %2894 = vmatpush1.msra.mxu0 0.0
        %2895 = vmatprep.subr.mxu0 0.0
        %2896 = vmatpush1.msra.mxu0 0.0
        %2897 = vmatprep.subr.mxu0 0.0
        %2898 = vmatpush1.msra.mxu0 0.0
        %2899 = vmatprep.subr.mxu0 0.0
        %2900 = vmatpush1.msra.mxu0 0.0
        %2901 = vmatprep.subr.mxu0 0.0
        %2902 = vmatpush1.msra.mxu0 0.0
        %2903 = vmatprep.subr.mxu0 0.0
        %2904 = vmatpush1.msra.mxu0 0.0
        %2905 = vmatprep.subr.mxu0 0.0
        %2906 = vmatpush1.msra.mxu0 0.0
        %2907 = vmatprep.subr.mxu0 0.0
        %2908 = vmatpush1.msra.mxu0 0.0
        %2909 = vmatprep.subr.mxu0 %v1450
        %2910 = vmatpush1.msra.mxu0 %v1449
        %2911 = vmatprep.subr.mxu0 %v1434
        %2912 = vmatpush1.msra.mxu0 %v1433
        %2913 = vmatprep.subr.mxu0 %v1418
        %2914 = vmatpush1.msra.mxu0 %v1417
        %2915 = vmatprep.subr.mxu0 %v1402
        %2916 = vmatpush1.msra.mxu0 %v1401
        %2917 = vmatprep.subr.mxu0 %v1386
        %2918 = vmatpush1.msra.mxu0 %v1385
        %2919 = vmatprep.subr.mxu0 %v1370
        %2920 = vmatpush1.msra.mxu0 %v1369
        %2921 = vmatprep.subr.mxu0 %v1354
        %2922 = vmatpush1.msra.mxu0 %v1353
        %2923 = vmatprep.subr.mxu0 %v1338
        %2924 = vmatpush1.msra.mxu0 %v1337
        %2925 = vmatprep.subr.mxu0 0.0
        %2926 = vmatpush2.msra.mxu0 0.0
        %2927 = vmatprep.subr.mxu0 0.0
        %2928 = vmatpush2.msra.mxu0 0.0
        %2929 = vmatprep.subr.mxu0 0.0
        %2930 = vmatpush2.msra.mxu0 0.0
        %2931 = vmatprep.subr.mxu0 0.0
        %2932 = vmatpush2.msra.mxu0 0.0
        %2933 = vmatprep.subr.mxu0 0.0
        %2934 = vmatpush2.msra.mxu0 0.0
        %2935 = vmatprep.subr.mxu0 0.0
        %2936 = vmatpush2.msra.mxu0 0.0
        %2937 = vmatprep.subr.mxu0 0.0
        %2938 = vmatpush2.msra.mxu0 0.0
        %2939 = vmatprep.subr.mxu0 0.0
        %2940 = vmatpush2.msra.mxu0 0.0
        %2941 = vmatprep.subr.mxu0 0.0
        %2942 = vmatpush2.msra.mxu0 0.0
        %2943 = vmatprep.subr.mxu0 0.0
        %2944 = vmatpush2.msra.mxu0 0.0
        %2945 = vmatprep.subr.mxu0 0.0
        %2946 = vmatpush2.msra.mxu0 0.0
        %2947 = vmatprep.subr.mxu0 0.0
        %2948 = vmatpush2.msra.mxu0 0.0
        %2949 = vmatprep.subr.mxu0 0.0
        %2950 = vmatpush2.msra.mxu0 0.0
        %2951 = vmatprep.subr.mxu0 0.0
        %2952 = vmatpush2.msra.mxu0 0.0
        %2953 = vmatprep.subr.mxu0 0.0
        %2954 = vmatpush2.msra.mxu0 0.0
        %2955 = vmatprep.subr.mxu0 0.0
        %2956 = vmatpush2.msra.mxu0 0.0
        %2957 = vmatprep.mubr.f32.mxu0 0.0
        %2958 = vmatmul.mubr.f32.gmra.mxu0 %v2305
        %v2959 = vpop.f32.mrf.mxu0
        %v2960 = vadd.f32 0.0, %v2959
        %v2961 = vpop.f32.mrf.mxu0
        %v2962 = vadd.f32 0.0, %v2961
        %2963 = vmatprep.mubr.f32.mxu0 0.0
        %2964 = vmatmul.mubr.f32.gmra.mxu0 %v2308
        %v2965 = vpop.f32.mrf.mxu0
        %v2966 = vadd.f32 0.0, %v2965
        %v2967 = vpop.f32.mrf.mxu0
        %v2968 = vadd.f32 0.0, %v2967
        %2969 = vmatprep.mubr.f32.mxu0 0.0
        %2970 = vmatmul.mubr.f32.gmra.mxu0 %v2311
        %v2971 = vpop.f32.mrf.mxu0
        %v2972 = vadd.f32 0.0, %v2971
        %v2973 = vpop.f32.mrf.mxu0
        %v2974 = vadd.f32 0.0, %v2973
        %2975 = vmatprep.mubr.f32.mxu0 0.0
        %2976 = vmatmul.mubr.f32.gmra.mxu0 %v2314
        %v2977 = vpop.f32.mrf.mxu0
        %v2978 = vadd.f32 0.0, %v2977
        %v2979 = vpop.f32.mrf.mxu0
        %v2980 = vadd.f32 0.0, %v2979
        %2981 = vmatprep.mubr.f32.mxu0 0.0
        %2982 = vmatmul.mubr.f32.gmra.mxu0 %v2317
        %v2983 = vpop.f32.mrf.mxu0
        %v2984 = vadd.f32 0.0, %v2983
        %v2985 = vpop.f32.mrf.mxu0
        %v2986 = vadd.f32 0.0, %v2985
        %2987 = vmatprep.mubr.f32.mxu0 0.0
        %2988 = vmatmul.mubr.f32.gmra.mxu0 %v2320
        %v2989 = vpop.f32.mrf.mxu0
        %v2990 = vadd.f32 0.0, %v2989
        %v2991 = vpop.f32.mrf.mxu0
        %v2992 = vadd.f32 0.0, %v2991
        %2993 = vmatprep.mubr.f32.mxu0 0.0
        %2994 = vmatmul.mubr.f32.gmra.mxu0 %v2323
        %v2995 = vpop.f32.mrf.mxu0
        %v2996 = vadd.f32 0.0, %v2995
        %v2997 = vpop.f32.mrf.mxu0
        %v2998 = vadd.f32 0.0, %v2997
        %2999 = vmatprep.mubr.f32.mxu0 0.0
        %3000 = vmatmul.mubr.f32.gmra.mxu0 %v2326
        %v3001 = vpop.f32.mrf.mxu0
        %v3002 = vadd.f32 0.0, %v3001
        %v3003 = vpop.f32.mrf.mxu0
        %v3004 = vadd.f32 0.0, %v3003
        %3005 = vdwg.mxu0
        %3006 = vmatprep.subr.mxu0 0.0
        %3007 = vmatpush1.msra.mxu0 0.0
        %3008 = vmatprep.subr.mxu0 0.0
        %3009 = vmatpush1.msra.mxu0 0.0
        %3010 = vmatprep.subr.mxu0 0.0
        %3011 = vmatpush1.msra.mxu0 0.0
        %3012 = vmatprep.subr.mxu0 0.0
        %3013 = vmatpush1.msra.mxu0 0.0
        %3014 = vmatprep.subr.mxu0 0.0
        %3015 = vmatpush1.msra.mxu0 0.0
        %3016 = vmatprep.subr.mxu0 0.0
        %3017 = vmatpush1.msra.mxu0 0.0
        %3018 = vmatprep.subr.mxu0 0.0
        %3019 = vmatpush1.msra.mxu0 0.0
        %3020 = vmatprep.subr.mxu0 0.0
        %3021 = vmatpush1.msra.mxu0 0.0
        %3022 = vmatprep.subr.mxu0 %v1452
        %3023 = vmatpush1.msra.mxu0 %v1451
        %3024 = vmatprep.subr.mxu0 %v1436
        %3025 = vmatpush1.msra.mxu0 %v1435
        %3026 = vmatprep.subr.mxu0 %v1420
        %3027 = vmatpush1.msra.mxu0 %v1419
        %3028 = vmatprep.subr.mxu0 %v1404
        %3029 = vmatpush1.msra.mxu0 %v1403
        %3030 = vmatprep.subr.mxu0 %v1388
        %3031 = vmatpush1.msra.mxu0 %v1387
        %3032 = vmatprep.subr.mxu0 %v1372
        %3033 = vmatpush1.msra.mxu0 %v1371
        %3034 = vmatprep.subr.mxu0 %v1356
        %3035 = vmatpush1.msra.mxu0 %v1355
        %3036 = vmatprep.subr.mxu0 %v1340
        %3037 = vmatpush1.msra.mxu0 %v1339
        %3038 = vmatprep.subr.mxu0 0.0
        %3039 = vmatpush2.msra.mxu0 0.0
        %3040 = vmatprep.subr.mxu0 0.0
        %3041 = vmatpush2.msra.mxu0 0.0
        %3042 = vmatprep.subr.mxu0 0.0
        %3043 = vmatpush2.msra.mxu0 0.0
        %3044 = vmatprep.subr.mxu0 0.0
        %3045 = vmatpush2.msra.mxu0 0.0
        %3046 = vmatprep.subr.mxu0 0.0
        %3047 = vmatpush2.msra.mxu0 0.0
        %3048 = vmatprep.subr.mxu0 0.0
        %3049 = vmatpush2.msra.mxu0 0.0
        %3050 = vmatprep.subr.mxu0 0.0
        %3051 = vmatpush2.msra.mxu0 0.0
        %3052 = vmatprep.subr.mxu0 0.0
        %3053 = vmatpush2.msra.mxu0 0.0
        %3054 = vmatprep.subr.mxu0 0.0
        %3055 = vmatpush2.msra.mxu0 0.0
        %3056 = vmatprep.subr.mxu0 0.0
        %3057 = vmatpush2.msra.mxu0 0.0
        %3058 = vmatprep.subr.mxu0 0.0
        %3059 = vmatpush2.msra.mxu0 0.0
        %3060 = vmatprep.subr.mxu0 0.0
        %3061 = vmatpush2.msra.mxu0 0.0
        %3062 = vmatprep.subr.mxu0 0.0
        %3063 = vmatpush2.msra.mxu0 0.0
        %3064 = vmatprep.subr.mxu0 0.0
        %3065 = vmatpush2.msra.mxu0 0.0
        %3066 = vmatprep.subr.mxu0 0.0
        %3067 = vmatpush2.msra.mxu0 0.0
        %3068 = vmatprep.subr.mxu0 0.0
        %3069 = vmatpush2.msra.mxu0 0.0
        %3070 = vmatprep.mubr.f32.mxu0 0.0
        %3071 = vmatmul.mubr.f32.gmra.mxu0 %v2305
        %v3072 = vpop.f32.mrf.mxu0
        %v3073 = vadd.f32 0.0, %v3072
        %v3074 = vpop.f32.mrf.mxu0
        %v3075 = vadd.f32 0.0, %v3074
        %3076 = vmatprep.mubr.f32.mxu0 0.0
        %3077 = vmatmul.mubr.f32.gmra.mxu0 %v2308
        %v3078 = vpop.f32.mrf.mxu0
        %v3079 = vadd.f32 0.0, %v3078
        %v3080 = vpop.f32.mrf.mxu0
        %v3081 = vadd.f32 0.0, %v3080
        %3082 = vmatprep.mubr.f32.mxu0 0.0
        %3083 = vmatmul.mubr.f32.gmra.mxu0 %v2311
        %v3084 = vpop.f32.mrf.mxu0
        %v3085 = vadd.f32 0.0, %v3084
        %v3086 = vpop.f32.mrf.mxu0
        %v3087 = vadd.f32 0.0, %v3086
        %3088 = vmatprep.mubr.f32.mxu0 0.0
        %3089 = vmatmul.mubr.f32.gmra.mxu0 %v2314
        %v3090 = vpop.f32.mrf.mxu0
        %v3091 = vadd.f32 0.0, %v3090
        %v3092 = vpop.f32.mrf.mxu0
        %v3093 = vadd.f32 0.0, %v3092
        %3094 = vmatprep.mubr.f32.mxu0 0.0
        %3095 = vmatmul.mubr.f32.gmra.mxu0 %v2317
        %v3096 = vpop.f32.mrf.mxu0
        %v3097 = vadd.f32 0.0, %v3096
        %v3098 = vpop.f32.mrf.mxu0
        %v3099 = vadd.f32 0.0, %v3098
        %3100 = vmatprep.mubr.f32.mxu0 0.0
        %3101 = vmatmul.mubr.f32.gmra.mxu0 %v2320
        %v3102 = vpop.f32.mrf.mxu0
        %v3103 = vadd.f32 0.0, %v3102
        %v3104 = vpop.f32.mrf.mxu0
        %v3105 = vadd.f32 0.0, %v3104
        %3106 = vmatprep.mubr.f32.mxu0 0.0
        %3107 = vmatmul.mubr.f32.gmra.mxu0 %v2323
        %v3108 = vpop.f32.mrf.mxu0
        %v3109 = vadd.f32 0.0, %v3108
        %v3110 = vpop.f32.mrf.mxu0
        %v3111 = vadd.f32 0.0, %v3110
        %3112 = vmatprep.mubr.f32.mxu0 0.0
        %3113 = vmatmul.mubr.f32.gmra.mxu0 %v2326
        %v3114 = vpop.f32.mrf.mxu0
        %v3115 = vadd.f32 0.0, %v3114
        %v3116 = vpop.f32.mrf.mxu0
        %v3117 = vadd.f32 0.0, %v3116
        %3118 = vdwg.mxu0
        %3119 = vmatprep.subr.mxu0 0.0
        %3120 = vmatpush1.msra.mxu0 0.0
        %3121 = vmatprep.subr.mxu0 0.0
        %3122 = vmatpush1.msra.mxu0 0.0
        %3123 = vmatprep.subr.mxu0 0.0
        %3124 = vmatpush1.msra.mxu0 0.0
        %3125 = vmatprep.subr.mxu0 0.0
        %3126 = vmatpush1.msra.mxu0 0.0
        %3127 = vmatprep.subr.mxu0 0.0
        %3128 = vmatpush1.msra.mxu0 0.0
        %3129 = vmatprep.subr.mxu0 0.0
        %3130 = vmatpush1.msra.mxu0 0.0
        %3131 = vmatprep.subr.mxu0 0.0
        %3132 = vmatpush1.msra.mxu0 0.0
        %3133 = vmatprep.subr.mxu0 0.0
        %3134 = vmatpush1.msra.mxu0 0.0
        %3135 = vmatprep.subr.mxu0 %v1454
        %3136 = vmatpush1.msra.mxu0 %v1453
        %3137 = vmatprep.subr.mxu0 %v1438
        %3138 = vmatpush1.msra.mxu0 %v1437
        %3139 = vmatprep.subr.mxu0 %v1422
        %3140 = vmatpush1.msra.mxu0 %v1421
        %3141 = vmatprep.subr.mxu0 %v1406
        %3142 = vmatpush1.msra.mxu0 %v1405
        %3143 = vmatprep.subr.mxu0 %v1390
        %3144 = vmatpush1.msra.mxu0 %v1389
        %3145 = vmatprep.subr.mxu0 %v1374
        %3146 = vmatpush1.msra.mxu0 %v1373
        %3147 = vmatprep.subr.mxu0 %v1358
        %3148 = vmatpush1.msra.mxu0 %v1357
        %3149 = vmatprep.subr.mxu0 %v1342
        %3150 = vmatpush1.msra.mxu0 %v1341
        %3151 = vmatprep.subr.mxu0 0.0
        %3152 = vmatpush2.msra.mxu0 0.0
        %3153 = vmatprep.subr.mxu0 0.0
        %3154 = vmatpush2.msra.mxu0 0.0
        %3155 = vmatprep.subr.mxu0 0.0
        %3156 = vmatpush2.msra.mxu0 0.0
        %3157 = vmatprep.subr.mxu0 0.0
        %3158 = vmatpush2.msra.mxu0 0.0
        %3159 = vmatprep.subr.mxu0 0.0
        %3160 = vmatpush2.msra.mxu0 0.0
        %3161 = vmatprep.subr.mxu0 0.0
        %3162 = vmatpush2.msra.mxu0 0.0
        %3163 = vmatprep.subr.mxu0 0.0
        %3164 = vmatpush2.msra.mxu0 0.0
        %3165 = vmatprep.subr.mxu0 0.0
        %3166 = vmatpush2.msra.mxu0 0.0
        %3167 = vmatprep.subr.mxu0 0.0
        %3168 = vmatpush2.msra.mxu0 0.0
        %3169 = vmatprep.subr.mxu0 0.0
        %3170 = vmatpush2.msra.mxu0 0.0
        %3171 = vmatprep.subr.mxu0 0.0
        %3172 = vmatpush2.msra.mxu0 0.0
        %3173 = vmatprep.subr.mxu0 0.0
        %3174 = vmatpush2.msra.mxu0 0.0
        %3175 = vmatprep.subr.mxu0 0.0
        %3176 = vmatpush2.msra.mxu0 0.0
        %3177 = vmatprep.subr.mxu0 0.0
        %3178 = vmatpush2.msra.mxu0 0.0
        %3179 = vmatprep.subr.mxu0 0.0
        %3180 = vmatpush2.msra.mxu0 0.0
        %3181 = vmatprep.subr.mxu0 0.0
        %3182 = vmatpush2.msra.mxu0 0.0
        %3183 = vmatprep.mubr.f32.mxu0 0.0
        %3184 = vmatmul.mubr.f32.gmra.mxu0 %v2305
        %v3185 = vpop.f32.mrf.mxu0
        %v3186 = vadd.f32 0.0, %v3185
        %v3187 = vpop.f32.mrf.mxu0
        %v3188 = vadd.f32 0.0, %v3187
        %3189 = vmatprep.mubr.f32.mxu0 0.0
        %3190 = vmatmul.mubr.f32.gmra.mxu0 %v2308
        %v3191 = vpop.f32.mrf.mxu0
        %v3192 = vadd.f32 0.0, %v3191
        %v3193 = vpop.f32.mrf.mxu0
        %v3194 = vadd.f32 0.0, %v3193
        %3195 = vmatprep.mubr.f32.mxu0 0.0
        %3196 = vmatmul.mubr.f32.gmra.mxu0 %v2311
        %v3197 = vpop.f32.mrf.mxu0
        %v3198 = vadd.f32 0.0, %v3197
        %v3199 = vpop.f32.mrf.mxu0
        %v3200 = vadd.f32 0.0, %v3199
        %3201 = vmatprep.mubr.f32.mxu0 0.0
        %3202 = vmatmul.mubr.f32.gmra.mxu0 %v2314
        %v3203 = vpop.f32.mrf.mxu0
        %v3204 = vadd.f32 0.0, %v3203
        %v3205 = vpop.f32.mrf.mxu0
        %v3206 = vadd.f32 0.0, %v3205
        %3207 = vmatprep.mubr.f32.mxu0 0.0
        %3208 = vmatmul.mubr.f32.gmra.mxu0 %v2317
        %v3209 = vpop.f32.mrf.mxu0
        %v3210 = vadd.f32 0.0, %v3209
        %v3211 = vpop.f32.mrf.mxu0
        %v3212 = vadd.f32 0.0, %v3211
        %3213 = vmatprep.mubr.f32.mxu0 0.0
        %3214 = vmatmul.mubr.f32.gmra.mxu0 %v2320
        %v3215 = vpop.f32.mrf.mxu0
        %v3216 = vadd.f32 0.0, %v3215
        %v3217 = vpop.f32.mrf.mxu0
        %v3218 = vadd.f32 0.0, %v3217
        %3219 = vmatprep.mubr.f32.mxu0 0.0
        %3220 = vmatmul.mubr.f32.gmra.mxu0 %v2323
        %v3221 = vpop.f32.mrf.mxu0
        %v3222 = vadd.f32 0.0, %v3221
        %v3223 = vpop.f32.mrf.mxu0
        %v3224 = vadd.f32 0.0, %v3223
        %3225 = vmatprep.mubr.f32.mxu0 0.0
        %3226 = vmatmul.mubr.f32.gmra.mxu0 %v2326
        %v3227 = vpop.f32.mrf.mxu0
        %v3228 = vadd.f32 0.0, %v3227
        %v3229 = vpop.f32.mrf.mxu0
        %v3230 = vadd.f32 0.0, %v3229
        %3231 = vdwg.mxu0
        %v3232 = vsub.f32 %v522, %v2395
        %v3233 = vsub.f32 %v524, %v2397
        %v3234 = vsub.f32 %v595, %v2508
        %v3235 = vsub.f32 %v597, %v2510
        %v3236 = vsub.f32 %v668, %v2621
        %v3237 = vsub.f32 %v670, %v2623
        %v3238 = vsub.f32 %v741, %v2734
        %v3239 = vsub.f32 %v743, %v2736
        %v3240 = vsub.f32 %v814, %v2847
        %v3241 = vsub.f32 %v816, %v2849
        %v3242 = vsub.f32 %v887, %v2960
        %v3243 = vsub.f32 %v889, %v2962
        %v3244 = vsub.f32 %v960, %v3073
        %v3245 = vsub.f32 %v962, %v3075
        %v3246 = vsub.f32 %v1033, %v3186
        %v3247 = vsub.f32 %v1035, %v3188
        %v3248 = vsub.f32 %v526, %v2401
        %v3249 = vsub.f32 %v528, %v2403
        %v3250 = vsub.f32 %v599, %v2514
        %v3251 = vsub.f32 %v601, %v2516
        %v3252 = vsub.f32 %v672, %v2627
        %v3253 = vsub.f32 %v674, %v2629
        %v3254 = vsub.f32 %v745, %v2740
        %v3255 = vsub.f32 %v747, %v2742
        %v3256 = vsub.f32 %v818, %v2853
        %v3257 = vsub.f32 %v820, %v2855
        %v3258 = vsub.f32 %v891, %v2966
        %v3259 = vsub.f32 %v893, %v2968
        %v3260 = vsub.f32 %v964, %v3079
        %v3261 = vsub.f32 %v966, %v3081
        %v3262 = vsub.f32 %v1037, %v3192
        %v3263 = vsub.f32 %v1039, %v3194
        %v3264 = vsub.f32 %v532, %v2407
        %v3265 = vsub.f32 %v534, %v2409
        %v3266 = vsub.f32 %v605, %v2520
        %v3267 = vsub.f32 %v607, %v2522
        %v3268 = vsub.f32 %v678, %v2633
        %v3269 = vsub.f32 %v680, %v2635
        %v3270 = vsub.f32 %v751, %v2746
        %v3271 = vsub.f32 %v753, %v2748
        %v3272 = vsub.f32 %v824, %v2859
        %v3273 = vsub.f32 %v826, %v2861
        %v3274 = vsub.f32 %v897, %v2972
        %v3275 = vsub.f32 %v899, %v2974
        %v3276 = vsub.f32 %v970, %v3085
        %v3277 = vsub.f32 %v972, %v3087
        %v3278 = vsub.f32 %v1043, %v3198
        %v3279 = vsub.f32 %v1045, %v3200
        %v3280 = vsub.f32 %v536, %v2413
        %v3281 = vsub.f32 %v538, %v2415
        %v3282 = vsub.f32 %v609, %v2526
        %v3283 = vsub.f32 %v611, %v2528
        %v3284 = vsub.f32 %v682, %v2639
        %v3285 = vsub.f32 %v684, %v2641
        %v3286 = vsub.f32 %v755, %v2752
        %v3287 = vsub.f32 %v757, %v2754
        %v3288 = vsub.f32 %v828, %v2865
        %v3289 = vsub.f32 %v830, %v2867
        %v3290 = vsub.f32 %v901, %v2978
        %v3291 = vsub.f32 %v903, %v2980
        %v3292 = vsub.f32 %v974, %v3091
        %v3293 = vsub.f32 %v976, %v3093
        %v3294 = vsub.f32 %v1047, %v3204
        %v3295 = vsub.f32 %v1049, %v3206
        %v3296 = vsub.f32 %v542, %v2419
        %v3297 = vsub.f32 %v544, %v2421
        %v3298 = vsub.f32 %v615, %v2532
        %v3299 = vsub.f32 %v617, %v2534
        %v3300 = vsub.f32 %v688, %v2645
        %v3301 = vsub.f32 %v690, %v2647
        %v3302 = vsub.f32 %v761, %v2758
        %v3303 = vsub.f32 %v763, %v2760
        %v3304 = vsub.f32 %v834, %v2871
        %v3305 = vsub.f32 %v836, %v2873
        %v3306 = vsub.f32 %v907, %v2984
        %v3307 = vsub.f32 %v909, %v2986
        %v3308 = vsub.f32 %v980, %v3097
        %v3309 = vsub.f32 %v982, %v3099
        %v3310 = vsub.f32 %v1053, %v3210
        %v3311 = vsub.f32 %v1055, %v3212
        %v3312 = vsub.f32 %v546, %v2425
        %v3313 = vsub.f32 %v548, %v2427
        %v3314 = vsub.f32 %v619, %v2538
        %v3315 = vsub.f32 %v621, %v2540
        %v3316 = vsub.f32 %v692, %v2651
        %v3317 = vsub.f32 %v694, %v2653
        %v3318 = vsub.f32 %v765, %v2764
        %v3319 = vsub.f32 %v767, %v2766
        %v3320 = vsub.f32 %v838, %v2877
        %v3321 = vsub.f32 %v840, %v2879
        %v3322 = vsub.f32 %v911, %v2990
        %v3323 = vsub.f32 %v913, %v2992
        %v3324 = vsub.f32 %v984, %v3103
        %v3325 = vsub.f32 %v986, %v3105
        %v3326 = vsub.f32 %v1057, %v3216
        %v3327 = vsub.f32 %v1059, %v3218
        %v3328 = vsub.f32 %v552, %v2431
        %v3329 = vsub.f32 %v554, %v2433
        %v3330 = vsub.f32 %v625, %v2544
        %v3331 = vsub.f32 %v627, %v2546
        %v3332 = vsub.f32 %v698, %v2657
        %v3333 = vsub.f32 %v700, %v2659
        %v3334 = vsub.f32 %v771, %v2770
        %v3335 = vsub.f32 %v773, %v2772
        %v3336 = vsub.f32 %v844, %v2883
        %v3337 = vsub.f32 %v846, %v2885
        %v3338 = vsub.f32 %v917, %v2996
        %v3339 = vsub.f32 %v919, %v2998
        %v3340 = vsub.f32 %v990, %v3109
        %v3341 = vsub.f32 %v992, %v3111
        %v3342 = vsub.f32 %v1063, %v3222
        %v3343 = vsub.f32 %v1065, %v3224
        %v3344 = vsub.f32 %v556, %v2437
        %v3345 = vsub.f32 %v558, %v2439
        %v3346 = vsub.f32 %v629, %v2550
        %v3347 = vsub.f32 %v631, %v2552
        %v3348 = vsub.f32 %v702, %v2663
        %v3349 = vsub.f32 %v704, %v2665
        %v3350 = vsub.f32 %v775, %v2776
        %v3351 = vsub.f32 %v777, %v2778
        %v3352 = vsub.f32 %v848, %v2889
        %v3353 = vsub.f32 %v850, %v2891
        %v3354 = vsub.f32 %v921, %v3002
        %v3355 = vsub.f32 %v923, %v3004
        %v3356 = vsub.f32 %v994, %v3115
        %v3357 = vsub.f32 %v996, %v3117
        %v3358 = vsub.f32 %v1067, %v3228
        %v3359 = vsub.f32 %v1069, %v3230
        %v3360 = vmul.f32 %v3232, %v3232
        %v3361 = vmul.f32 %v3233, %v3233
        %v3362 = vmul.f32 %v3234, %v3234
        %v3363 = vmul.f32 %v3235, %v3235
        %v3364 = vmul.f32 %v3236, %v3236
        %v3365 = vmul.f32 %v3237, %v3237
        %v3366 = vmul.f32 %v3238, %v3238
        %v3367 = vmul.f32 %v3239, %v3239
        %v3368 = vmul.f32 %v3240, %v3240
        %v3369 = vmul.f32 %v3241, %v3241
        %v3370 = vmul.f32 %v3242, %v3242
        %v3371 = vmul.f32 %v3243, %v3243
        %v3372 = vmul.f32 %v3244, %v3244
        %v3373 = vmul.f32 %v3245, %v3245
        %v3374 = vmul.f32 %v3246, %v3246
        %v3375 = vmul.f32 %v3247, %v3247
        %v3376 = vmul.f32 %v3248, %v3248
        %v3377 = vmul.f32 %v3249, %v3249
        %v3378 = vmul.f32 %v3250, %v3250
        %v3379 = vmul.f32 %v3251, %v3251
        %v3380 = vmul.f32 %v3252, %v3252
        %v3381 = vmul.f32 %v3253, %v3253
        %v3382 = vmul.f32 %v3254, %v3254
        %v3383 = vmul.f32 %v3255, %v3255
        %v3384 = vmul.f32 %v3256, %v3256
        %v3385 = vmul.f32 %v3257, %v3257
        %v3386 = vmul.f32 %v3258, %v3258
        %v3387 = vmul.f32 %v3259, %v3259
        %v3388 = vmul.f32 %v3260, %v3260
        %v3389 = vmul.f32 %v3261, %v3261
        %v3390 = vmul.f32 %v3262, %v3262
        %v3391 = vmul.f32 %v3263, %v3263
        %v3392 = vmul.f32 %v3264, %v3264
        %v3393 = vmul.f32 %v3265, %v3265
        %v3394 = vmul.f32 %v3266, %v3266
        %v3395 = vmul.f32 %v3267, %v3267
        %v3396 = vmul.f32 %v3268, %v3268
        %v3397 = vmul.f32 %v3269, %v3269
        %v3398 = vmul.f32 %v3270, %v3270
        %v3399 = vmul.f32 %v3271, %v3271
        %v3400 = vmul.f32 %v3272, %v3272
        %v3401 = vmul.f32 %v3273, %v3273
        %v3402 = vmul.f32 %v3274, %v3274
        %v3403 = vmul.f32 %v3275, %v3275
        %v3404 = vmul.f32 %v3276, %v3276
        %v3405 = vmul.f32 %v3277, %v3277
        %v3406 = vmul.f32 %v3278, %v3278
        %v3407 = vmul.f32 %v3279, %v3279
        %v3408 = vmul.f32 %v3280, %v3280
        %v3409 = vmul.f32 %v3281, %v3281
        %v3410 = vmul.f32 %v3282, %v3282
        %v3411 = vmul.f32 %v3283, %v3283
        %v3412 = vmul.f32 %v3284, %v3284
        %v3413 = vmul.f32 %v3285, %v3285
        %v3414 = vmul.f32 %v3286, %v3286
        %v3415 = vmul.f32 %v3287, %v3287
        %v3416 = vmul.f32 %v3288, %v3288
        %v3417 = vmul.f32 %v3289, %v3289
        %v3418 = vmul.f32 %v3290, %v3290
        %v3419 = vmul.f32 %v3291, %v3291
        %v3420 = vmul.f32 %v3292, %v3292
        %v3421 = vmul.f32 %v3293, %v3293
        %v3422 = vmul.f32 %v3294, %v3294
        %v3423 = vmul.f32 %v3295, %v3295
        %v3424 = vmul.f32 %v3296, %v3296
        %v3425 = vmul.f32 %v3297, %v3297
        %v3426 = vmul.f32 %v3298, %v3298
        %v3427 = vmul.f32 %v3299, %v3299
        %v3428 = vmul.f32 %v3300, %v3300
        %v3429 = vmul.f32 %v3301, %v3301
        %v3430 = vmul.f32 %v3302, %v3302
        %v3431 = vmul.f32 %v3303, %v3303
        %v3432 = vmul.f32 %v3304, %v3304
        %v3433 = vmul.f32 %v3305, %v3305
        %v3434 = vmul.f32 %v3306, %v3306
        %v3435 = vmul.f32 %v3307, %v3307
        %v3436 = vmul.f32 %v3308, %v3308
        %v3437 = vmul.f32 %v3309, %v3309
        %v3438 = vmul.f32 %v3310, %v3310
        %v3439 = vmul.f32 %v3311, %v3311
        %v3440 = vmul.f32 %v3312, %v3312
        %v3441 = vmul.f32 %v3313, %v3313
        %v3442 = vmul.f32 %v3314, %v3314
        %v3443 = vmul.f32 %v3315, %v3315
        %v3444 = vmul.f32 %v3316, %v3316
        %v3445 = vmul.f32 %v3317, %v3317
        %v3446 = vmul.f32 %v3318, %v3318
        %v3447 = vmul.f32 %v3319, %v3319
        %v3448 = vmul.f32 %v3320, %v3320
        %v3449 = vmul.f32 %v3321, %v3321
        %v3450 = vmul.f32 %v3322, %v3322
        %v3451 = vmul.f32 %v3323, %v3323
        %v3452 = vmul.f32 %v3324, %v3324
        %v3453 = vmul.f32 %v3325, %v3325
        %v3454 = vmul.f32 %v3326, %v3326
        %v3455 = vmul.f32 %v3327, %v3327
        %v3456 = vmul.f32 %v3328, %v3328
        %v3457 = vmul.f32 %v3329, %v3329
        %v3458 = vmul.f32 %v3330, %v3330
        %v3459 = vmul.f32 %v3331, %v3331
        %v3460 = vmul.f32 %v3332, %v3332
        %v3461 = vmul.f32 %v3333, %v3333
        %v3462 = vmul.f32 %v3334, %v3334
        %v3463 = vmul.f32 %v3335, %v3335
        %v3464 = vmul.f32 %v3336, %v3336
        %v3465 = vmul.f32 %v3337, %v3337
        %v3466 = vmul.f32 %v3338, %v3338
        %v3467 = vmul.f32 %v3339, %v3339
        %v3468 = vmul.f32 %v3340, %v3340
        %v3469 = vmul.f32 %v3341, %v3341
        %v3470 = vmul.f32 %v3342, %v3342
        %v3471 = vmul.f32 %v3343, %v3343
        %v3472 = vmul.f32 %v3344, %v3344
        %v3473 = vmul.f32 %v3345, %v3345
        %v3474 = vmul.f32 %v3346, %v3346
        %v3475 = vmul.f32 %v3347, %v3347
        %v3476 = vmul.f32 %v3348, %v3348
        %v3477 = vmul.f32 %v3349, %v3349
        %v3478 = vmul.f32 %v3350, %v3350
        %v3479 = vmul.f32 %v3351, %v3351
        %v3480 = vmul.f32 %v3352, %v3352
        %v3481 = vmul.f32 %v3353, %v3353
        %v3482 = vmul.f32 %v3354, %v3354
        %v3483 = vmul.f32 %v3355, %v3355
        %v3484 = vmul.f32 %v3356, %v3356
        %v3485 = vmul.f32 %v3357, %v3357
        %v3486 = vmul.f32 %v3358, %v3358
        %v3487 = vmul.f32 %v3359, %v3359
        %3488 = vmatprep.subr.mxu0 0.0
        %3489 = vmatpush1.msra.mxu0 %v1086
        %3490 = vmatprep.subr.mxu0 0.0
        %3491 = vmatpush1.msra.mxu0 %v1085
        %3492 = vmatprep.subr.mxu0 0.0
        %3493 = vmatpush1.msra.mxu0 %v1084
        %3494 = vmatprep.subr.mxu0 0.0
        %3495 = vmatpush1.msra.mxu0 %v1083
        %3496 = vmatprep.subr.mxu0 0.0
        %3497 = vmatpush1.msra.mxu0 %v1082
        %3498 = vmatprep.subr.mxu0 0.0
        %3499 = vmatpush1.msra.mxu0 %v1081
        %3500 = vmatprep.subr.mxu0 0.0
        %3501 = vmatpush1.msra.mxu0 %v1080
        %3502 = vmatprep.subr.mxu0 0.0
        %3503 = vmatpush1.msra.mxu0 %v1079
        %3504 = vmatprep.subr.mxu0 0.0
        %3505 = vmatpush1.msra.mxu0 %v1078
        %3506 = vmatprep.subr.mxu0 0.0
        %3507 = vmatpush1.msra.mxu0 %v1077
        %3508 = vmatprep.subr.mxu0 0.0
        %3509 = vmatpush1.msra.mxu0 %v1076
        %3510 = vmatprep.subr.mxu0 0.0
        %3511 = vmatpush1.msra.mxu0 %v1075
        %3512 = vmatprep.subr.mxu0 0.0
        %3513 = vmatpush1.msra.mxu0 %v1074
        %3514 = vmatprep.subr.mxu0 0.0
        %3515 = vmatpush1.msra.mxu0 %v1073
        %3516 = vmatprep.subr.mxu0 0.0
        %3517 = vmatpush1.msra.mxu0 %v1072
        %3518 = vmatprep.subr.mxu0 0.0
        %3519 = vmatpush1.msra.mxu0 %v1071
        %3520 = vmatprep.subr.mxu0 0.0
        %3521 = vmatpush2.msra.mxu0 %v1102
        %3522 = vmatprep.subr.mxu0 0.0
        %3523 = vmatpush2.msra.mxu0 %v1101
        %3524 = vmatprep.subr.mxu0 0.0
        %3525 = vmatpush2.msra.mxu0 %v1100
        %3526 = vmatprep.subr.mxu0 0.0
        %3527 = vmatpush2.msra.mxu0 %v1099
        %3528 = vmatprep.subr.mxu0 0.0
        %3529 = vmatpush2.msra.mxu0 %v1098
        %3530 = vmatprep.subr.mxu0 0.0
        %3531 = vmatpush2.msra.mxu0 %v1097
        %3532 = vmatprep.subr.mxu0 0.0
        %3533 = vmatpush2.msra.mxu0 %v1096
        %3534 = vmatprep.subr.mxu0 0.0
        %3535 = vmatpush2.msra.mxu0 %v1095
        %3536 = vmatprep.subr.mxu0 0.0
        %3537 = vmatpush2.msra.mxu0 %v1094
        %3538 = vmatprep.subr.mxu0 0.0
        %3539 = vmatpush2.msra.mxu0 %v1093
        %3540 = vmatprep.subr.mxu0 0.0
        %3541 = vmatpush2.msra.mxu0 %v1092
        %3542 = vmatprep.subr.mxu0 0.0
        %3543 = vmatpush2.msra.mxu0 %v1091
        %3544 = vmatprep.subr.mxu0 0.0
        %3545 = vmatpush2.msra.mxu0 %v1090
        %3546 = vmatprep.subr.mxu0 0.0
        %3547 = vmatpush2.msra.mxu0 %v1089
        %3548 = vmatprep.subr.mxu0 0.0
        %3549 = vmatpush2.msra.mxu0 %v1088
        %3550 = vmatprep.subr.mxu0 0.0
        %3551 = vmatpush2.msra.mxu0 %v1087
        %3552 = vmatprep.mubr.f32.mxu0 %v3361
        %3553 = vmatmul.mubr.f32.gmra.mxu0 %v3360
        %v3554 = vpop.f32.mrf.mxu0
        %v3555 = vadd.f32 0.0, %v3554
        %v3556 = vpop.f32.mrf.mxu0
        %3557 = vmatprep.mubr.f32.mxu0 %v3377
        %3558 = vmatmul.mubr.f32.gmra.mxu0 %v3376
        %v3559 = vpop.f32.mrf.mxu0
        %v3560 = vadd.f32 0.0, %v3559
        %v3561 = vpop.f32.mrf.mxu0
        %3562 = vmatprep.mubr.f32.mxu0 %v3393
        %3563 = vmatmul.mubr.f32.gmra.mxu0 %v3392
        %v3564 = vpop.f32.mrf.mxu0
        %v3565 = vadd.f32 0.0, %v3564
        %v3566 = vpop.f32.mrf.mxu0
        %3567 = vmatprep.mubr.f32.mxu0 %v3409
        %3568 = vmatmul.mubr.f32.gmra.mxu0 %v3408
        %v3569 = vpop.f32.mrf.mxu0
        %v3570 = vadd.f32 0.0, %v3569
        %v3571 = vpop.f32.mrf.mxu0
        %3572 = vmatprep.mubr.f32.mxu0 %v3425
        %3573 = vmatmul.mubr.f32.gmra.mxu0 %v3424
        %v3574 = vpop.f32.mrf.mxu0
        %v3575 = vadd.f32 0.0, %v3574
        %v3576 = vpop.f32.mrf.mxu0
        %3577 = vmatprep.mubr.f32.mxu0 %v3441
        %3578 = vmatmul.mubr.f32.gmra.mxu0 %v3440
        %v3579 = vpop.f32.mrf.mxu0
        %v3580 = vadd.f32 0.0, %v3579
        %v3581 = vpop.f32.mrf.mxu0
        %3582 = vmatprep.mubr.f32.mxu0 %v3457
        %3583 = vmatmul.mubr.f32.gmra.mxu0 %v3456
        %v3584 = vpop.f32.mrf.mxu0
        %v3585 = vadd.f32 0.0, %v3584
        %v3586 = vpop.f32.mrf.mxu0
        %3587 = vmatprep.mubr.f32.mxu0 %v3473
        %3588 = vmatmul.mubr.f32.gmra.mxu0 %v3472
        %v3589 = vpop.f32.mrf.mxu0
        %v3590 = vadd.f32 0.0, %v3589
        %v3591 = vpop.f32.mrf.mxu0
        %3592 = vdwg.mxu0
        %3593 = vmatprep.subr.mxu0 0.0
        %3594 = vmatpush1.msra.mxu0 %v1118
        %3595 = vmatprep.subr.mxu0 0.0
        %3596 = vmatpush1.msra.mxu0 %v1117
        %3597 = vmatprep.subr.mxu0 0.0
        %3598 = vmatpush1.msra.mxu0 %v1116
        %3599 = vmatprep.subr.mxu0 0.0
        %3600 = vmatpush1.msra.mxu0 %v1115
        %3601 = vmatprep.subr.mxu0 0.0
        %3602 = vmatpush1.msra.mxu0 %v1114
        %3603 = vmatprep.subr.mxu0 0.0
        %3604 = vmatpush1.msra.mxu0 %v1113
        %3605 = vmatprep.subr.mxu0 0.0
        %3606 = vmatpush1.msra.mxu0 %v1112
        %3607 = vmatprep.subr.mxu0 0.0
        %3608 = vmatpush1.msra.mxu0 %v1111
        %3609 = vmatprep.subr.mxu0 0.0
        %3610 = vmatpush1.msra.mxu0 %v1110
        %3611 = vmatprep.subr.mxu0 0.0
        %3612 = vmatpush1.msra.mxu0 %v1109
        %3613 = vmatprep.subr.mxu0 0.0
        %3614 = vmatpush1.msra.mxu0 %v1108
        %3615 = vmatprep.subr.mxu0 0.0
        %3616 = vmatpush1.msra.mxu0 %v1107
        %3617 = vmatprep.subr.mxu0 0.0
        %3618 = vmatpush1.msra.mxu0 %v1106
        %3619 = vmatprep.subr.mxu0 0.0
        %3620 = vmatpush1.msra.mxu0 %v1105
        %3621 = vmatprep.subr.mxu0 0.0
        %3622 = vmatpush1.msra.mxu0 %v1104
        %3623 = vmatprep.subr.mxu0 0.0
        %3624 = vmatpush1.msra.mxu0 %v1103
        %3625 = vmatprep.subr.mxu0 0.0
        %3626 = vmatpush2.msra.mxu0 %v1134
        %3627 = vmatprep.subr.mxu0 0.0
        %3628 = vmatpush2.msra.mxu0 %v1133
        %3629 = vmatprep.subr.mxu0 0.0
        %3630 = vmatpush2.msra.mxu0 %v1132
        %3631 = vmatprep.subr.mxu0 0.0
        %3632 = vmatpush2.msra.mxu0 %v1131
        %3633 = vmatprep.subr.mxu0 0.0
        %3634 = vmatpush2.msra.mxu0 %v1130
        %3635 = vmatprep.subr.mxu0 0.0
        %3636 = vmatpush2.msra.mxu0 %v1129
        %3637 = vmatprep.subr.mxu0 0.0
        %3638 = vmatpush2.msra.mxu0 %v1128
        %3639 = vmatprep.subr.mxu0 0.0
        %3640 = vmatpush2.msra.mxu0 %v1127
        %3641 = vmatprep.subr.mxu0 0.0
        %3642 = vmatpush2.msra.mxu0 %v1126
        %3643 = vmatprep.subr.mxu0 0.0
        %3644 = vmatpush2.msra.mxu0 %v1125
        %3645 = vmatprep.subr.mxu0 0.0
        %3646 = vmatpush2.msra.mxu0 %v1124
        %3647 = vmatprep.subr.mxu0 0.0
        %3648 = vmatpush2.msra.mxu0 %v1123
        %3649 = vmatprep.subr.mxu0 0.0
        %3650 = vmatpush2.msra.mxu0 %v1122
        %3651 = vmatprep.subr.mxu0 0.0
        %3652 = vmatpush2.msra.mxu0 %v1121
        %3653 = vmatprep.subr.mxu0 0.0
        %3654 = vmatpush2.msra.mxu0 %v1120
        %3655 = vmatprep.subr.mxu0 0.0
        %3656 = vmatpush2.msra.mxu0 %v1119
        %3657 = vmatprep.mubr.f32.mxu0 %v3363
        %3658 = vmatmul.mubr.f32.gmra.mxu0 %v3362
        %v3659 = vpop.f32.mrf.mxu0
        %v3660 = vadd.f32 %v3555, %v3659
        %v3661 = vpop.f32.mrf.mxu0
        %3662 = vmatprep.mubr.f32.mxu0 %v3379
        %3663 = vmatmul.mubr.f32.gmra.mxu0 %v3378
        %v3664 = vpop.f32.mrf.mxu0
        %v3665 = vadd.f32 %v3560, %v3664
        %v3666 = vpop.f32.mrf.mxu0
        %3667 = vmatprep.mubr.f32.mxu0 %v3395
        %3668 = vmatmul.mubr.f32.gmra.mxu0 %v3394
        %v3669 = vpop.f32.mrf.mxu0
        %v3670 = vadd.f32 %v3565, %v3669
        %v3671 = vpop.f32.mrf.mxu0
        %3672 = vmatprep.mubr.f32.mxu0 %v3411
        %3673 = vmatmul.mubr.f32.gmra.mxu0 %v3410
        %v3674 = vpop.f32.mrf.mxu0
        %v3675 = vadd.f32 %v3570, %v3674
        %v3676 = vpop.f32.mrf.mxu0
        %3677 = vmatprep.mubr.f32.mxu0 %v3427
        %3678 = vmatmul.mubr.f32.gmra.mxu0 %v3426
        %v3679 = vpop.f32.mrf.mxu0
        %v3680 = vadd.f32 %v3575, %v3679
        %v3681 = vpop.f32.mrf.mxu0
        %3682 = vmatprep.mubr.f32.mxu0 %v3443
        %3683 = vmatmul.mubr.f32.gmra.mxu0 %v3442
        %v3684 = vpop.f32.mrf.mxu0
        %v3685 = vadd.f32 %v3580, %v3684
        %v3686 = vpop.f32.mrf.mxu0
        %3687 = vmatprep.mubr.f32.mxu0 %v3459
        %3688 = vmatmul.mubr.f32.gmra.mxu0 %v3458
        %v3689 = vpop.f32.mrf.mxu0
        %v3690 = vadd.f32 %v3585, %v3689
        %v3691 = vpop.f32.mrf.mxu0
        %3692 = vmatprep.mubr.f32.mxu0 %v3475
        %3693 = vmatmul.mubr.f32.gmra.mxu0 %v3474
        %v3694 = vpop.f32.mrf.mxu0
        %v3695 = vadd.f32 %v3590, %v3694
        %v3696 = vpop.f32.mrf.mxu0
        %3697 = vdwg.mxu0
        %3698 = vmatprep.subr.mxu0 0.0
        %3699 = vmatpush1.msra.mxu0 %v1150
        %3700 = vmatprep.subr.mxu0 0.0
        %3701 = vmatpush1.msra.mxu0 %v1149
        %3702 = vmatprep.subr.mxu0 0.0
        %3703 = vmatpush1.msra.mxu0 %v1148
        %3704 = vmatprep.subr.mxu0 0.0
        %3705 = vmatpush1.msra.mxu0 %v1147
        %3706 = vmatprep.subr.mxu0 0.0
        %3707 = vmatpush1.msra.mxu0 %v1146
        %3708 = vmatprep.subr.mxu0 0.0
        %3709 = vmatpush1.msra.mxu0 %v1145
        %3710 = vmatprep.subr.mxu0 0.0
        %3711 = vmatpush1.msra.mxu0 %v1144
        %3712 = vmatprep.subr.mxu0 0.0
        %3713 = vmatpush1.msra.mxu0 %v1143
        %3714 = vmatprep.subr.mxu0 0.0
        %3715 = vmatpush1.msra.mxu0 %v1142
        %3716 = vmatprep.subr.mxu0 0.0
        %3717 = vmatpush1.msra.mxu0 %v1141
        %3718 = vmatprep.subr.mxu0 0.0
        %3719 = vmatpush1.msra.mxu0 %v1140
        %3720 = vmatprep.subr.mxu0 0.0
        %3721 = vmatpush1.msra.mxu0 %v1139
        %3722 = vmatprep.subr.mxu0 0.0
        %3723 = vmatpush1.msra.mxu0 %v1138
        %3724 = vmatprep.subr.mxu0 0.0
        %3725 = vmatpush1.msra.mxu0 %v1137
        %3726 = vmatprep.subr.mxu0 0.0
        %3727 = vmatpush1.msra.mxu0 %v1136
        %3728 = vmatprep.subr.mxu0 0.0
        %3729 = vmatpush1.msra.mxu0 %v1135
        %3730 = vmatprep.subr.mxu0 0.0
        %3731 = vmatpush2.msra.mxu0 %v1166
        %3732 = vmatprep.subr.mxu0 0.0
        %3733 = vmatpush2.msra.mxu0 %v1165
        %3734 = vmatprep.subr.mxu0 0.0
        %3735 = vmatpush2.msra.mxu0 %v1164
        %3736 = vmatprep.subr.mxu0 0.0
        %3737 = vmatpush2.msra.mxu0 %v1163
        %3738 = vmatprep.subr.mxu0 0.0
        %3739 = vmatpush2.msra.mxu0 %v1162
        %3740 = vmatprep.subr.mxu0 0.0
        %3741 = vmatpush2.msra.mxu0 %v1161
        %3742 = vmatprep.subr.mxu0 0.0
        %3743 = vmatpush2.msra.mxu0 %v1160
        %3744 = vmatprep.subr.mxu0 0.0
        %3745 = vmatpush2.msra.mxu0 %v1159
        %3746 = vmatprep.subr.mxu0 0.0
        %3747 = vmatpush2.msra.mxu0 %v1158
        %3748 = vmatprep.subr.mxu0 0.0
        %3749 = vmatpush2.msra.mxu0 %v1157
        %3750 = vmatprep.subr.mxu0 0.0
        %3751 = vmatpush2.msra.mxu0 %v1156
        %3752 = vmatprep.subr.mxu0 0.0
        %3753 = vmatpush2.msra.mxu0 %v1155
        %3754 = vmatprep.subr.mxu0 0.0
        %3755 = vmatpush2.msra.mxu0 %v1154
        %3756 = vmatprep.subr.mxu0 0.0
        %3757 = vmatpush2.msra.mxu0 %v1153
        %3758 = vmatprep.subr.mxu0 0.0
        %3759 = vmatpush2.msra.mxu0 %v1152
        %3760 = vmatprep.subr.mxu0 0.0
        %3761 = vmatpush2.msra.mxu0 %v1151
        %3762 = vmatprep.mubr.f32.mxu0 %v3365
        %3763 = vmatmul.mubr.f32.gmra.mxu0 %v3364
        %v3764 = vpop.f32.mrf.mxu0
        %v3765 = vadd.f32 %v3660, %v3764
        %v3766 = vpop.f32.mrf.mxu0
        %3767 = vmatprep.mubr.f32.mxu0 %v3381
        %3768 = vmatmul.mubr.f32.gmra.mxu0 %v3380
        %v3769 = vpop.f32.mrf.mxu0
        %v3770 = vadd.f32 %v3665, %v3769
        %v3771 = vpop.f32.mrf.mxu0
        %3772 = vmatprep.mubr.f32.mxu0 %v3397
        %3773 = vmatmul.mubr.f32.gmra.mxu0 %v3396
        %v3774 = vpop.f32.mrf.mxu0
        %v3775 = vadd.f32 %v3670, %v3774
        %v3776 = vpop.f32.mrf.mxu0
        %3777 = vmatprep.mubr.f32.mxu0 %v3413
        %3778 = vmatmul.mubr.f32.gmra.mxu0 %v3412
        %v3779 = vpop.f32.mrf.mxu0
        %v3780 = vadd.f32 %v3675, %v3779
        %v3781 = vpop.f32.mrf.mxu0
        %3782 = vmatprep.mubr.f32.mxu0 %v3429
        %3783 = vmatmul.mubr.f32.gmra.mxu0 %v3428
        %v3784 = vpop.f32.mrf.mxu0
        %v3785 = vadd.f32 %v3680, %v3784
        %v3786 = vpop.f32.mrf.mxu0
        %3787 = vmatprep.mubr.f32.mxu0 %v3445
        %3788 = vmatmul.mubr.f32.gmra.mxu0 %v3444
        %v3789 = vpop.f32.mrf.mxu0
        %v3790 = vadd.f32 %v3685, %v3789
        %v3791 = vpop.f32.mrf.mxu0
        %3792 = vmatprep.mubr.f32.mxu0 %v3461
        %3793 = vmatmul.mubr.f32.gmra.mxu0 %v3460
        %v3794 = vpop.f32.mrf.mxu0
        %v3795 = vadd.f32 %v3690, %v3794
        %v3796 = vpop.f32.mrf.mxu0
        %3797 = vmatprep.mubr.f32.mxu0 %v3477
        %3798 = vmatmul.mubr.f32.gmra.mxu0 %v3476
        %v3799 = vpop.f32.mrf.mxu0
        %v3800 = vadd.f32 %v3695, %v3799
        %v3801 = vpop.f32.mrf.mxu0
        %3802 = vdwg.mxu0
        %3803 = vmatprep.subr.mxu0 0.0
        %3804 = vmatpush1.msra.mxu0 %v1182
        %3805 = vmatprep.subr.mxu0 0.0
        %3806 = vmatpush1.msra.mxu0 %v1181
        %3807 = vmatprep.subr.mxu0 0.0
        %3808 = vmatpush1.msra.mxu0 %v1180
        %3809 = vmatprep.subr.mxu0 0.0
        %3810 = vmatpush1.msra.mxu0 %v1179
        %3811 = vmatprep.subr.mxu0 0.0
        %3812 = vmatpush1.msra.mxu0 %v1178
        %3813 = vmatprep.subr.mxu0 0.0
        %3814 = vmatpush1.msra.mxu0 %v1177
        %3815 = vmatprep.subr.mxu0 0.0
        %3816 = vmatpush1.msra.mxu0 %v1176
        %3817 = vmatprep.subr.mxu0 0.0
        %3818 = vmatpush1.msra.mxu0 %v1175
        %3819 = vmatprep.subr.mxu0 0.0
        %3820 = vmatpush1.msra.mxu0 %v1174
        %3821 = vmatprep.subr.mxu0 0.0
        %3822 = vmatpush1.msra.mxu0 %v1173
        %3823 = vmatprep.subr.mxu0 0.0
        %3824 = vmatpush1.msra.mxu0 %v1172
        %3825 = vmatprep.subr.mxu0 0.0
        %3826 = vmatpush1.msra.mxu0 %v1171
        %3827 = vmatprep.subr.mxu0 0.0
        %3828 = vmatpush1.msra.mxu0 %v1170
        %3829 = vmatprep.subr.mxu0 0.0
        %3830 = vmatpush1.msra.mxu0 %v1169
        %3831 = vmatprep.subr.mxu0 0.0
        %3832 = vmatpush1.msra.mxu0 %v1168
        %3833 = vmatprep.subr.mxu0 0.0
        %3834 = vmatpush1.msra.mxu0 %v1167
        %3835 = vmatprep.subr.mxu0 0.0
        %3836 = vmatpush2.msra.mxu0 %v1198
        %3837 = vmatprep.subr.mxu0 0.0
        %3838 = vmatpush2.msra.mxu0 %v1197
        %3839 = vmatprep.subr.mxu0 0.0
        %3840 = vmatpush2.msra.mxu0 %v1196
        %3841 = vmatprep.subr.mxu0 0.0
        %3842 = vmatpush2.msra.mxu0 %v1195
        %3843 = vmatprep.subr.mxu0 0.0
        %3844 = vmatpush2.msra.mxu0 %v1194
        %3845 = vmatprep.subr.mxu0 0.0
        %3846 = vmatpush2.msra.mxu0 %v1193
        %3847 = vmatprep.subr.mxu0 0.0
        %3848 = vmatpush2.msra.mxu0 %v1192
        %3849 = vmatprep.subr.mxu0 0.0
        %3850 = vmatpush2.msra.mxu0 %v1191
        %3851 = vmatprep.subr.mxu0 0.0
        %3852 = vmatpush2.msra.mxu0 %v1190
        %3853 = vmatprep.subr.mxu0 0.0
        %3854 = vmatpush2.msra.mxu0 %v1189
        %3855 = vmatprep.subr.mxu0 0.0
        %3856 = vmatpush2.msra.mxu0 %v1188
        %3857 = vmatprep.subr.mxu0 0.0
        %3858 = vmatpush2.msra.mxu0 %v1187
        %3859 = vmatprep.subr.mxu0 0.0
        %3860 = vmatpush2.msra.mxu0 %v1186
        %3861 = vmatprep.subr.mxu0 0.0
        %3862 = vmatpush2.msra.mxu0 %v1185
        %3863 = vmatprep.subr.mxu0 0.0
        %3864 = vmatpush2.msra.mxu0 %v1184
        %3865 = vmatprep.subr.mxu0 0.0
        %3866 = vmatpush2.msra.mxu0 %v1183
        %3867 = vmatprep.mubr.f32.mxu0 %v3367
        %3868 = vmatmul.mubr.f32.gmra.mxu0 %v3366
        %v3869 = vpop.f32.mrf.mxu0
        %v3870 = vadd.f32 %v3765, %v3869
        %v3871 = vpop.f32.mrf.mxu0
        %3872 = vmatprep.mubr.f32.mxu0 %v3383
        %3873 = vmatmul.mubr.f32.gmra.mxu0 %v3382
        %v3874 = vpop.f32.mrf.mxu0
        %v3875 = vadd.f32 %v3770, %v3874
        %v3876 = vpop.f32.mrf.mxu0
        %3877 = vmatprep.mubr.f32.mxu0 %v3399
        %3878 = vmatmul.mubr.f32.gmra.mxu0 %v3398
        %v3879 = vpop.f32.mrf.mxu0
        %v3880 = vadd.f32 %v3775, %v3879
        %v3881 = vpop.f32.mrf.mxu0
        %3882 = vmatprep.mubr.f32.mxu0 %v3415
        %3883 = vmatmul.mubr.f32.gmra.mxu0 %v3414
        %v3884 = vpop.f32.mrf.mxu0
        %v3885 = vadd.f32 %v3780, %v3884
        %v3886 = vpop.f32.mrf.mxu0
        %3887 = vmatprep.mubr.f32.mxu0 %v3431
        %3888 = vmatmul.mubr.f32.gmra.mxu0 %v3430
        %v3889 = vpop.f32.mrf.mxu0
        %v3890 = vadd.f32 %v3785, %v3889
        %v3891 = vpop.f32.mrf.mxu0
        %3892 = vmatprep.mubr.f32.mxu0 %v3447
        %3893 = vmatmul.mubr.f32.gmra.mxu0 %v3446
        %v3894 = vpop.f32.mrf.mxu0
        %v3895 = vadd.f32 %v3790, %v3894
        %v3896 = vpop.f32.mrf.mxu0
        %3897 = vmatprep.mubr.f32.mxu0 %v3463
        %3898 = vmatmul.mubr.f32.gmra.mxu0 %v3462
        %v3899 = vpop.f32.mrf.mxu0
        %v3900 = vadd.f32 %v3795, %v3899
        %v3901 = vpop.f32.mrf.mxu0
        %3902 = vmatprep.mubr.f32.mxu0 %v3479
        %3903 = vmatmul.mubr.f32.gmra.mxu0 %v3478
        %v3904 = vpop.f32.mrf.mxu0
        %v3905 = vadd.f32 %v3800, %v3904
        %v3906 = vpop.f32.mrf.mxu0
        %3907 = vdwg.mxu0
        %3908 = vmatprep.subr.mxu0 0.0
        %3909 = vmatpush1.msra.mxu0 %v1214
        %3910 = vmatprep.subr.mxu0 0.0
        %3911 = vmatpush1.msra.mxu0 %v1213
        %3912 = vmatprep.subr.mxu0 0.0
        %3913 = vmatpush1.msra.mxu0 %v1212
        %3914 = vmatprep.subr.mxu0 0.0
        %3915 = vmatpush1.msra.mxu0 %v1211
        %3916 = vmatprep.subr.mxu0 0.0
        %3917 = vmatpush1.msra.mxu0 %v1210
        %3918 = vmatprep.subr.mxu0 0.0
        %3919 = vmatpush1.msra.mxu0 %v1209
        %3920 = vmatprep.subr.mxu0 0.0
        %3921 = vmatpush1.msra.mxu0 %v1208
        %3922 = vmatprep.subr.mxu0 0.0
        %3923 = vmatpush1.msra.mxu0 %v1207
        %3924 = vmatprep.subr.mxu0 0.0
        %3925 = vmatpush1.msra.mxu0 %v1206
        %3926 = vmatprep.subr.mxu0 0.0
        %3927 = vmatpush1.msra.mxu0 %v1205
        %3928 = vmatprep.subr.mxu0 0.0
        %3929 = vmatpush1.msra.mxu0 %v1204
        %3930 = vmatprep.subr.mxu0 0.0
        %3931 = vmatpush1.msra.mxu0 %v1203
        %3932 = vmatprep.subr.mxu0 0.0
        %3933 = vmatpush1.msra.mxu0 %v1202
        %3934 = vmatprep.subr.mxu0 0.0
        %3935 = vmatpush1.msra.mxu0 %v1201
        %3936 = vmatprep.subr.mxu0 0.0
        %3937 = vmatpush1.msra.mxu0 %v1200
        %3938 = vmatprep.subr.mxu0 0.0
        %3939 = vmatpush1.msra.mxu0 %v1199
        %3940 = vmatprep.subr.mxu0 0.0
        %3941 = vmatpush2.msra.mxu0 %v1230
        %3942 = vmatprep.subr.mxu0 0.0
        %3943 = vmatpush2.msra.mxu0 %v1229
        %3944 = vmatprep.subr.mxu0 0.0
        %3945 = vmatpush2.msra.mxu0 %v1228
        %3946 = vmatprep.subr.mxu0 0.0
        %3947 = vmatpush2.msra.mxu0 %v1227
        %3948 = vmatprep.subr.mxu0 0.0
        %3949 = vmatpush2.msra.mxu0 %v1226
        %3950 = vmatprep.subr.mxu0 0.0
        %3951 = vmatpush2.msra.mxu0 %v1225
        %3952 = vmatprep.subr.mxu0 0.0
        %3953 = vmatpush2.msra.mxu0 %v1224
        %3954 = vmatprep.subr.mxu0 0.0
        %3955 = vmatpush2.msra.mxu0 %v1223
        %3956 = vmatprep.subr.mxu0 0.0
        %3957 = vmatpush2.msra.mxu0 %v1222
        %3958 = vmatprep.subr.mxu0 0.0
        %3959 = vmatpush2.msra.mxu0 %v1221
        %3960 = vmatprep.subr.mxu0 0.0
        %3961 = vmatpush2.msra.mxu0 %v1220
        %3962 = vmatprep.subr.mxu0 0.0
        %3963 = vmatpush2.msra.mxu0 %v1219
        %3964 = vmatprep.subr.mxu0 0.0
        %3965 = vmatpush2.msra.mxu0 %v1218
        %3966 = vmatprep.subr.mxu0 0.0
        %3967 = vmatpush2.msra.mxu0 %v1217
        %3968 = vmatprep.subr.mxu0 0.0
        %3969 = vmatpush2.msra.mxu0 %v1216
        %3970 = vmatprep.subr.mxu0 0.0
        %3971 = vmatpush2.msra.mxu0 %v1215
        %3972 = vmatprep.mubr.f32.mxu0 %v3369
        %3973 = vmatmul.mubr.f32.gmra.mxu0 %v3368
        %v3974 = vpop.f32.mrf.mxu0
        %v3975 = vadd.f32 %v3870, %v3974
        %v3976 = vpop.f32.mrf.mxu0
        %3977 = vmatprep.mubr.f32.mxu0 %v3385
        %3978 = vmatmul.mubr.f32.gmra.mxu0 %v3384
        %v3979 = vpop.f32.mrf.mxu0
        %v3980 = vadd.f32 %v3875, %v3979
        %v3981 = vpop.f32.mrf.mxu0
        %3982 = vmatprep.mubr.f32.mxu0 %v3401
        %3983 = vmatmul.mubr.f32.gmra.mxu0 %v3400
        %v3984 = vpop.f32.mrf.mxu0
        %v3985 = vadd.f32 %v3880, %v3984
        %v3986 = vpop.f32.mrf.mxu0
        %3987 = vmatprep.mubr.f32.mxu0 %v3417
        %3988 = vmatmul.mubr.f32.gmra.mxu0 %v3416
        %v3989 = vpop.f32.mrf.mxu0
        %v3990 = vadd.f32 %v3885, %v3989
        %v3991 = vpop.f32.mrf.mxu0
        %3992 = vmatprep.mubr.f32.mxu0 %v3433
        %3993 = vmatmul.mubr.f32.gmra.mxu0 %v3432
        %v3994 = vpop.f32.mrf.mxu0
        %v3995 = vadd.f32 %v3890, %v3994
        %v3996 = vpop.f32.mrf.mxu0
        %3997 = vmatprep.mubr.f32.mxu0 %v3449
        %3998 = vmatmul.mubr.f32.gmra.mxu0 %v3448
        %v3999 = vpop.f32.mrf.mxu0
        %v4000 = vadd.f32 %v3895, %v3999
        %v4001 = vpop.f32.mrf.mxu0
        %4002 = vmatprep.mubr.f32.mxu0 %v3465
        %4003 = vmatmul.mubr.f32.gmra.mxu0 %v3464
        %v4004 = vpop.f32.mrf.mxu0
        %v4005 = vadd.f32 %v3900, %v4004
        %v4006 = vpop.f32.mrf.mxu0
        %4007 = vmatprep.mubr.f32.mxu0 %v3481
        %4008 = vmatmul.mubr.f32.gmra.mxu0 %v3480
        %v4009 = vpop.f32.mrf.mxu0
        %v4010 = vadd.f32 %v3905, %v4009
        %v4011 = vpop.f32.mrf.mxu0
        %4012 = vdwg.mxu0
        %4013 = vmatprep.subr.mxu0 0.0
        %4014 = vmatpush1.msra.mxu0 %v1246
        %4015 = vmatprep.subr.mxu0 0.0
        %4016 = vmatpush1.msra.mxu0 %v1245
        %4017 = vmatprep.subr.mxu0 0.0
        %4018 = vmatpush1.msra.mxu0 %v1244
        %4019 = vmatprep.subr.mxu0 0.0
        %4020 = vmatpush1.msra.mxu0 %v1243
        %4021 = vmatprep.subr.mxu0 0.0
        %4022 = vmatpush1.msra.mxu0 %v1242
        %4023 = vmatprep.subr.mxu0 0.0
        %4024 = vmatpush1.msra.mxu0 %v1241
        %4025 = vmatprep.subr.mxu0 0.0
        %4026 = vmatpush1.msra.mxu0 %v1240
        %4027 = vmatprep.subr.mxu0 0.0
        %4028 = vmatpush1.msra.mxu0 %v1239
        %4029 = vmatprep.subr.mxu0 0.0
        %4030 = vmatpush1.msra.mxu0 %v1238
        %4031 = vmatprep.subr.mxu0 0.0
        %4032 = vmatpush1.msra.mxu0 %v1237
        %4033 = vmatprep.subr.mxu0 0.0
        %4034 = vmatpush1.msra.mxu0 %v1236
        %4035 = vmatprep.subr.mxu0 0.0
        %4036 = vmatpush1.msra.mxu0 %v1235
        %4037 = vmatprep.subr.mxu0 0.0
        %4038 = vmatpush1.msra.mxu0 %v1234
        %4039 = vmatprep.subr.mxu0 0.0
        %4040 = vmatpush1.msra.mxu0 %v1233
        %4041 = vmatprep.subr.mxu0 0.0
        %4042 = vmatpush1.msra.mxu0 %v1232
        %4043 = vmatprep.subr.mxu0 0.0
        %4044 = vmatpush1.msra.mxu0 %v1231
        %4045 = vmatprep.subr.mxu0 0.0
        %4046 = vmatpush2.msra.mxu0 %v1262
        %4047 = vmatprep.subr.mxu0 0.0
        %4048 = vmatpush2.msra.mxu0 %v1261
        %4049 = vmatprep.subr.mxu0 0.0
        %4050 = vmatpush2.msra.mxu0 %v1260
        %4051 = vmatprep.subr.mxu0 0.0
        %4052 = vmatpush2.msra.mxu0 %v1259
        %4053 = vmatprep.subr.mxu0 0.0
        %4054 = vmatpush2.msra.mxu0 %v1258
        %4055 = vmatprep.subr.mxu0 0.0
        %4056 = vmatpush2.msra.mxu0 %v1257
        %4057 = vmatprep.subr.mxu0 0.0
        %4058 = vmatpush2.msra.mxu0 %v1256
        %4059 = vmatprep.subr.mxu0 0.0
        %4060 = vmatpush2.msra.mxu0 %v1255
        %4061 = vmatprep.subr.mxu0 0.0
        %4062 = vmatpush2.msra.mxu0 %v1254
        %4063 = vmatprep.subr.mxu0 0.0
        %4064 = vmatpush2.msra.mxu0 %v1253
        %4065 = vmatprep.subr.mxu0 0.0
        %4066 = vmatpush2.msra.mxu0 %v1252
        %4067 = vmatprep.subr.mxu0 0.0
        %4068 = vmatpush2.msra.mxu0 %v1251
        %4069 = vmatprep.subr.mxu0 0.0
        %4070 = vmatpush2.msra.mxu0 %v1250
        %4071 = vmatprep.subr.mxu0 0.0
        %4072 = vmatpush2.msra.mxu0 %v1249
        %4073 = vmatprep.subr.mxu0 0.0
        %4074 = vmatpush2.msra.mxu0 %v1248
        %4075 = vmatprep.subr.mxu0 0.0
        %4076 = vmatpush2.msra.mxu0 %v1247
        %4077 = vmatprep.mubr.f32.mxu0 %v3371
        %4078 = vmatmul.mubr.f32.gmra.mxu0 %v3370
        %v4079 = vpop.f32.mrf.mxu0
        %v4080 = vadd.f32 %v3975, %v4079
        %v4081 = vpop.f32.mrf.mxu0
        %4082 = vmatprep.mubr.f32.mxu0 %v3387
        %4083 = vmatmul.mubr.f32.gmra.mxu0 %v3386
        %v4084 = vpop.f32.mrf.mxu0
        %v4085 = vadd.f32 %v3980, %v4084
        %v4086 = vpop.f32.mrf.mxu0
        %4087 = vmatprep.mubr.f32.mxu0 %v3403
        %4088 = vmatmul.mubr.f32.gmra.mxu0 %v3402
        %v4089 = vpop.f32.mrf.mxu0
        %v4090 = vadd.f32 %v3985, %v4089
        %v4091 = vpop.f32.mrf.mxu0
        %4092 = vmatprep.mubr.f32.mxu0 %v3419
        %4093 = vmatmul.mubr.f32.gmra.mxu0 %v3418
        %v4094 = vpop.f32.mrf.mxu0
        %v4095 = vadd.f32 %v3990, %v4094
        %v4096 = vpop.f32.mrf.mxu0
        %4097 = vmatprep.mubr.f32.mxu0 %v3435
        %4098 = vmatmul.mubr.f32.gmra.mxu0 %v3434
        %v4099 = vpop.f32.mrf.mxu0
        %v4100 = vadd.f32 %v3995, %v4099
        %v4101 = vpop.f32.mrf.mxu0
        %4102 = vmatprep.mubr.f32.mxu0 %v3451
        %4103 = vmatmul.mubr.f32.gmra.mxu0 %v3450
        %v4104 = vpop.f32.mrf.mxu0
        %v4105 = vadd.f32 %v4000, %v4104
        %v4106 = vpop.f32.mrf.mxu0
        %4107 = vmatprep.mubr.f32.mxu0 %v3467
        %4108 = vmatmul.mubr.f32.gmra.mxu0 %v3466
        %v4109 = vpop.f32.mrf.mxu0
        %v4110 = vadd.f32 %v4005, %v4109
        %v4111 = vpop.f32.mrf.mxu0
        %4112 = vmatprep.mubr.f32.mxu0 %v3483
        %4113 = vmatmul.mubr.f32.gmra.mxu0 %v3482
        %v4114 = vpop.f32.mrf.mxu0
        %v4115 = vadd.f32 %v4010, %v4114
        %v4116 = vpop.f32.mrf.mxu0
        %4117 = vdwg.mxu0
        %4118 = vmatprep.subr.mxu0 0.0
        %4119 = vmatpush1.msra.mxu0 %v1278
        %4120 = vmatprep.subr.mxu0 0.0
        %4121 = vmatpush1.msra.mxu0 %v1277
        %4122 = vmatprep.subr.mxu0 0.0
        %4123 = vmatpush1.msra.mxu0 %v1276
        %4124 = vmatprep.subr.mxu0 0.0
        %4125 = vmatpush1.msra.mxu0 %v1275
        %4126 = vmatprep.subr.mxu0 0.0
        %4127 = vmatpush1.msra.mxu0 %v1274
        %4128 = vmatprep.subr.mxu0 0.0
        %4129 = vmatpush1.msra.mxu0 %v1273
        %4130 = vmatprep.subr.mxu0 0.0
        %4131 = vmatpush1.msra.mxu0 %v1272
        %4132 = vmatprep.subr.mxu0 0.0
        %4133 = vmatpush1.msra.mxu0 %v1271
        %4134 = vmatprep.subr.mxu0 0.0
        %4135 = vmatpush1.msra.mxu0 %v1270
        %4136 = vmatprep.subr.mxu0 0.0
        %4137 = vmatpush1.msra.mxu0 %v1269
        %4138 = vmatprep.subr.mxu0 0.0
        %4139 = vmatpush1.msra.mxu0 %v1268
        %4140 = vmatprep.subr.mxu0 0.0
        %4141 = vmatpush1.msra.mxu0 %v1267
        %4142 = vmatprep.subr.mxu0 0.0
        %4143 = vmatpush1.msra.mxu0 %v1266
        %4144 = vmatprep.subr.mxu0 0.0
        %4145 = vmatpush1.msra.mxu0 %v1265
        %4146 = vmatprep.subr.mxu0 0.0
        %4147 = vmatpush1.msra.mxu0 %v1264
        %4148 = vmatprep.subr.mxu0 0.0
        %4149 = vmatpush1.msra.mxu0 %v1263
        %4150 = vmatprep.subr.mxu0 0.0
        %4151 = vmatpush2.msra.mxu0 %v1294
        %4152 = vmatprep.subr.mxu0 0.0
        %4153 = vmatpush2.msra.mxu0 %v1293
        %4154 = vmatprep.subr.mxu0 0.0
        %4155 = vmatpush2.msra.mxu0 %v1292
        %4156 = vmatprep.subr.mxu0 0.0
        %4157 = vmatpush2.msra.mxu0 %v1291
        %4158 = vmatprep.subr.mxu0 0.0
        %4159 = vmatpush2.msra.mxu0 %v1290
        %4160 = vmatprep.subr.mxu0 0.0
        %4161 = vmatpush2.msra.mxu0 %v1289
        %4162 = vmatprep.subr.mxu0 0.0
        %4163 = vmatpush2.msra.mxu0 %v1288
        %4164 = vmatprep.subr.mxu0 0.0
        %4165 = vmatpush2.msra.mxu0 %v1287
        %4166 = vmatprep.subr.mxu0 0.0
        %4167 = vmatpush2.msra.mxu0 %v1286
        %4168 = vmatprep.subr.mxu0 0.0
        %4169 = vmatpush2.msra.mxu0 %v1285
        %4170 = vmatprep.subr.mxu0 0.0
        %4171 = vmatpush2.msra.mxu0 %v1284
        %4172 = vmatprep.subr.mxu0 0.0
        %4173 = vmatpush2.msra.mxu0 %v1283
        %4174 = vmatprep.subr.mxu0 0.0
        %4175 = vmatpush2.msra.mxu0 %v1282
        %4176 = vmatprep.subr.mxu0 0.0
        %4177 = vmatpush2.msra.mxu0 %v1281
        %4178 = vmatprep.subr.mxu0 0.0
        %4179 = vmatpush2.msra.mxu0 %v1280
        %4180 = vmatprep.subr.mxu0 0.0
        %4181 = vmatpush2.msra.mxu0 %v1279
        %4182 = vmatprep.mubr.f32.mxu0 %v3373
        %4183 = vmatmul.mubr.f32.gmra.mxu0 %v3372
        %v4184 = vpop.f32.mrf.mxu0
        %v4185 = vadd.f32 %v4080, %v4184
        %v4186 = vpop.f32.mrf.mxu0
        %4187 = vmatprep.mubr.f32.mxu0 %v3389
        %4188 = vmatmul.mubr.f32.gmra.mxu0 %v3388
        %v4189 = vpop.f32.mrf.mxu0
        %v4190 = vadd.f32 %v4085, %v4189
        %v4191 = vpop.f32.mrf.mxu0
        %4192 = vmatprep.mubr.f32.mxu0 %v3405
        %4193 = vmatmul.mubr.f32.gmra.mxu0 %v3404
        %v4194 = vpop.f32.mrf.mxu0
        %v4195 = vadd.f32 %v4090, %v4194
        %v4196 = vpop.f32.mrf.mxu0
        %4197 = vmatprep.mubr.f32.mxu0 %v3421
        %4198 = vmatmul.mubr.f32.gmra.mxu0 %v3420
        %v4199 = vpop.f32.mrf.mxu0
        %v4200 = vadd.f32 %v4095, %v4199
        %v4201 = vpop.f32.mrf.mxu0
        %4202 = vmatprep.mubr.f32.mxu0 %v3437
        %4203 = vmatmul.mubr.f32.gmra.mxu0 %v3436
        %v4204 = vpop.f32.mrf.mxu0
        %v4205 = vadd.f32 %v4100, %v4204
        %v4206 = vpop.f32.mrf.mxu0
        %4207 = vmatprep.mubr.f32.mxu0 %v3453
        %4208 = vmatmul.mubr.f32.gmra.mxu0 %v3452
        %v4209 = vpop.f32.mrf.mxu0
        %v4210 = vadd.f32 %v4105, %v4209
        %v4211 = vpop.f32.mrf.mxu0
        %4212 = vmatprep.mubr.f32.mxu0 %v3469
        %4213 = vmatmul.mubr.f32.gmra.mxu0 %v3468
        %v4214 = vpop.f32.mrf.mxu0
        %v4215 = vadd.f32 %v4110, %v4214
        %v4216 = vpop.f32.mrf.mxu0
        %4217 = vmatprep.mubr.f32.mxu0 %v3485
        %4218 = vmatmul.mubr.f32.gmra.mxu0 %v3484
        %v4219 = vpop.f32.mrf.mxu0
        %v4220 = vadd.f32 %v4115, %v4219
        %v4221 = vpop.f32.mrf.mxu0
        %4222 = vdwg.mxu0
        %4223 = vmatprep.subr.mxu0 0.0
        %4224 = vmatpush1.msra.mxu0 %v1310
        %4225 = vmatprep.subr.mxu0 0.0
        %4226 = vmatpush1.msra.mxu0 %v1309
        %4227 = vmatprep.subr.mxu0 0.0
        %4228 = vmatpush1.msra.mxu0 %v1308
        %4229 = vmatprep.subr.mxu0 0.0
        %4230 = vmatpush1.msra.mxu0 %v1307
        %4231 = vmatprep.subr.mxu0 0.0
        %4232 = vmatpush1.msra.mxu0 %v1306
        %4233 = vmatprep.subr.mxu0 0.0
        %4234 = vmatpush1.msra.mxu0 %v1305
        %4235 = vmatprep.subr.mxu0 0.0
        %4236 = vmatpush1.msra.mxu0 %v1304
        %4237 = vmatprep.subr.mxu0 0.0
        %4238 = vmatpush1.msra.mxu0 %v1303
        %4239 = vmatprep.subr.mxu0 0.0
        %4240 = vmatpush1.msra.mxu0 %v1302
        %4241 = vmatprep.subr.mxu0 0.0
        %4242 = vmatpush1.msra.mxu0 %v1301
        %4243 = vmatprep.subr.mxu0 0.0
        %4244 = vmatpush1.msra.mxu0 %v1300
        %4245 = vmatprep.subr.mxu0 0.0
        %4246 = vmatpush1.msra.mxu0 %v1299
        %4247 = vmatprep.subr.mxu0 0.0
        %4248 = vmatpush1.msra.mxu0 %v1298
        %4249 = vmatprep.subr.mxu0 0.0
        %4250 = vmatpush1.msra.mxu0 %v1297
        %4251 = vmatprep.subr.mxu0 0.0
        %4252 = vmatpush1.msra.mxu0 %v1296
        %4253 = vmatprep.subr.mxu0 0.0
        %4254 = vmatpush1.msra.mxu0 %v1295
        %4255 = vmatprep.subr.mxu0 0.0
        %4256 = vmatpush2.msra.mxu0 %v1326
        %4257 = vmatprep.subr.mxu0 0.0
        %4258 = vmatpush2.msra.mxu0 %v1325
        %4259 = vmatprep.subr.mxu0 0.0
        %4260 = vmatpush2.msra.mxu0 %v1324
        %4261 = vmatprep.subr.mxu0 0.0
        %4262 = vmatpush2.msra.mxu0 %v1323
        %4263 = vmatprep.subr.mxu0 0.0
        %4264 = vmatpush2.msra.mxu0 %v1322
        %4265 = vmatprep.subr.mxu0 0.0
        %4266 = vmatpush2.msra.mxu0 %v1321
        %4267 = vmatprep.subr.mxu0 0.0
        %4268 = vmatpush2.msra.mxu0 %v1320
        %4269 = vmatprep.subr.mxu0 0.0
        %4270 = vmatpush2.msra.mxu0 %v1319
        %4271 = vmatprep.subr.mxu0 0.0
        %4272 = vmatpush2.msra.mxu0 %v1318
        %4273 = vmatprep.subr.mxu0 0.0
        %4274 = vmatpush2.msra.mxu0 %v1317
        %4275 = vmatprep.subr.mxu0 0.0
        %4276 = vmatpush2.msra.mxu0 %v1316
        %4277 = vmatprep.subr.mxu0 0.0
        %4278 = vmatpush2.msra.mxu0 %v1315
        %4279 = vmatprep.subr.mxu0 0.0
        %4280 = vmatpush2.msra.mxu0 %v1314
        %4281 = vmatprep.subr.mxu0 0.0
        %4282 = vmatpush2.msra.mxu0 %v1313
        %4283 = vmatprep.subr.mxu0 0.0
        %4284 = vmatpush2.msra.mxu0 %v1312
        %4285 = vmatprep.subr.mxu0 0.0
        %4286 = vmatpush2.msra.mxu0 %v1311
        %4287 = vmatprep.mubr.f32.mxu0 %v3375
        %4288 = vmatmul.mubr.f32.gmra.mxu0 %v3374
        %v4289 = vpop.f32.mrf.mxu0
        %v4290 = vadd.f32 %v4185, %v4289
        %v4291 = vpop.f32.mrf.mxu0
        %4292 = vmatprep.mubr.f32.mxu0 %v3391
        %4293 = vmatmul.mubr.f32.gmra.mxu0 %v3390
        %v4294 = vpop.f32.mrf.mxu0
        %v4295 = vadd.f32 %v4190, %v4294
        %v4296 = vpop.f32.mrf.mxu0
        %4297 = vmatprep.mubr.f32.mxu0 %v3407
        %4298 = vmatmul.mubr.f32.gmra.mxu0 %v3406
        %v4299 = vpop.f32.mrf.mxu0
        %v4300 = vadd.f32 %v4195, %v4299
        %v4301 = vpop.f32.mrf.mxu0
        %4302 = vmatprep.mubr.f32.mxu0 %v3423
        %4303 = vmatmul.mubr.f32.gmra.mxu0 %v3422
        %v4304 = vpop.f32.mrf.mxu0
        %v4305 = vadd.f32 %v4200, %v4304
        %v4306 = vpop.f32.mrf.mxu0
        %4307 = vmatprep.mubr.f32.mxu0 %v3439
        %4308 = vmatmul.mubr.f32.gmra.mxu0 %v3438
        %v4309 = vpop.f32.mrf.mxu0
        %v4310 = vadd.f32 %v4205, %v4309
        %v4311 = vpop.f32.mrf.mxu0
        %4312 = vmatprep.mubr.f32.mxu0 %v3455
        %4313 = vmatmul.mubr.f32.gmra.mxu0 %v3454
        %v4314 = vpop.f32.mrf.mxu0
        %v4315 = vadd.f32 %v4210, %v4314
        %v4316 = vpop.f32.mrf.mxu0
        %4317 = vmatprep.mubr.f32.mxu0 %v3471
        %4318 = vmatmul.mubr.f32.gmra.mxu0 %v3470
        %v4319 = vpop.f32.mrf.mxu0
        %v4320 = vadd.f32 %v4215, %v4319
        %v4321 = vpop.f32.mrf.mxu0
        %4322 = vmatprep.mubr.f32.mxu0 %v3487
        %4323 = vmatmul.mubr.f32.gmra.mxu0 %v3486
        %v4324 = vpop.f32.mrf.mxu0
        %v4325 = vadd.f32 %v4220, %v4324
        %v4326 = vpop.f32.mrf.mxu0
        %4327 = vdwg.mxu0
        %v4328 = vmul.f32 %v4290, 0.03125
        %v4329 = vmul.f32 %v4295, 0.03125
        %v4330 = vmul.f32 %v4300, 0.03125
        %v4331 = vmul.f32 %v4305, 0.03125
        %v4332 = vmul.f32 %v4310, 0.03125
        %v4333 = vmul.f32 %v4315, 0.03125
        %v4334 = vmul.f32 %v4320, 0.03125
        %v4335 = vmul.f32 %v4325, 0.03125
        %v4336 = vadd.f32 %v4328, 1e-05
        %v4337 = vadd.f32 %v4329, 1e-05
        %v4338 = vadd.f32 %v4330, 1e-05
        %v4339 = vadd.f32 %v4331, 1e-05
        %v4340 = vadd.f32 %v4332, 1e-05
        %v4341 = vadd.f32 %v4333, 1e-05
        %v4342 = vadd.f32 %v4334, 1e-05
        %v4343 = vadd.f32 %v4335, 1e-05
        %v4344 = vrsqrt.pop %v4336
        %v4345 = vrsqrt.pop %v4337
        %v4346 = vrsqrt.pop %v4338
        %v4347 = vrsqrt.pop %v4339
        %v4348 = vrsqrt.pop %v4340
        %v4349 = vrsqrt.pop %v4341
        %v4350 = vrsqrt.pop %v4342
        %v4351 = vrsqrt.pop %v4343
        %v4353 = vsel %vm2303, %v4344, 0
        %v4356 = vsel %vm2303, %v4345, 0
        %v4359 = vsel %vm2303, %v4346, 0
        %v4362 = vsel %vm2303, %v4347, 0
        %v4365 = vsel %vm2303, %v4348, 0
        %v4368 = vsel %vm2303, %v4349, 0
        %v4371 = vsel %vm2303, %v4350, 0
        %v4374 = vsel %vm2303, %v4351, 0
        %4376 = vmatprep.subr.mxu0 0.0
        %4377 = vmatpush1.msra.mxu0 0.0
        %4378 = vmatprep.subr.mxu0 0.0
        %4379 = vmatpush1.msra.mxu0 0.0
        %4380 = vmatprep.subr.mxu0 0.0
        %4381 = vmatpush1.msra.mxu0 0.0
        %4382 = vmatprep.subr.mxu0 0.0
        %4383 = vmatpush1.msra.mxu0 0.0
        %4384 = vmatprep.subr.mxu0 0.0
        %4385 = vmatpush1.msra.mxu0 0.0
        %4386 = vmatprep.subr.mxu0 0.0
        %4387 = vmatpush1.msra.mxu0 0.0
        %4388 = vmatprep.subr.mxu0 0.0
        %4389 = vmatpush1.msra.mxu0 0.0
        %4390 = vmatprep.subr.mxu0 0.0
        %4391 = vmatpush1.msra.mxu0 0.0
        %4392 = vmatprep.subr.mxu0 %v1440
        %4393 = vmatpush1.msra.mxu0 %v1439
        %4394 = vmatprep.subr.mxu0 %v1424
        %4395 = vmatpush1.msra.mxu0 %v1423
        %4396 = vmatprep.subr.mxu0 %v1408
        %4397 = vmatpush1.msra.mxu0 %v1407
        %4398 = vmatprep.subr.mxu0 %v1392
        %4399 = vmatpush1.msra.mxu0 %v1391
        %4400 = vmatprep.subr.mxu0 %v1376
        %4401 = vmatpush1.msra.mxu0 %v1375
        %4402 = vmatprep.subr.mxu0 %v1360
        %4403 = vmatpush1.msra.mxu0 %v1359
        %4404 = vmatprep.subr.mxu0 %v1344
        %4405 = vmatpush1.msra.mxu0 %v1343
        %4406 = vmatprep.subr.mxu0 %v1328
        %4407 = vmatpush1.msra.mxu0 %v1327
        %4408 = vmatprep.subr.mxu0 0.0
        %4409 = vmatpush2.msra.mxu0 0.0
        %4410 = vmatprep.subr.mxu0 0.0
        %4411 = vmatpush2.msra.mxu0 0.0
        %4412 = vmatprep.subr.mxu0 0.0
        %4413 = vmatpush2.msra.mxu0 0.0
        %4414 = vmatprep.subr.mxu0 0.0
        %4415 = vmatpush2.msra.mxu0 0.0
        %4416 = vmatprep.subr.mxu0 0.0
        %4417 = vmatpush2.msra.mxu0 0.0
        %4418 = vmatprep.subr.mxu0 0.0
        %4419 = vmatpush2.msra.mxu0 0.0
        %4420 = vmatprep.subr.mxu0 0.0
        %4421 = vmatpush2.msra.mxu0 0.0
        %4422 = vmatprep.subr.mxu0 0.0
        %4423 = vmatpush2.msra.mxu0 0.0
        %4424 = vmatprep.subr.mxu0 0.0
        %4425 = vmatpush2.msra.mxu0 0.0
        %4426 = vmatprep.subr.mxu0 0.0
        %4427 = vmatpush2.msra.mxu0 0.0
        %4428 = vmatprep.subr.mxu0 0.0
        %4429 = vmatpush2.msra.mxu0 0.0
        %4430 = vmatprep.subr.mxu0 0.0
        %4431 = vmatpush2.msra.mxu0 0.0
        %4432 = vmatprep.subr.mxu0 0.0
        %4433 = vmatpush2.msra.mxu0 0.0
        %4434 = vmatprep.subr.mxu0 0.0
        %4435 = vmatpush2.msra.mxu0 0.0
        %4436 = vmatprep.subr.mxu0 0.0
        %4437 = vmatpush2.msra.mxu0 0.0
        %4438 = vmatprep.subr.mxu0 0.0
        %4439 = vmatpush2.msra.mxu0 0.0
        %4440 = vmatprep.mubr.f32.mxu0 0.0
        %4441 = vmatmul.mubr.f32.gmra.mxu0 %v4353
        %v4442 = vpop.f32.mrf.mxu0
        %v4443 = vadd.f32 0.0, %v4442
        %v4444 = vpop.f32.mrf.mxu0
        %v4445 = vadd.f32 0.0, %v4444
        %4446 = vmatprep.mubr.f32.mxu0 0.0
        %4447 = vmatmul.mubr.f32.gmra.mxu0 %v4356
        %v4448 = vpop.f32.mrf.mxu0
        %v4449 = vadd.f32 0.0, %v4448
        %v4450 = vpop.f32.mrf.mxu0
        %v4451 = vadd.f32 0.0, %v4450
        %4452 = vmatprep.mubr.f32.mxu0 0.0
        %4453 = vmatmul.mubr.f32.gmra.mxu0 %v4359
        %v4454 = vpop.f32.mrf.mxu0
        %v4455 = vadd.f32 0.0, %v4454
        %v4456 = vpop.f32.mrf.mxu0
        %v4457 = vadd.f32 0.0, %v4456
        %4458 = vmatprep.mubr.f32.mxu0 0.0
        %4459 = vmatmul.mubr.f32.gmra.mxu0 %v4362
        %v4460 = vpop.f32.mrf.mxu0
        %v4461 = vadd.f32 0.0, %v4460
        %v4462 = vpop.f32.mrf.mxu0
        %v4463 = vadd.f32 0.0, %v4462
        %4464 = vmatprep.mubr.f32.mxu0 0.0
        %4465 = vmatmul.mubr.f32.gmra.mxu0 %v4365
        %v4466 = vpop.f32.mrf.mxu0
        %v4467 = vadd.f32 0.0, %v4466
        %v4468 = vpop.f32.mrf.mxu0
        %v4469 = vadd.f32 0.0, %v4468
        %4470 = vmatprep.mubr.f32.mxu0 0.0
        %4471 = vmatmul.mubr.f32.gmra.mxu0 %v4368
        %v4472 = vpop.f32.mrf.mxu0
        %v4473 = vadd.f32 0.0, %v4472
        %v4474 = vpop.f32.mrf.mxu0
        %v4475 = vadd.f32 0.0, %v4474
        %4476 = vmatprep.mubr.f32.mxu0 0.0
        %4477 = vmatmul.mubr.f32.gmra.mxu0 %v4371
        %v4478 = vpop.f32.mrf.mxu0
        %v4479 = vadd.f32 0.0, %v4478
        %v4480 = vpop.f32.mrf.mxu0
        %v4481 = vadd.f32 0.0, %v4480
        %4482 = vmatprep.mubr.f32.mxu0 0.0
        %4483 = vmatmul.mubr.f32.gmra.mxu0 %v4374
        %v4484 = vpop.f32.mrf.mxu0
        %v4485 = vadd.f32 0.0, %v4484
        %v4486 = vpop.f32.mrf.mxu0
        %v4487 = vadd.f32 0.0, %v4486
        %4488 = vdwg.mxu0
        %4489 = vmatprep.subr.mxu0 0.0
        %4490 = vmatpush1.msra.mxu0 0.0
        %4491 = vmatprep.subr.mxu0 0.0
        %4492 = vmatpush1.msra.mxu0 0.0
        %4493 = vmatprep.subr.mxu0 0.0
        %4494 = vmatpush1.msra.mxu0 0.0
        %4495 = vmatprep.subr.mxu0 0.0
        %4496 = vmatpush1.msra.mxu0 0.0
        %4497 = vmatprep.subr.mxu0 0.0
        %4498 = vmatpush1.msra.mxu0 0.0
        %4499 = vmatprep.subr.mxu0 0.0
        %4500 = vmatpush1.msra.mxu0 0.0
        %4501 = vmatprep.subr.mxu0 0.0
        %4502 = vmatpush1.msra.mxu0 0.0
        %4503 = vmatprep.subr.mxu0 0.0
        %4504 = vmatpush1.msra.mxu0 0.0
        %4505 = vmatprep.subr.mxu0 %v1442
        %4506 = vmatpush1.msra.mxu0 %v1441
        %4507 = vmatprep.subr.mxu0 %v1426
        %4508 = vmatpush1.msra.mxu0 %v1425
        %4509 = vmatprep.subr.mxu0 %v1410
        %4510 = vmatpush1.msra.mxu0 %v1409
        %4511 = vmatprep.subr.mxu0 %v1394
        %4512 = vmatpush1.msra.mxu0 %v1393
        %4513 = vmatprep.subr.mxu0 %v1378
        %4514 = vmatpush1.msra.mxu0 %v1377
        %4515 = vmatprep.subr.mxu0 %v1362
        %4516 = vmatpush1.msra.mxu0 %v1361
        %4517 = vmatprep.subr.mxu0 %v1346
        %4518 = vmatpush1.msra.mxu0 %v1345
        %4519 = vmatprep.subr.mxu0 %v1330
        %4520 = vmatpush1.msra.mxu0 %v1329
        %4521 = vmatprep.subr.mxu0 0.0
        %4522 = vmatpush2.msra.mxu0 0.0
        %4523 = vmatprep.subr.mxu0 0.0
        %4524 = vmatpush2.msra.mxu0 0.0
        %4525 = vmatprep.subr.mxu0 0.0
        %4526 = vmatpush2.msra.mxu0 0.0
        %4527 = vmatprep.subr.mxu0 0.0
        %4528 = vmatpush2.msra.mxu0 0.0
        %4529 = vmatprep.subr.mxu0 0.0
        %4530 = vmatpush2.msra.mxu0 0.0
        %4531 = vmatprep.subr.mxu0 0.0
        %4532 = vmatpush2.msra.mxu0 0.0
        %4533 = vmatprep.subr.mxu0 0.0
        %4534 = vmatpush2.msra.mxu0 0.0
        %4535 = vmatprep.subr.mxu0 0.0
        %4536 = vmatpush2.msra.mxu0 0.0
        %4537 = vmatprep.subr.mxu0 0.0
        %4538 = vmatpush2.msra.mxu0 0.0
        %4539 = vmatprep.subr.mxu0 0.0
        %4540 = vmatpush2.msra.mxu0 0.0
        %4541 = vmatprep.subr.mxu0 0.0
        %4542 = vmatpush2.msra.mxu0 0.0
        %4543 = vmatprep.subr.mxu0 0.0
        %4544 = vmatpush2.msra.mxu0 0.0
        %4545 = vmatprep.subr.mxu0 0.0
        %4546 = vmatpush2.msra.mxu0 0.0
        %4547 = vmatprep.subr.mxu0 0.0
        %4548 = vmatpush2.msra.mxu0 0.0
        %4549 = vmatprep.subr.mxu0 0.0
        %4550 = vmatpush2.msra.mxu0 0.0
        %4551 = vmatprep.subr.mxu0 0.0
        %4552 = vmatpush2.msra.mxu0 0.0
        %4553 = vmatprep.mubr.f32.mxu0 0.0
        %4554 = vmatmul.mubr.f32.gmra.mxu0 %v4353
        %v4555 = vpop.f32.mrf.mxu0
        %v4556 = vadd.f32 0.0, %v4555
        %v4557 = vpop.f32.mrf.mxu0
        %v4558 = vadd.f32 0.0, %v4557
        %4559 = vmatprep.mubr.f32.mxu0 0.0
        %4560 = vmatmul.mubr.f32.gmra.mxu0 %v4356
        %v4561 = vpop.f32.mrf.mxu0
        %v4562 = vadd.f32 0.0, %v4561
        %v4563 = vpop.f32.mrf.mxu0
        %v4564 = vadd.f32 0.0, %v4563
        %4565 = vmatprep.mubr.f32.mxu0 0.0
        %4566 = vmatmul.mubr.f32.gmra.mxu0 %v4359
        %v4567 = vpop.f32.mrf.mxu0
        %v4568 = vadd.f32 0.0, %v4567
        %v4569 = vpop.f32.mrf.mxu0
        %v4570 = vadd.f32 0.0, %v4569
        %4571 = vmatprep.mubr.f32.mxu0 0.0
        %4572 = vmatmul.mubr.f32.gmra.mxu0 %v4362
        %v4573 = vpop.f32.mrf.mxu0
        %v4574 = vadd.f32 0.0, %v4573
        %v4575 = vpop.f32.mrf.mxu0
        %v4576 = vadd.f32 0.0, %v4575
        %4577 = vmatprep.mubr.f32.mxu0 0.0
        %4578 = vmatmul.mubr.f32.gmra.mxu0 %v4365
        %v4579 = vpop.f32.mrf.mxu0
        %v4580 = vadd.f32 0.0, %v4579
        %v4581 = vpop.f32.mrf.mxu0
        %v4582 = vadd.f32 0.0, %v4581
        %4583 = vmatprep.mubr.f32.mxu0 0.0
        %4584 = vmatmul.mubr.f32.gmra.mxu0 %v4368
        %v4585 = vpop.f32.mrf.mxu0
        %v4586 = vadd.f32 0.0, %v4585
        %v4587 = vpop.f32.mrf.mxu0
        %v4588 = vadd.f32 0.0, %v4587
        %4589 = vmatprep.mubr.f32.mxu0 0.0
        %4590 = vmatmul.mubr.f32.gmra.mxu0 %v4371
        %v4591 = vpop.f32.mrf.mxu0
        %v4592 = vadd.f32 0.0, %v4591
        %v4593 = vpop.f32.mrf.mxu0
        %v4594 = vadd.f32 0.0, %v4593
        %4595 = vmatprep.mubr.f32.mxu0 0.0
        %4596 = vmatmul.mubr.f32.gmra.mxu0 %v4374
        %v4597 = vpop.f32.mrf.mxu0
        %v4598 = vadd.f32 0.0, %v4597
        %v4599 = vpop.f32.mrf.mxu0
        %v4600 = vadd.f32 0.0, %v4599
        %4601 = vdwg.mxu0
        %4602 = vmatprep.subr.mxu0 0.0
        %4603 = vmatpush1.msra.mxu0 0.0
        %4604 = vmatprep.subr.mxu0 0.0
        %4605 = vmatpush1.msra.mxu0 0.0
        %4606 = vmatprep.subr.mxu0 0.0
        %4607 = vmatpush1.msra.mxu0 0.0
        %4608 = vmatprep.subr.mxu0 0.0
        %4609 = vmatpush1.msra.mxu0 0.0
        %4610 = vmatprep.subr.mxu0 0.0
        %4611 = vmatpush1.msra.mxu0 0.0
        %4612 = vmatprep.subr.mxu0 0.0
        %4613 = vmatpush1.msra.mxu0 0.0
        %4614 = vmatprep.subr.mxu0 0.0
        %4615 = vmatpush1.msra.mxu0 0.0
        %4616 = vmatprep.subr.mxu0 0.0
        %4617 = vmatpush1.msra.mxu0 0.0
        %4618 = vmatprep.subr.mxu0 %v1444
        %4619 = vmatpush1.msra.mxu0 %v1443
        %4620 = vmatprep.subr.mxu0 %v1428
        %4621 = vmatpush1.msra.mxu0 %v1427
        %4622 = vmatprep.subr.mxu0 %v1412
        %4623 = vmatpush1.msra.mxu0 %v1411
        %4624 = vmatprep.subr.mxu0 %v1396
        %4625 = vmatpush1.msra.mxu0 %v1395
        %4626 = vmatprep.subr.mxu0 %v1380
        %4627 = vmatpush1.msra.mxu0 %v1379
        %4628 = vmatprep.subr.mxu0 %v1364
        %4629 = vmatpush1.msra.mxu0 %v1363
        %4630 = vmatprep.subr.mxu0 %v1348
        %4631 = vmatpush1.msra.mxu0 %v1347
        %4632 = vmatprep.subr.mxu0 %v1332
        %4633 = vmatpush1.msra.mxu0 %v1331
        %4634 = vmatprep.subr.mxu0 0.0
        %4635 = vmatpush2.msra.mxu0 0.0
        %4636 = vmatprep.subr.mxu0 0.0
        %4637 = vmatpush2.msra.mxu0 0.0
        %4638 = vmatprep.subr.mxu0 0.0
        %4639 = vmatpush2.msra.mxu0 0.0
        %4640 = vmatprep.subr.mxu0 0.0
        %4641 = vmatpush2.msra.mxu0 0.0
        %4642 = vmatprep.subr.mxu0 0.0
        %4643 = vmatpush2.msra.mxu0 0.0
        %4644 = vmatprep.subr.mxu0 0.0
        %4645 = vmatpush2.msra.mxu0 0.0
        %4646 = vmatprep.subr.mxu0 0.0
        %4647 = vmatpush2.msra.mxu0 0.0
        %4648 = vmatprep.subr.mxu0 0.0
        %4649 = vmatpush2.msra.mxu0 0.0
        %4650 = vmatprep.subr.mxu0 0.0
        %4651 = vmatpush2.msra.mxu0 0.0
        %4652 = vmatprep.subr.mxu0 0.0
        %4653 = vmatpush2.msra.mxu0 0.0
        %4654 = vmatprep.subr.mxu0 0.0
        %4655 = vmatpush2.msra.mxu0 0.0
        %4656 = vmatprep.subr.mxu0 0.0
        %4657 = vmatpush2.msra.mxu0 0.0
        %4658 = vmatprep.subr.mxu0 0.0
        %4659 = vmatpush2.msra.mxu0 0.0
        %4660 = vmatprep.subr.mxu0 0.0
        %4661 = vmatpush2.msra.mxu0 0.0
        %4662 = vmatprep.subr.mxu0 0.0
        %4663 = vmatpush2.msra.mxu0 0.0
        %4664 = vmatprep.subr.mxu0 0.0
        %4665 = vmatpush2.msra.mxu0 0.0
        %4666 = vmatprep.mubr.f32.mxu0 0.0
        %4667 = vmatmul.mubr.f32.gmra.mxu0 %v4353
        %v4668 = vpop.f32.mrf.mxu0
        %v4669 = vadd.f32 0.0, %v4668
        %v4670 = vpop.f32.mrf.mxu0
        %v4671 = vadd.f32 0.0, %v4670
        %4672 = vmatprep.mubr.f32.mxu0 0.0
        %4673 = vmatmul.mubr.f32.gmra.mxu0 %v4356
        %v4674 = vpop.f32.mrf.mxu0
        %v4675 = vadd.f32 0.0, %v4674
        %v4676 = vpop.f32.mrf.mxu0
        %v4677 = vadd.f32 0.0, %v4676
        %4678 = vmatprep.mubr.f32.mxu0 0.0
        %4679 = vmatmul.mubr.f32.gmra.mxu0 %v4359
        %v4680 = vpop.f32.mrf.mxu0
        %v4681 = vadd.f32 0.0, %v4680
        %v4682 = vpop.f32.mrf.mxu0
        %v4683 = vadd.f32 0.0, %v4682
        %4684 = vmatprep.mubr.f32.mxu0 0.0
        %4685 = vmatmul.mubr.f32.gmra.mxu0 %v4362
        %v4686 = vpop.f32.mrf.mxu0
        %v4687 = vadd.f32 0.0, %v4686
        %v4688 = vpop.f32.mrf.mxu0
        %v4689 = vadd.f32 0.0, %v4688
        %4690 = vmatprep.mubr.f32.mxu0 0.0
        %4691 = vmatmul.mubr.f32.gmra.mxu0 %v4365
        %v4692 = vpop.f32.mrf.mxu0
        %v4693 = vadd.f32 0.0, %v4692
        %v4694 = vpop.f32.mrf.mxu0
        %v4695 = vadd.f32 0.0, %v4694
        %4696 = vmatprep.mubr.f32.mxu0 0.0
        %4697 = vmatmul.mubr.f32.gmra.mxu0 %v4368
        %v4698 = vpop.f32.mrf.mxu0
        %v4699 = vadd.f32 0.0, %v4698
        %v4700 = vpop.f32.mrf.mxu0
        %v4701 = vadd.f32 0.0, %v4700
        %4702 = vmatprep.mubr.f32.mxu0 0.0
        %4703 = vmatmul.mubr.f32.gmra.mxu0 %v4371
        %v4704 = vpop.f32.mrf.mxu0
        %v4705 = vadd.f32 0.0, %v4704
        %v4706 = vpop.f32.mrf.mxu0
        %v4707 = vadd.f32 0.0, %v4706
        %4708 = vmatprep.mubr.f32.mxu0 0.0
        %4709 = vmatmul.mubr.f32.gmra.mxu0 %v4374
        %v4710 = vpop.f32.mrf.mxu0
        %v4711 = vadd.f32 0.0, %v4710
        %v4712 = vpop.f32.mrf.mxu0
        %v4713 = vadd.f32 0.0, %v4712
        %4714 = vdwg.mxu0
        %4715 = vmatprep.subr.mxu0 0.0
        %4716 = vmatpush1.msra.mxu0 0.0
        %4717 = vmatprep.subr.mxu0 0.0
        %4718 = vmatpush1.msra.mxu0 0.0
        %4719 = vmatprep.subr.mxu0 0.0
        %4720 = vmatpush1.msra.mxu0 0.0
        %4721 = vmatprep.subr.mxu0 0.0
        %4722 = vmatpush1.msra.mxu0 0.0
        %4723 = vmatprep.subr.mxu0 0.0
        %4724 = vmatpush1.msra.mxu0 0.0
        %4725 = vmatprep.subr.mxu0 0.0
        %4726 = vmatpush1.msra.mxu0 0.0
        %4727 = vmatprep.subr.mxu0 0.0
        %4728 = vmatpush1.msra.mxu0 0.0
        %4729 = vmatprep.subr.mxu0 0.0
        %4730 = vmatpush1.msra.mxu0 0.0
        %4731 = vmatprep.subr.mxu0 %v1446
        %4732 = vmatpush1.msra.mxu0 %v1445
        %4733 = vmatprep.subr.mxu0 %v1430
        %4734 = vmatpush1.msra.mxu0 %v1429
        %4735 = vmatprep.subr.mxu0 %v1414
        %4736 = vmatpush1.msra.mxu0 %v1413
        %4737 = vmatprep.subr.mxu0 %v1398
        %4738 = vmatpush1.msra.mxu0 %v1397
        %4739 = vmatprep.subr.mxu0 %v1382
        %4740 = vmatpush1.msra.mxu0 %v1381
        %4741 = vmatprep.subr.mxu0 %v1366
        %4742 = vmatpush1.msra.mxu0 %v1365
        %4743 = vmatprep.subr.mxu0 %v1350
        %4744 = vmatpush1.msra.mxu0 %v1349
        %4745 = vmatprep.subr.mxu0 %v1334
        %4746 = vmatpush1.msra.mxu0 %v1333
        %4747 = vmatprep.subr.mxu0 0.0
        %4748 = vmatpush2.msra.mxu0 0.0
        %4749 = vmatprep.subr.mxu0 0.0
        %4750 = vmatpush2.msra.mxu0 0.0
        %4751 = vmatprep.subr.mxu0 0.0
        %4752 = vmatpush2.msra.mxu0 0.0
        %4753 = vmatprep.subr.mxu0 0.0
        %4754 = vmatpush2.msra.mxu0 0.0
        %4755 = vmatprep.subr.mxu0 0.0
        %4756 = vmatpush2.msra.mxu0 0.0
        %4757 = vmatprep.subr.mxu0 0.0
        %4758 = vmatpush2.msra.mxu0 0.0
        %4759 = vmatprep.subr.mxu0 0.0
        %4760 = vmatpush2.msra.mxu0 0.0
        %4761 = vmatprep.subr.mxu0 0.0
        %4762 = vmatpush2.msra.mxu0 0.0
        %4763 = vmatprep.subr.mxu0 0.0
        %4764 = vmatpush2.msra.mxu0 0.0
        %4765 = vmatprep.subr.mxu0 0.0
        %4766 = vmatpush2.msra.mxu0 0.0
        %4767 = vmatprep.subr.mxu0 0.0
        %4768 = vmatpush2.msra.mxu0 0.0
        %4769 = vmatprep.subr.mxu0 0.0
        %4770 = vmatpush2.msra.mxu0 0.0
        %4771 = vmatprep.subr.mxu0 0.0
        %4772 = vmatpush2.msra.mxu0 0.0
        %4773 = vmatprep.subr.mxu0 0.0
        %4774 = vmatpush2.msra.mxu0 0.0
        %4775 = vmatprep.subr.mxu0 0.0
        %4776 = vmatpush2.msra.mxu0 0.0
        %4777 = vmatprep.subr.mxu0 0.0
        %4778 = vmatpush2.msra.mxu0 0.0
        %4779 = vmatprep.mubr.f32.mxu0 0.0
        %4780 = vmatmul.mubr.f32.gmra.mxu0 %v4353
        %v4781 = vpop.f32.mrf.mxu0
        %v4782 = vadd.f32 0.0, %v4781
        %v4783 = vpop.f32.mrf.mxu0
        %v4784 = vadd.f32 0.0, %v4783
        %4785 = vmatprep.mubr.f32.mxu0 0.0
        %4786 = vmatmul.mubr.f32.gmra.mxu0 %v4356
        %v4787 = vpop.f32.mrf.mxu0
        %v4788 = vadd.f32 0.0, %v4787
        %v4789 = vpop.f32.mrf.mxu0
        %v4790 = vadd.f32 0.0, %v4789
        %4791 = vmatprep.mubr.f32.mxu0 0.0
        %4792 = vmatmul.mubr.f32.gmra.mxu0 %v4359
        %v4793 = vpop.f32.mrf.mxu0
        %v4794 = vadd.f32 0.0, %v4793
        %v4795 = vpop.f32.mrf.mxu0
        %v4796 = vadd.f32 0.0, %v4795
        %4797 = vmatprep.mubr.f32.mxu0 0.0
        %4798 = vmatmul.mubr.f32.gmra.mxu0 %v4362
        %v4799 = vpop.f32.mrf.mxu0
        %v4800 = vadd.f32 0.0, %v4799
        %v4801 = vpop.f32.mrf.mxu0
        %v4802 = vadd.f32 0.0, %v4801
        %4803 = vmatprep.mubr.f32.mxu0 0.0
        %4804 = vmatmul.mubr.f32.gmra.mxu0 %v4365
        %v4805 = vpop.f32.mrf.mxu0
        %v4806 = vadd.f32 0.0, %v4805
        %v4807 = vpop.f32.mrf.mxu0
        %v4808 = vadd.f32 0.0, %v4807
        %4809 = vmatprep.mubr.f32.mxu0 0.0
        %4810 = vmatmul.mubr.f32.gmra.mxu0 %v4368
        %v4811 = vpop.f32.mrf.mxu0
        %v4812 = vadd.f32 0.0, %v4811
        %v4813 = vpop.f32.mrf.mxu0
        %v4814 = vadd.f32 0.0, %v4813
        %4815 = vmatprep.mubr.f32.mxu0 0.0
        %4816 = vmatmul.mubr.f32.gmra.mxu0 %v4371
        %v4817 = vpop.f32.mrf.mxu0
        %v4818 = vadd.f32 0.0, %v4817
        %v4819 = vpop.f32.mrf.mxu0
        %v4820 = vadd.f32 0.0, %v4819
        %4821 = vmatprep.mubr.f32.mxu0 0.0
        %4822 = vmatmul.mubr.f32.gmra.mxu0 %v4374
        %v4823 = vpop.f32.mrf.mxu0
        %v4824 = vadd.f32 0.0, %v4823
        %v4825 = vpop.f32.mrf.mxu0
        %v4826 = vadd.f32 0.0, %v4825
        %4827 = vdwg.mxu0
        %4828 = vmatprep.subr.mxu0 0.0
        %4829 = vmatpush1.msra.mxu0 0.0
        %4830 = vmatprep.subr.mxu0 0.0
        %4831 = vmatpush1.msra.mxu0 0.0
        %4832 = vmatprep.subr.mxu0 0.0
        %4833 = vmatpush1.msra.mxu0 0.0
        %4834 = vmatprep.subr.mxu0 0.0
        %4835 = vmatpush1.msra.mxu0 0.0
        %4836 = vmatprep.subr.mxu0 0.0
        %4837 = vmatpush1.msra.mxu0 0.0
        %4838 = vmatprep.subr.mxu0 0.0
        %4839 = vmatpush1.msra.mxu0 0.0
        %4840 = vmatprep.subr.mxu0 0.0
        %4841 = vmatpush1.msra.mxu0 0.0
        %4842 = vmatprep.subr.mxu0 0.0
        %4843 = vmatpush1.msra.mxu0 0.0
        %4844 = vmatprep.subr.mxu0 %v1448
        %4845 = vmatpush1.msra.mxu0 %v1447
        %4846 = vmatprep.subr.mxu0 %v1432
        %4847 = vmatpush1.msra.mxu0 %v1431
        %4848 = vmatprep.subr.mxu0 %v1416
        %4849 = vmatpush1.msra.mxu0 %v1415
        %4850 = vmatprep.subr.mxu0 %v1400
        %4851 = vmatpush1.msra.mxu0 %v1399
        %4852 = vmatprep.subr.mxu0 %v1384
        %4853 = vmatpush1.msra.mxu0 %v1383
        %4854 = vmatprep.subr.mxu0 %v1368
        %4855 = vmatpush1.msra.mxu0 %v1367
        %4856 = vmatprep.subr.mxu0 %v1352
        %4857 = vmatpush1.msra.mxu0 %v1351
        %4858 = vmatprep.subr.mxu0 %v1336
        %4859 = vmatpush1.msra.mxu0 %v1335
        %4860 = vmatprep.subr.mxu0 0.0
        %4861 = vmatpush2.msra.mxu0 0.0
        %4862 = vmatprep.subr.mxu0 0.0
        %4863 = vmatpush2.msra.mxu0 0.0
        %4864 = vmatprep.subr.mxu0 0.0
        %4865 = vmatpush2.msra.mxu0 0.0
        %4866 = vmatprep.subr.mxu0 0.0
        %4867 = vmatpush2.msra.mxu0 0.0
        %4868 = vmatprep.subr.mxu0 0.0
        %4869 = vmatpush2.msra.mxu0 0.0
        %4870 = vmatprep.subr.mxu0 0.0
        %4871 = vmatpush2.msra.mxu0 0.0
        %4872 = vmatprep.subr.mxu0 0.0
        %4873 = vmatpush2.msra.mxu0 0.0
        %4874 = vmatprep.subr.mxu0 0.0
        %4875 = vmatpush2.msra.mxu0 0.0
        %4876 = vmatprep.subr.mxu0 0.0
        %4877 = vmatpush2.msra.mxu0 0.0
        %4878 = vmatprep.subr.mxu0 0.0
        %4879 = vmatpush2.msra.mxu0 0.0
        %4880 = vmatprep.subr.mxu0 0.0
        %4881 = vmatpush2.msra.mxu0 0.0
        %4882 = vmatprep.subr.mxu0 0.0
        %4883 = vmatpush2.msra.mxu0 0.0
        %4884 = vmatprep.subr.mxu0 0.0
        %4885 = vmatpush2.msra.mxu0 0.0
        %4886 = vmatprep.subr.mxu0 0.0
        %4887 = vmatpush2.msra.mxu0 0.0
        %4888 = vmatprep.subr.mxu0 0.0
        %4889 = vmatpush2.msra.mxu0 0.0
        %4890 = vmatprep.subr.mxu0 0.0
        %4891 = vmatpush2.msra.mxu0 0.0
        %4892 = vmatprep.mubr.f32.mxu0 0.0
        %4893 = vmatmul.mubr.f32.gmra.mxu0 %v4353
        %v4894 = vpop.f32.mrf.mxu0
        %v4895 = vadd.f32 0.0, %v4894
        %v4896 = vpop.f32.mrf.mxu0
        %v4897 = vadd.f32 0.0, %v4896
        %4898 = vmatprep.mubr.f32.mxu0 0.0
        %4899 = vmatmul.mubr.f32.gmra.mxu0 %v4356
        %v4900 = vpop.f32.mrf.mxu0
        %v4901 = vadd.f32 0.0, %v4900
        %v4902 = vpop.f32.mrf.mxu0
        %v4903 = vadd.f32 0.0, %v4902
        %4904 = vmatprep.mubr.f32.mxu0 0.0
        %4905 = vmatmul.mubr.f32.gmra.mxu0 %v4359
        %v4906 = vpop.f32.mrf.mxu0
        %v4907 = vadd.f32 0.0, %v4906
        %v4908 = vpop.f32.mrf.mxu0
        %v4909 = vadd.f32 0.0, %v4908
        %4910 = vmatprep.mubr.f32.mxu0 0.0
        %4911 = vmatmul.mubr.f32.gmra.mxu0 %v4362
        %v4912 = vpop.f32.mrf.mxu0
        %v4913 = vadd.f32 0.0, %v4912
        %v4914 = vpop.f32.mrf.mxu0
        %v4915 = vadd.f32 0.0, %v4914
        %4916 = vmatprep.mubr.f32.mxu0 0.0
        %4917 = vmatmul.mubr.f32.gmra.mxu0 %v4365
        %v4918 = vpop.f32.mrf.mxu0
        %v4919 = vadd.f32 0.0, %v4918
        %v4920 = vpop.f32.mrf.mxu0
        %v4921 = vadd.f32 0.0, %v4920
        %4922 = vmatprep.mubr.f32.mxu0 0.0
        %4923 = vmatmul.mubr.f32.gmra.mxu0 %v4368
        %v4924 = vpop.f32.mrf.mxu0
        %v4925 = vadd.f32 0.0, %v4924
        %v4926 = vpop.f32.mrf.mxu0
        %v4927 = vadd.f32 0.0, %v4926
        %4928 = vmatprep.mubr.f32.mxu0 0.0
        %4929 = vmatmul.mubr.f32.gmra.mxu0 %v4371
        %v4930 = vpop.f32.mrf.mxu0
        %v4931 = vadd.f32 0.0, %v4930
        %v4932 = vpop.f32.mrf.mxu0
        %v4933 = vadd.f32 0.0, %v4932
        %4934 = vmatprep.mubr.f32.mxu0 0.0
        %4935 = vmatmul.mubr.f32.gmra.mxu0 %v4374
        %v4936 = vpop.f32.mrf.mxu0
        %v4937 = vadd.f32 0.0, %v4936
        %v4938 = vpop.f32.mrf.mxu0
        %v4939 = vadd.f32 0.0, %v4938
        %4940 = vdwg.mxu0
        %4941 = vmatprep.subr.mxu0 0.0
        %4942 = vmatpush1.msra.mxu0 0.0
        %4943 = vmatprep.subr.mxu0 0.0
        %4944 = vmatpush1.msra.mxu0 0.0
        %4945 = vmatprep.subr.mxu0 0.0
        %4946 = vmatpush1.msra.mxu0 0.0
        %4947 = vmatprep.subr.mxu0 0.0
        %4948 = vmatpush1.msra.mxu0 0.0
        %4949 = vmatprep.subr.mxu0 0.0
        %4950 = vmatpush1.msra.mxu0 0.0
        %4951 = vmatprep.subr.mxu0 0.0
        %4952 = vmatpush1.msra.mxu0 0.0
        %4953 = vmatprep.subr.mxu0 0.0
        %4954 = vmatpush1.msra.mxu0 0.0
        %4955 = vmatprep.subr.mxu0 0.0
        %4956 = vmatpush1.msra.mxu0 0.0
        %4957 = vmatprep.subr.mxu0 %v1450
        %4958 = vmatpush1.msra.mxu0 %v1449
        %4959 = vmatprep.subr.mxu0 %v1434
        %4960 = vmatpush1.msra.mxu0 %v1433
        %4961 = vmatprep.subr.mxu0 %v1418
        %4962 = vmatpush1.msra.mxu0 %v1417
        %4963 = vmatprep.subr.mxu0 %v1402
        %4964 = vmatpush1.msra.mxu0 %v1401
        %4965 = vmatprep.subr.mxu0 %v1386
        %4966 = vmatpush1.msra.mxu0 %v1385
        %4967 = vmatprep.subr.mxu0 %v1370
        %4968 = vmatpush1.msra.mxu0 %v1369
        %4969 = vmatprep.subr.mxu0 %v1354
        %4970 = vmatpush1.msra.mxu0 %v1353
        %4971 = vmatprep.subr.mxu0 %v1338
        %4972 = vmatpush1.msra.mxu0 %v1337
        %4973 = vmatprep.subr.mxu0 0.0
        %4974 = vmatpush2.msra.mxu0 0.0
        %4975 = vmatprep.subr.mxu0 0.0
        %4976 = vmatpush2.msra.mxu0 0.0
        %4977 = vmatprep.subr.mxu0 0.0
        %4978 = vmatpush2.msra.mxu0 0.0
        %4979 = vmatprep.subr.mxu0 0.0
        %4980 = vmatpush2.msra.mxu0 0.0
        %4981 = vmatprep.subr.mxu0 0.0
        %4982 = vmatpush2.msra.mxu0 0.0
        %4983 = vmatprep.subr.mxu0 0.0
        %4984 = vmatpush2.msra.mxu0 0.0
        %4985 = vmatprep.subr.mxu0 0.0
        %4986 = vmatpush2.msra.mxu0 0.0
        %4987 = vmatprep.subr.mxu0 0.0
        %4988 = vmatpush2.msra.mxu0 0.0
        %4989 = vmatprep.subr.mxu0 0.0
        %4990 = vmatpush2.msra.mxu0 0.0
        %4991 = vmatprep.subr.mxu0 0.0
        %4992 = vmatpush2.msra.mxu0 0.0
        %4993 = vmatprep.subr.mxu0 0.0
        %4994 = vmatpush2.msra.mxu0 0.0
        %4995 = vmatprep.subr.mxu0 0.0
        %4996 = vmatpush2.msra.mxu0 0.0
        %4997 = vmatprep.subr.mxu0 0.0
        %4998 = vmatpush2.msra.mxu0 0.0
        %4999 = vmatprep.subr.mxu0 0.0
        %5000 = vmatpush2.msra.mxu0 0.0
        %5001 = vmatprep.subr.mxu0 0.0
        %5002 = vmatpush2.msra.mxu0 0.0
        %5003 = vmatprep.subr.mxu0 0.0
        %5004 = vmatpush2.msra.mxu0 0.0
        %5005 = vmatprep.mubr.f32.mxu0 0.0
        %5006 = vmatmul.mubr.f32.gmra.mxu0 %v4353
        %v5007 = vpop.f32.mrf.mxu0
        %v5008 = vadd.f32 0.0, %v5007
        %v5009 = vpop.f32.mrf.mxu0
        %v5010 = vadd.f32 0.0, %v5009
        %5011 = vmatprep.mubr.f32.mxu0 0.0
        %5012 = vmatmul.mubr.f32.gmra.mxu0 %v4356
        %v5013 = vpop.f32.mrf.mxu0
        %v5014 = vadd.f32 0.0, %v5013
        %v5015 = vpop.f32.mrf.mxu0
        %v5016 = vadd.f32 0.0, %v5015
        %5017 = vmatprep.mubr.f32.mxu0 0.0
        %5018 = vmatmul.mubr.f32.gmra.mxu0 %v4359
        %v5019 = vpop.f32.mrf.mxu0
        %v5020 = vadd.f32 0.0, %v5019
        %v5021 = vpop.f32.mrf.mxu0
        %v5022 = vadd.f32 0.0, %v5021
        %5023 = vmatprep.mubr.f32.mxu0 0.0
        %5024 = vmatmul.mubr.f32.gmra.mxu0 %v4362
        %v5025 = vpop.f32.mrf.mxu0
        %v5026 = vadd.f32 0.0, %v5025
        %v5027 = vpop.f32.mrf.mxu0
        %v5028 = vadd.f32 0.0, %v5027
        %5029 = vmatprep.mubr.f32.mxu0 0.0
        %5030 = vmatmul.mubr.f32.gmra.mxu0 %v4365
        %v5031 = vpop.f32.mrf.mxu0
        %v5032 = vadd.f32 0.0, %v5031
        %v5033 = vpop.f32.mrf.mxu0
        %v5034 = vadd.f32 0.0, %v5033
        %5035 = vmatprep.mubr.f32.mxu0 0.0
        %5036 = vmatmul.mubr.f32.gmra.mxu0 %v4368
        %v5037 = vpop.f32.mrf.mxu0
        %v5038 = vadd.f32 0.0, %v5037
        %v5039 = vpop.f32.mrf.mxu0
        %v5040 = vadd.f32 0.0, %v5039
        %5041 = vmatprep.mubr.f32.mxu0 0.0
        %5042 = vmatmul.mubr.f32.gmra.mxu0 %v4371
        %v5043 = vpop.f32.mrf.mxu0
        %v5044 = vadd.f32 0.0, %v5043
        %v5045 = vpop.f32.mrf.mxu0
        %v5046 = vadd.f32 0.0, %v5045
        %5047 = vmatprep.mubr.f32.mxu0 0.0
        %5048 = vmatmul.mubr.f32.gmra.mxu0 %v4374
        %v5049 = vpop.f32.mrf.mxu0
        %v5050 = vadd.f32 0.0, %v5049
        %v5051 = vpop.f32.mrf.mxu0
        %v5052 = vadd.f32 0.0, %v5051
        %5053 = vdwg.mxu0
        %5054 = vmatprep.subr.mxu0 0.0
        %5055 = vmatpush1.msra.mxu0 0.0
        %5056 = vmatprep.subr.mxu0 0.0
        %5057 = vmatpush1.msra.mxu0 0.0
        %5058 = vmatprep.subr.mxu0 0.0
        %5059 = vmatpush1.msra.mxu0 0.0
        %5060 = vmatprep.subr.mxu0 0.0
        %5061 = vmatpush1.msra.mxu0 0.0
        %5062 = vmatprep.subr.mxu0 0.0
        %5063 = vmatpush1.msra.mxu0 0.0
        %5064 = vmatprep.subr.mxu0 0.0
        %5065 = vmatpush1.msra.mxu0 0.0
        %5066 = vmatprep.subr.mxu0 0.0
        %5067 = vmatpush1.msra.mxu0 0.0
        %5068 = vmatprep.subr.mxu0 0.0
        %5069 = vmatpush1.msra.mxu0 0.0
        %5070 = vmatprep.subr.mxu0 %v1452
        %5071 = vmatpush1.msra.mxu0 %v1451
        %5072 = vmatprep.subr.mxu0 %v1436
        %5073 = vmatpush1.msra.mxu0 %v1435
        %5074 = vmatprep.subr.mxu0 %v1420
        %5075 = vmatpush1.msra.mxu0 %v1419
        %5076 = vmatprep.subr.mxu0 %v1404
        %5077 = vmatpush1.msra.mxu0 %v1403
        %5078 = vmatprep.subr.mxu0 %v1388
        %5079 = vmatpush1.msra.mxu0 %v1387
        %5080 = vmatprep.subr.mxu0 %v1372
        %5081 = vmatpush1.msra.mxu0 %v1371
        %5082 = vmatprep.subr.mxu0 %v1356
        %5083 = vmatpush1.msra.mxu0 %v1355
        %5084 = vmatprep.subr.mxu0 %v1340
        %5085 = vmatpush1.msra.mxu0 %v1339
        %5086 = vmatprep.subr.mxu0 0.0
        %5087 = vmatpush2.msra.mxu0 0.0
        %5088 = vmatprep.subr.mxu0 0.0
        %5089 = vmatpush2.msra.mxu0 0.0
        %5090 = vmatprep.subr.mxu0 0.0
        %5091 = vmatpush2.msra.mxu0 0.0
        %5092 = vmatprep.subr.mxu0 0.0
        %5093 = vmatpush2.msra.mxu0 0.0
        %5094 = vmatprep.subr.mxu0 0.0
        %5095 = vmatpush2.msra.mxu0 0.0
        %5096 = vmatprep.subr.mxu0 0.0
        %5097 = vmatpush2.msra.mxu0 0.0
        %5098 = vmatprep.subr.mxu0 0.0
        %5099 = vmatpush2.msra.mxu0 0.0
        %5100 = vmatprep.subr.mxu0 0.0
        %5101 = vmatpush2.msra.mxu0 0.0
        %5102 = vmatprep.subr.mxu0 0.0
        %5103 = vmatpush2.msra.mxu0 0.0
        %5104 = vmatprep.subr.mxu0 0.0
        %5105 = vmatpush2.msra.mxu0 0.0
        %5106 = vmatprep.subr.mxu0 0.0
        %5107 = vmatpush2.msra.mxu0 0.0
        %5108 = vmatprep.subr.mxu0 0.0
        %5109 = vmatpush2.msra.mxu0 0.0
        %5110 = vmatprep.subr.mxu0 0.0
        %5111 = vmatpush2.msra.mxu0 0.0
        %5112 = vmatprep.subr.mxu0 0.0
        %5113 = vmatpush2.msra.mxu0 0.0
        %5114 = vmatprep.subr.mxu0 0.0
        %5115 = vmatpush2.msra.mxu0 0.0
        %5116 = vmatprep.subr.mxu0 0.0
        %5117 = vmatpush2.msra.mxu0 0.0
        %5118 = vmatprep.mubr.f32.mxu0 0.0
        %5119 = vmatmul.mubr.f32.gmra.mxu0 %v4353
        %v5120 = vpop.f32.mrf.mxu0
        %v5121 = vadd.f32 0.0, %v5120
        %v5122 = vpop.f32.mrf.mxu0
        %v5123 = vadd.f32 0.0, %v5122
        %5124 = vmatprep.mubr.f32.mxu0 0.0
        %5125 = vmatmul.mubr.f32.gmra.mxu0 %v4356
        %v5126 = vpop.f32.mrf.mxu0
        %v5127 = vadd.f32 0.0, %v5126
        %v5128 = vpop.f32.mrf.mxu0
        %v5129 = vadd.f32 0.0, %v5128
        %5130 = vmatprep.mubr.f32.mxu0 0.0
        %5131 = vmatmul.mubr.f32.gmra.mxu0 %v4359
        %v5132 = vpop.f32.mrf.mxu0
        %v5133 = vadd.f32 0.0, %v5132
        %v5134 = vpop.f32.mrf.mxu0
        %v5135 = vadd.f32 0.0, %v5134
        %5136 = vmatprep.mubr.f32.mxu0 0.0
        %5137 = vmatmul.mubr.f32.gmra.mxu0 %v4362
        %v5138 = vpop.f32.mrf.mxu0
        %v5139 = vadd.f32 0.0, %v5138
        %v5140 = vpop.f32.mrf.mxu0
        %v5141 = vadd.f32 0.0, %v5140
        %5142 = vmatprep.mubr.f32.mxu0 0.0
        %5143 = vmatmul.mubr.f32.gmra.mxu0 %v4365
        %v5144 = vpop.f32.mrf.mxu0
        %v5145 = vadd.f32 0.0, %v5144
        %v5146 = vpop.f32.mrf.mxu0
        %v5147 = vadd.f32 0.0, %v5146
        %5148 = vmatprep.mubr.f32.mxu0 0.0
        %5149 = vmatmul.mubr.f32.gmra.mxu0 %v4368
        %v5150 = vpop.f32.mrf.mxu0
        %v5151 = vadd.f32 0.0, %v5150
        %v5152 = vpop.f32.mrf.mxu0
        %v5153 = vadd.f32 0.0, %v5152
        %5154 = vmatprep.mubr.f32.mxu0 0.0
        %5155 = vmatmul.mubr.f32.gmra.mxu0 %v4371
        %v5156 = vpop.f32.mrf.mxu0
        %v5157 = vadd.f32 0.0, %v5156
        %v5158 = vpop.f32.mrf.mxu0
        %v5159 = vadd.f32 0.0, %v5158
        %5160 = vmatprep.mubr.f32.mxu0 0.0
        %5161 = vmatmul.mubr.f32.gmra.mxu0 %v4374
        %v5162 = vpop.f32.mrf.mxu0
        %v5163 = vadd.f32 0.0, %v5162
        %v5164 = vpop.f32.mrf.mxu0
        %v5165 = vadd.f32 0.0, %v5164
        %5166 = vdwg.mxu0
        %5167 = vmatprep.subr.mxu0 0.0
        %5168 = vmatpush1.msra.mxu0 0.0
        %5169 = vmatprep.subr.mxu0 0.0
        %5170 = vmatpush1.msra.mxu0 0.0
        %5171 = vmatprep.subr.mxu0 0.0
        %5172 = vmatpush1.msra.mxu0 0.0
        %5173 = vmatprep.subr.mxu0 0.0
        %5174 = vmatpush1.msra.mxu0 0.0
        %5175 = vmatprep.subr.mxu0 0.0
        %5176 = vmatpush1.msra.mxu0 0.0
        %5177 = vmatprep.subr.mxu0 0.0
        %5178 = vmatpush1.msra.mxu0 0.0
        %5179 = vmatprep.subr.mxu0 0.0
        %5180 = vmatpush1.msra.mxu0 0.0
        %5181 = vmatprep.subr.mxu0 0.0
        %5182 = vmatpush1.msra.mxu0 0.0
        %5183 = vmatprep.subr.mxu0 %v1454
        %5184 = vmatpush1.msra.mxu0 %v1453
        %5185 = vmatprep.subr.mxu0 %v1438
        %5186 = vmatpush1.msra.mxu0 %v1437
        %5187 = vmatprep.subr.mxu0 %v1422
        %5188 = vmatpush1.msra.mxu0 %v1421
        %5189 = vmatprep.subr.mxu0 %v1406
        %5190 = vmatpush1.msra.mxu0 %v1405
        %5191 = vmatprep.subr.mxu0 %v1390
        %5192 = vmatpush1.msra.mxu0 %v1389
        %5193 = vmatprep.subr.mxu0 %v1374
        %5194 = vmatpush1.msra.mxu0 %v1373
        %5195 = vmatprep.subr.mxu0 %v1358
        %5196 = vmatpush1.msra.mxu0 %v1357
        %5197 = vmatprep.subr.mxu0 %v1342
        %5198 = vmatpush1.msra.mxu0 %v1341
        %5199 = vmatprep.subr.mxu0 0.0
        %5200 = vmatpush2.msra.mxu0 0.0
        %5201 = vmatprep.subr.mxu0 0.0
        %5202 = vmatpush2.msra.mxu0 0.0
        %5203 = vmatprep.subr.mxu0 0.0
        %5204 = vmatpush2.msra.mxu0 0.0
        %5205 = vmatprep.subr.mxu0 0.0
        %5206 = vmatpush2.msra.mxu0 0.0
        %5207 = vmatprep.subr.mxu0 0.0
        %5208 = vmatpush2.msra.mxu0 0.0
        %5209 = vmatprep.subr.mxu0 0.0
        %5210 = vmatpush2.msra.mxu0 0.0
        %5211 = vmatprep.subr.mxu0 0.0
        %5212 = vmatpush2.msra.mxu0 0.0
        %5213 = vmatprep.subr.mxu0 0.0
        %5214 = vmatpush2.msra.mxu0 0.0
        %5215 = vmatprep.subr.mxu0 0.0
        %5216 = vmatpush2.msra.mxu0 0.0
        %5217 = vmatprep.subr.mxu0 0.0
        %5218 = vmatpush2.msra.mxu0 0.0
        %5219 = vmatprep.subr.mxu0 0.0
        %5220 = vmatpush2.msra.mxu0 0.0
        %5221 = vmatprep.subr.mxu0 0.0
        %5222 = vmatpush2.msra.mxu0 0.0
        %5223 = vmatprep.subr.mxu0 0.0
        %5224 = vmatpush2.msra.mxu0 0.0
        %5225 = vmatprep.subr.mxu0 0.0
        %5226 = vmatpush2.msra.mxu0 0.0
        %5227 = vmatprep.subr.mxu0 0.0
        %5228 = vmatpush2.msra.mxu0 0.0
        %5229 = vmatprep.subr.mxu0 0.0
        %5230 = vmatpush2.msra.mxu0 0.0
        %5231 = vmatprep.mubr.f32.mxu0 0.0
        %5232 = vmatmul.mubr.f32.gmra.mxu0 %v4353
        %v5233 = vpop.f32.mrf.mxu0
        %v5234 = vadd.f32 0.0, %v5233
        %v5235 = vpop.f32.mrf.mxu0
        %v5236 = vadd.f32 0.0, %v5235
        %5237 = vmatprep.mubr.f32.mxu0 0.0
        %5238 = vmatmul.mubr.f32.gmra.mxu0 %v4356
        %v5239 = vpop.f32.mrf.mxu0
        %v5240 = vadd.f32 0.0, %v5239
        %v5241 = vpop.f32.mrf.mxu0
        %v5242 = vadd.f32 0.0, %v5241
        %5243 = vmatprep.mubr.f32.mxu0 0.0
        %5244 = vmatmul.mubr.f32.gmra.mxu0 %v4359
        %v5245 = vpop.f32.mrf.mxu0
        %v5246 = vadd.f32 0.0, %v5245
        %v5247 = vpop.f32.mrf.mxu0
        %v5248 = vadd.f32 0.0, %v5247
        %5249 = vmatprep.mubr.f32.mxu0 0.0
        %5250 = vmatmul.mubr.f32.gmra.mxu0 %v4362
        %v5251 = vpop.f32.mrf.mxu0
        %v5252 = vadd.f32 0.0, %v5251
        %v5253 = vpop.f32.mrf.mxu0
        %v5254 = vadd.f32 0.0, %v5253
        %5255 = vmatprep.mubr.f32.mxu0 0.0
        %5256 = vmatmul.mubr.f32.gmra.mxu0 %v4365
        %v5257 = vpop.f32.mrf.mxu0
        %v5258 = vadd.f32 0.0, %v5257
        %v5259 = vpop.f32.mrf.mxu0
        %v5260 = vadd.f32 0.0, %v5259
        %5261 = vmatprep.mubr.f32.mxu0 0.0
        %5262 = vmatmul.mubr.f32.gmra.mxu0 %v4368
        %v5263 = vpop.f32.mrf.mxu0
        %v5264 = vadd.f32 0.0, %v5263
        %v5265 = vpop.f32.mrf.mxu0
        %v5266 = vadd.f32 0.0, %v5265
        %5267 = vmatprep.mubr.f32.mxu0 0.0
        %5268 = vmatmul.mubr.f32.gmra.mxu0 %v4371
        %v5269 = vpop.f32.mrf.mxu0
        %v5270 = vadd.f32 0.0, %v5269
        %v5271 = vpop.f32.mrf.mxu0
        %v5272 = vadd.f32 0.0, %v5271
        %5273 = vmatprep.mubr.f32.mxu0 0.0
        %5274 = vmatmul.mubr.f32.gmra.mxu0 %v4374
        %v5275 = vpop.f32.mrf.mxu0
        %v5276 = vadd.f32 0.0, %v5275
        %v5277 = vpop.f32.mrf.mxu0
        %v5278 = vadd.f32 0.0, %v5277
        %5279 = vdwg.mxu0
        %v5280 = vmul.f32 %v3232, %v4443
        %v5281 = vmul.f32 %v3233, %v4445
        %v5282 = vmul.f32 %v3234, %v4556
        %v5283 = vmul.f32 %v3235, %v4558
        %v5284 = vmul.f32 %v3236, %v4669
        %v5285 = vmul.f32 %v3237, %v4671
        %v5286 = vmul.f32 %v3238, %v4782
        %v5287 = vmul.f32 %v3239, %v4784
        %v5288 = vmul.f32 %v3240, %v4895
        %v5289 = vmul.f32 %v3241, %v4897
        %v5290 = vmul.f32 %v3242, %v5008
        %v5291 = vmul.f32 %v3243, %v5010
        %v5292 = vmul.f32 %v3244, %v5121
        %v5293 = vmul.f32 %v3245, %v5123
        %v5294 = vmul.f32 %v3246, %v5234
        %v5295 = vmul.f32 %v3247, %v5236
        %v5296 = vmul.f32 %v3248, %v4449
        %v5297 = vmul.f32 %v3249, %v4451
        %v5298 = vmul.f32 %v3250, %v4562
        %v5299 = vmul.f32 %v3251, %v4564
        %v5300 = vmul.f32 %v3252, %v4675
        %v5301 = vmul.f32 %v3253, %v4677
        %v5302 = vmul.f32 %v3254, %v4788
        %v5303 = vmul.f32 %v3255, %v4790
        %v5304 = vmul.f32 %v3256, %v4901
        %v5305 = vmul.f32 %v3257, %v4903
        %v5306 = vmul.f32 %v3258, %v5014
        %v5307 = vmul.f32 %v3259, %v5016
        %v5308 = vmul.f32 %v3260, %v5127
        %v5309 = vmul.f32 %v3261, %v5129
        %v5310 = vmul.f32 %v3262, %v5240
        %v5311 = vmul.f32 %v3263, %v5242
        %v5312 = vmul.f32 %v3264, %v4455
        %v5313 = vmul.f32 %v3265, %v4457
        %v5314 = vmul.f32 %v3266, %v4568
        %v5315 = vmul.f32 %v3267, %v4570
        %v5316 = vmul.f32 %v3268, %v4681
        %v5317 = vmul.f32 %v3269, %v4683
        %v5318 = vmul.f32 %v3270, %v4794
        %v5319 = vmul.f32 %v3271, %v4796
        %v5320 = vmul.f32 %v3272, %v4907
        %v5321 = vmul.f32 %v3273, %v4909
        %v5322 = vmul.f32 %v3274, %v5020
        %v5323 = vmul.f32 %v3275, %v5022
        %v5324 = vmul.f32 %v3276, %v5133
        %v5325 = vmul.f32 %v3277, %v5135
        %v5326 = vmul.f32 %v3278, %v5246
        %v5327 = vmul.f32 %v3279, %v5248
        %v5328 = vmul.f32 %v3280, %v4461
        %v5329 = vmul.f32 %v3281, %v4463
        %v5330 = vmul.f32 %v3282, %v4574
        %v5331 = vmul.f32 %v3283, %v4576
        %v5332 = vmul.f32 %v3284, %v4687
        %v5333 = vmul.f32 %v3285, %v4689
        %v5334 = vmul.f32 %v3286, %v4800
        %v5335 = vmul.f32 %v3287, %v4802
        %v5336 = vmul.f32 %v3288, %v4913
        %v5337 = vmul.f32 %v3289, %v4915
        %v5338 = vmul.f32 %v3290, %v5026
        %v5339 = vmul.f32 %v3291, %v5028
        %v5340 = vmul.f32 %v3292, %v5139
        %v5341 = vmul.f32 %v3293, %v5141
        %v5342 = vmul.f32 %v3294, %v5252
        %v5343 = vmul.f32 %v3295, %v5254
        %v5344 = vmul.f32 %v3296, %v4467
        %v5345 = vmul.f32 %v3297, %v4469
        %v5346 = vmul.f32 %v3298, %v4580
        %v5347 = vmul.f32 %v3299, %v4582
        %v5348 = vmul.f32 %v3300, %v4693
        %v5349 = vmul.f32 %v3301, %v4695
        %v5350 = vmul.f32 %v3302, %v4806
        %v5351 = vmul.f32 %v3303, %v4808
        %v5352 = vmul.f32 %v3304, %v4919
        %v5353 = vmul.f32 %v3305, %v4921
        %v5354 = vmul.f32 %v3306, %v5032
        %v5355 = vmul.f32 %v3307, %v5034
        %v5356 = vmul.f32 %v3308, %v5145
        %v5357 = vmul.f32 %v3309, %v5147
        %v5358 = vmul.f32 %v3310, %v5258
        %v5359 = vmul.f32 %v3311, %v5260
        %v5360 = vmul.f32 %v3312, %v4473
        %v5361 = vmul.f32 %v3313, %v4475
        %v5362 = vmul.f32 %v3314, %v4586
        %v5363 = vmul.f32 %v3315, %v4588
        %v5364 = vmul.f32 %v3316, %v4699
        %v5365 = vmul.f32 %v3317, %v4701
        %v5366 = vmul.f32 %v3318, %v4812
        %v5367 = vmul.f32 %v3319, %v4814
        %v5368 = vmul.f32 %v3320, %v4925
        %v5369 = vmul.f32 %v3321, %v4927
        %v5370 = vmul.f32 %v3322, %v5038
        %v5371 = vmul.f32 %v3323, %v5040
        %v5372 = vmul.f32 %v3324, %v5151
        %v5373 = vmul.f32 %v3325, %v5153
        %v5374 = vmul.f32 %v3326, %v5264
        %v5375 = vmul.f32 %v3327, %v5266
        %v5376 = vmul.f32 %v3328, %v4479
        %v5377 = vmul.f32 %v3329, %v4481
        %v5378 = vmul.f32 %v3330, %v4592
        %v5379 = vmul.f32 %v3331, %v4594
        %v5380 = vmul.f32 %v3332, %v4705
        %v5381 = vmul.f32 %v3333, %v4707
        %v5382 = vmul.f32 %v3334, %v4818
        %v5383 = vmul.f32 %v3335, %v4820
        %v5384 = vmul.f32 %v3336, %v4931
        %v5385 = vmul.f32 %v3337, %v4933
        %v5386 = vmul.f32 %v3338, %v5044
        %v5387 = vmul.f32 %v3339, %v5046
        %v5388 = vmul.f32 %v3340, %v5157
        %v5389 = vmul.f32 %v3341, %v5159
        %v5390 = vmul.f32 %v3342, %v5270
        %v5391 = vmul.f32 %v3343, %v5272
        %v5392 = vmul.f32 %v3344, %v4485
        %v5393 = vmul.f32 %v3345, %v4487
        %v5394 = vmul.f32 %v3346, %v4598
        %v5395 = vmul.f32 %v3347, %v4600
        %v5396 = vmul.f32 %v3348, %v4711
        %v5397 = vmul.f32 %v3349, %v4713
        %v5398 = vmul.f32 %v3350, %v4824
        %v5399 = vmul.f32 %v3351, %v4826
        %v5400 = vmul.f32 %v3352, %v4937
        %v5401 = vmul.f32 %v3353, %v4939
        %v5402 = vmul.f32 %v3354, %v5050
        %v5403 = vmul.f32 %v3355, %v5052
        %v5404 = vmul.f32 %v3356, %v5163
        %v5405 = vmul.f32 %v3357, %v5165
        %v5406 = vmul.f32 %v3358, %v5276
        %v5407 = vmul.f32 %v3359, %v5278
        %v5408 = vld [vmem:[%s4] sm:$0xff]
        %v5409 = vld [vmem:[%s4 + $0x8] sm:$0xff]
        %v5412 = vlaneseq
        %v5413 = vshrl.u32 %v5412, 7
        %v5414 = vsub.s32 0, %v5413
        %v5415 = vrot.slane %v5408, %v5414
        %v5416 = vlaneseq
        %v5417 = vshrl.u32 %v5416, 7
        %v5418 = vsub.s32 1, %v5417
        %v5419 = vrot.slane %v5408, %v5418
        %v5420 = vlaneseq
        %v5421 = vshrl.u32 %v5420, 7
        %v5422 = vsub.s32 2, %v5421
        %v5423 = vrot.slane %v5408, %v5422
        %v5424 = vlaneseq
        %v5425 = vshrl.u32 %v5424, 7
        %v5426 = vsub.s32 3, %v5425
        %v5427 = vrot.slane %v5408, %v5426
        %v5428 = vlaneseq
        %v5429 = vshrl.u32 %v5428, 7
        %v5430 = vsub.s32 4, %v5429
        %v5431 = vrot.slane %v5408, %v5430
        %v5432 = vlaneseq
        %v5433 = vshrl.u32 %v5432, 7
        %v5434 = vsub.s32 5, %v5433
        %v5435 = vrot.slane %v5408, %v5434
        %v5436 = vlaneseq
        %v5437 = vshrl.u32 %v5436, 7
        %v5438 = vsub.s32 6, %v5437
        %v5439 = vrot.slane %v5408, %v5438
        %v5440 = vlaneseq
        %v5441 = vshrl.u32 %v5440, 7
        %v5442 = vsub.s32 7, %v5441
        %v5443 = vrot.slane %v5408, %v5442
        %v5444 = vlaneseq
        %v5445 = vshrl.u32 %v5444, 7
        %v5446 = vsub.s32 0, %v5445
        %v5447 = vrot.slane %v5409, %v5446
        %v5448 = vlaneseq
        %v5449 = vshrl.u32 %v5448, 7
        %v5450 = vsub.s32 1, %v5449
        %v5451 = vrot.slane %v5409, %v5450
        %v5452 = vlaneseq
        %v5453 = vshrl.u32 %v5452, 7
        %v5454 = vsub.s32 2, %v5453
        %v5455 = vrot.slane %v5409, %v5454
        %v5456 = vlaneseq
        %v5457 = vshrl.u32 %v5456, 7
        %v5458 = vsub.s32 3, %v5457
        %v5459 = vrot.slane %v5409, %v5458
        %v5460 = vlaneseq
        %v5461 = vshrl.u32 %v5460, 7
        %v5462 = vsub.s32 4, %v5461
        %v5463 = vrot.slane %v5409, %v5462
        %v5464 = vlaneseq
        %v5465 = vshrl.u32 %v5464, 7
        %v5466 = vsub.s32 5, %v5465
        %v5467 = vrot.slane %v5409, %v5466
        %v5468 = vlaneseq
        %v5469 = vshrl.u32 %v5468, 7
        %v5470 = vsub.s32 6, %v5469
        %v5471 = vrot.slane %v5409, %v5470
        %v5472 = vlaneseq
        %v5473 = vshrl.u32 %v5472, 7
        %v5474 = vsub.s32 7, %v5473
        %v5475 = vrot.slane %v5409, %v5474
        %v5492 = vmul.f32 %v5280, %v5415
        %v5493 = vmul.f32 %v5281, %v5419
        %v5494 = vmul.f32 %v5282, %v5423
        %v5495 = vmul.f32 %v5283, %v5427
        %v5496 = vmul.f32 %v5284, %v5431
        %v5497 = vmul.f32 %v5285, %v5435
        %v5498 = vmul.f32 %v5286, %v5439
        %v5499 = vmul.f32 %v5287, %v5443
        %v5500 = vmul.f32 %v5288, %v5447
        %v5501 = vmul.f32 %v5289, %v5451
        %v5502 = vmul.f32 %v5290, %v5455
        %v5503 = vmul.f32 %v5291, %v5459
        %v5504 = vmul.f32 %v5292, %v5463
        %v5505 = vmul.f32 %v5293, %v5467
        %v5506 = vmul.f32 %v5294, %v5471
        %v5507 = vmul.f32 %v5295, %v5475
        %v5508 = vmul.f32 %v5296, %v5415
        %v5509 = vmul.f32 %v5297, %v5419
        %v5510 = vmul.f32 %v5298, %v5423
        %v5511 = vmul.f32 %v5299, %v5427
        %v5512 = vmul.f32 %v5300, %v5431
        %v5513 = vmul.f32 %v5301, %v5435
        %v5514 = vmul.f32 %v5302, %v5439
        %v5515 = vmul.f32 %v5303, %v5443
        %v5516 = vmul.f32 %v5304, %v5447
        %v5517 = vmul.f32 %v5305, %v5451
        %v5518 = vmul.f32 %v5306, %v5455
        %v5519 = vmul.f32 %v5307, %v5459
        %v5520 = vmul.f32 %v5308, %v5463
        %v5521 = vmul.f32 %v5309, %v5467
        %v5522 = vmul.f32 %v5310, %v5471
        %v5523 = vmul.f32 %v5311, %v5475
        %v5524 = vmul.f32 %v5312, %v5415
        %v5525 = vmul.f32 %v5313, %v5419
        %v5526 = vmul.f32 %v5314, %v5423
        %v5527 = vmul.f32 %v5315, %v5427
        %v5528 = vmul.f32 %v5316, %v5431
        %v5529 = vmul.f32 %v5317, %v5435
        %v5530 = vmul.f32 %v5318, %v5439
        %v5531 = vmul.f32 %v5319, %v5443
        %v5532 = vmul.f32 %v5320, %v5447
        %v5533 = vmul.f32 %v5321, %v5451
        %v5534 = vmul.f32 %v5322, %v5455
        %v5535 = vmul.f32 %v5323, %v5459
        %v5536 = vmul.f32 %v5324, %v5463
        %v5537 = vmul.f32 %v5325, %v5467
        %v5538 = vmul.f32 %v5326, %v5471
        %v5539 = vmul.f32 %v5327, %v5475
        %v5540 = vmul.f32 %v5328, %v5415
        %v5541 = vmul.f32 %v5329, %v5419
        %v5542 = vmul.f32 %v5330, %v5423
        %v5543 = vmul.f32 %v5331, %v5427
        %v5544 = vmul.f32 %v5332, %v5431
        %v5545 = vmul.f32 %v5333, %v5435
        %v5546 = vmul.f32 %v5334, %v5439
        %v5547 = vmul.f32 %v5335, %v5443
        %v5548 = vmul.f32 %v5336, %v5447
        %v5549 = vmul.f32 %v5337, %v5451
        %v5550 = vmul.f32 %v5338, %v5455
        %v5551 = vmul.f32 %v5339, %v5459
        %v5552 = vmul.f32 %v5340, %v5463
        %v5553 = vmul.f32 %v5341, %v5467
        %v5554 = vmul.f32 %v5342, %v5471
        %v5555 = vmul.f32 %v5343, %v5475
        %v5556 = vmul.f32 %v5344, %v5415
        %v5557 = vmul.f32 %v5345, %v5419
        %v5558 = vmul.f32 %v5346, %v5423
        %v5559 = vmul.f32 %v5347, %v5427
        %v5560 = vmul.f32 %v5348, %v5431
        %v5561 = vmul.f32 %v5349, %v5435
        %v5562 = vmul.f32 %v5350, %v5439
        %v5563 = vmul.f32 %v5351, %v5443
        %v5564 = vmul.f32 %v5352, %v5447
        %v5565 = vmul.f32 %v5353, %v5451
        %v5566 = vmul.f32 %v5354, %v5455
        %v5567 = vmul.f32 %v5355, %v5459
        %v5568 = vmul.f32 %v5356, %v5463
        %v5569 = vmul.f32 %v5357, %v5467
        %v5570 = vmul.f32 %v5358, %v5471
        %v5571 = vmul.f32 %v5359, %v5475
        %v5572 = vmul.f32 %v5360, %v5415
        %v5573 = vmul.f32 %v5361, %v5419
        %v5574 = vmul.f32 %v5362, %v5423
        %v5575 = vmul.f32 %v5363, %v5427
        %v5576 = vmul.f32 %v5364, %v5431
        %v5577 = vmul.f32 %v5365, %v5435
        %v5578 = vmul.f32 %v5366, %v5439
        %v5579 = vmul.f32 %v5367, %v5443
        %v5580 = vmul.f32 %v5368, %v5447
        %v5581 = vmul.f32 %v5369, %v5451
        %v5582 = vmul.f32 %v5370, %v5455
        %v5583 = vmul.f32 %v5371, %v5459
        %v5584 = vmul.f32 %v5372, %v5463
        %v5585 = vmul.f32 %v5373, %v5467
        %v5586 = vmul.f32 %v5374, %v5471
        %v5587 = vmul.f32 %v5375, %v5475
        %v5588 = vmul.f32 %v5376, %v5415
        %v5589 = vmul.f32 %v5377, %v5419
        %v5590 = vmul.f32 %v5378, %v5423
        %v5591 = vmul.f32 %v5379, %v5427
        %v5592 = vmul.f32 %v5380, %v5431
        %v5593 = vmul.f32 %v5381, %v5435
        %v5594 = vmul.f32 %v5382, %v5439
        %v5595 = vmul.f32 %v5383, %v5443
        %v5596 = vmul.f32 %v5384, %v5447
        %v5597 = vmul.f32 %v5385, %v5451
        %v5598 = vmul.f32 %v5386, %v5455
        %v5599 = vmul.f32 %v5387, %v5459
        %v5600 = vmul.f32 %v5388, %v5463
        %v5601 = vmul.f32 %v5389, %v5467
        %v5602 = vmul.f32 %v5390, %v5471
        %v5603 = vmul.f32 %v5391, %v5475
        %v5604 = vmul.f32 %v5392, %v5415
        %v5605 = vmul.f32 %v5393, %v5419
        %v5606 = vmul.f32 %v5394, %v5423
        %v5607 = vmul.f32 %v5395, %v5427
        %v5608 = vmul.f32 %v5396, %v5431
        %v5609 = vmul.f32 %v5397, %v5435
        %v5610 = vmul.f32 %v5398, %v5439
        %v5611 = vmul.f32 %v5399, %v5443
        %v5612 = vmul.f32 %v5400, %v5447
        %v5613 = vmul.f32 %v5401, %v5451
        %v5614 = vmul.f32 %v5402, %v5455
        %v5615 = vmul.f32 %v5403, %v5459
        %v5616 = vmul.f32 %v5404, %v5463
        %v5617 = vmul.f32 %v5405, %v5467
        %v5618 = vmul.f32 %v5406, %v5471
        %v5619 = vmul.f32 %v5407, %v5475
        %v5620 = vld [vmem:[%s5] sm:$0xff]
        %v5621 = vld [vmem:[%s5 + $0x8] sm:$0xff]
        %v5624 = vlaneseq
        %v5625 = vshrl.u32 %v5624, 7
        %v5626 = vsub.s32 0, %v5625
        %v5627 = vrot.slane %v5620, %v5626
        %v5628 = vlaneseq
        %v5629 = vshrl.u32 %v5628, 7
        %v5630 = vsub.s32 1, %v5629
        %v5631 = vrot.slane %v5620, %v5630
        %v5632 = vlaneseq
        %v5633 = vshrl.u32 %v5632, 7
        %v5634 = vsub.s32 2, %v5633
        %v5635 = vrot.slane %v5620, %v5634
        %v5636 = vlaneseq
        %v5637 = vshrl.u32 %v5636, 7
        %v5638 = vsub.s32 3, %v5637
        %v5639 = vrot.slane %v5620, %v5638
        %v5640 = vlaneseq
        %v5641 = vshrl.u32 %v5640, 7
        %v5642 = vsub.s32 4, %v5641
        %v5643 = vrot.slane %v5620, %v5642
        %v5644 = vlaneseq
        %v5645 = vshrl.u32 %v5644, 7
        %v5646 = vsub.s32 5, %v5645
        %v5647 = vrot.slane %v5620, %v5646
        %v5648 = vlaneseq
        %v5649 = vshrl.u32 %v5648, 7
        %v5650 = vsub.s32 6, %v5649
        %v5651 = vrot.slane %v5620, %v5650
        %v5652 = vlaneseq
        %v5653 = vshrl.u32 %v5652, 7
        %v5654 = vsub.s32 7, %v5653
        %v5655 = vrot.slane %v5620, %v5654
        %v5656 = vlaneseq
        %v5657 = vshrl.u32 %v5656, 7
        %v5658 = vsub.s32 0, %v5657
        %v5659 = vrot.slane %v5621, %v5658
        %v5660 = vlaneseq
        %v5661 = vshrl.u32 %v5660, 7
        %v5662 = vsub.s32 1, %v5661
        %v5663 = vrot.slane %v5621, %v5662
        %v5664 = vlaneseq
        %v5665 = vshrl.u32 %v5664, 7
        %v5666 = vsub.s32 2, %v5665
        %v5667 = vrot.slane %v5621, %v5666
        %v5668 = vlaneseq
        %v5669 = vshrl.u32 %v5668, 7
        %v5670 = vsub.s32 3, %v5669
        %v5671 = vrot.slane %v5621, %v5670
        %v5672 = vlaneseq
        %v5673 = vshrl.u32 %v5672, 7
        %v5674 = vsub.s32 4, %v5673
        %v5675 = vrot.slane %v5621, %v5674
        %v5676 = vlaneseq
        %v5677 = vshrl.u32 %v5676, 7
        %v5678 = vsub.s32 5, %v5677
        %v5679 = vrot.slane %v5621, %v5678
        %v5680 = vlaneseq
        %v5681 = vshrl.u32 %v5680, 7
        %v5682 = vsub.s32 6, %v5681
        %v5683 = vrot.slane %v5621, %v5682
        %v5684 = vlaneseq
        %v5685 = vshrl.u32 %v5684, 7
        %v5686 = vsub.s32 7, %v5685
        %v5687 = vrot.slane %v5621, %v5686
        %v5704 = vadd.f32 %v5492, %v5627
        %v5705 = vadd.f32 %v5493, %v5631
        %v5706 = vadd.f32 %v5494, %v5635
        %v5707 = vadd.f32 %v5495, %v5639
        %v5708 = vadd.f32 %v5496, %v5643
        %v5709 = vadd.f32 %v5497, %v5647
        %v5710 = vadd.f32 %v5498, %v5651
        %v5711 = vadd.f32 %v5499, %v5655
        %v5712 = vadd.f32 %v5500, %v5659
        %v5713 = vadd.f32 %v5501, %v5663
        %v5714 = vadd.f32 %v5502, %v5667
        %v5715 = vadd.f32 %v5503, %v5671
        %v5716 = vadd.f32 %v5504, %v5675
        %v5717 = vadd.f32 %v5505, %v5679
        %v5718 = vadd.f32 %v5506, %v5683
        %v5719 = vadd.f32 %v5507, %v5687
        %v5720 = vadd.f32 %v5508, %v5627
        %v5721 = vadd.f32 %v5509, %v5631
        %v5722 = vadd.f32 %v5510, %v5635
        %v5723 = vadd.f32 %v5511, %v5639
        %v5724 = vadd.f32 %v5512, %v5643
        %v5725 = vadd.f32 %v5513, %v5647
        %v5726 = vadd.f32 %v5514, %v5651
        %v5727 = vadd.f32 %v5515, %v5655
        %v5728 = vadd.f32 %v5516, %v5659
        %v5729 = vadd.f32 %v5517, %v5663
        %v5730 = vadd.f32 %v5518, %v5667
        %v5731 = vadd.f32 %v5519, %v5671
        %v5732 = vadd.f32 %v5520, %v5675
        %v5733 = vadd.f32 %v5521, %v5679
        %v5734 = vadd.f32 %v5522, %v5683
        %v5735 = vadd.f32 %v5523, %v5687
        %v5736 = vadd.f32 %v5524, %v5627
        %v5737 = vadd.f32 %v5525, %v5631
        %v5738 = vadd.f32 %v5526, %v5635
        %v5739 = vadd.f32 %v5527, %v5639
        %v5740 = vadd.f32 %v5528, %v5643
        %v5741 = vadd.f32 %v5529, %v5647
        %v5742 = vadd.f32 %v5530, %v5651
        %v5743 = vadd.f32 %v5531, %v5655
        %v5744 = vadd.f32 %v5532, %v5659
        %v5745 = vadd.f32 %v5533, %v5663
        %v5746 = vadd.f32 %v5534, %v5667
        %v5747 = vadd.f32 %v5535, %v5671
        %v5748 = vadd.f32 %v5536, %v5675
        %v5749 = vadd.f32 %v5537, %v5679
        %v5750 = vadd.f32 %v5538, %v5683
        %v5751 = vadd.f32 %v5539, %v5687
        %v5752 = vadd.f32 %v5540, %v5627
        %v5753 = vadd.f32 %v5541, %v5631
        %v5754 = vadd.f32 %v5542, %v5635
        %v5755 = vadd.f32 %v5543, %v5639
        %v5756 = vadd.f32 %v5544, %v5643
        %v5757 = vadd.f32 %v5545, %v5647
        %v5758 = vadd.f32 %v5546, %v5651
        %v5759 = vadd.f32 %v5547, %v5655
        %v5760 = vadd.f32 %v5548, %v5659
        %v5761 = vadd.f32 %v5549, %v5663
        %v5762 = vadd.f32 %v5550, %v5667
        %v5763 = vadd.f32 %v5551, %v5671
        %v5764 = vadd.f32 %v5552, %v5675
        %v5765 = vadd.f32 %v5553, %v5679
        %v5766 = vadd.f32 %v5554, %v5683
        %v5767 = vadd.f32 %v5555, %v5687
        %v5768 = vadd.f32 %v5556, %v5627
        %v5769 = vadd.f32 %v5557, %v5631
        %v5770 = vadd.f32 %v5558, %v5635
        %v5771 = vadd.f32 %v5559, %v5639
        %v5772 = vadd.f32 %v5560, %v5643
        %v5773 = vadd.f32 %v5561, %v5647
        %v5774 = vadd.f32 %v5562, %v5651
        %v5775 = vadd.f32 %v5563, %v5655
        %v5776 = vadd.f32 %v5564, %v5659
        %v5777 = vadd.f32 %v5565, %v5663
        %v5778 = vadd.f32 %v5566, %v5667
        %v5779 = vadd.f32 %v5567, %v5671
        %v5780 = vadd.f32 %v5568, %v5675
        %v5781 = vadd.f32 %v5569, %v5679
        %v5782 = vadd.f32 %v5570, %v5683
        %v5783 = vadd.f32 %v5571, %v5687
        %v5784 = vadd.f32 %v5572, %v5627
        %v5785 = vadd.f32 %v5573, %v5631
        %v5786 = vadd.f32 %v5574, %v5635
        %v5787 = vadd.f32 %v5575, %v5639
        %v5788 = vadd.f32 %v5576, %v5643
        %v5789 = vadd.f32 %v5577, %v5647
        %v5790 = vadd.f32 %v5578, %v5651
        %v5791 = vadd.f32 %v5579, %v5655
        %v5792 = vadd.f32 %v5580, %v5659
        %v5793 = vadd.f32 %v5581, %v5663
        %v5794 = vadd.f32 %v5582, %v5667
        %v5795 = vadd.f32 %v5583, %v5671
        %v5796 = vadd.f32 %v5584, %v5675
        %v5797 = vadd.f32 %v5585, %v5679
        %v5798 = vadd.f32 %v5586, %v5683
        %v5799 = vadd.f32 %v5587, %v5687
        %v5800 = vadd.f32 %v5588, %v5627
        %v5801 = vadd.f32 %v5589, %v5631
        %v5802 = vadd.f32 %v5590, %v5635
        %v5803 = vadd.f32 %v5591, %v5639
        %v5804 = vadd.f32 %v5592, %v5643
        %v5805 = vadd.f32 %v5593, %v5647
        %v5806 = vadd.f32 %v5594, %v5651
        %v5807 = vadd.f32 %v5595, %v5655
        %v5808 = vadd.f32 %v5596, %v5659
        %v5809 = vadd.f32 %v5597, %v5663
        %v5810 = vadd.f32 %v5598, %v5667
        %v5811 = vadd.f32 %v5599, %v5671
        %v5812 = vadd.f32 %v5600, %v5675
        %v5813 = vadd.f32 %v5601, %v5679
        %v5814 = vadd.f32 %v5602, %v5683
        %v5815 = vadd.f32 %v5603, %v5687
        %v5816 = vadd.f32 %v5604, %v5627
        %v5817 = vadd.f32 %v5605, %v5631
        %v5818 = vadd.f32 %v5606, %v5635
        %v5819 = vadd.f32 %v5607, %v5639
        %v5820 = vadd.f32 %v5608, %v5643
        %v5821 = vadd.f32 %v5609, %v5647
        %v5822 = vadd.f32 %v5610, %v5651
        %v5823 = vadd.f32 %v5611, %v5655
        %v5824 = vadd.f32 %v5612, %v5659
        %v5825 = vadd.f32 %v5613, %v5663
        %v5826 = vadd.f32 %v5614, %v5667
        %v5827 = vadd.f32 %v5615, %v5671
        %v5828 = vadd.f32 %v5616, %v5675
        %v5829 = vadd.f32 %v5617, %v5679
        %v5830 = vadd.f32 %v5618, %v5683
        %v5831 = vadd.f32 %v5619, %v5687
        %5832 = vst [vmem:[%s245] sm:$0xff] %v5704
        %5833 = vst [vmem:[%s245 + $0x8] sm:$0xff] %v5705
        %5834 = vst [vmem:[%s245 + $0x10] sm:$0xff] %v5706
        %5835 = vst [vmem:[%s245 + $0x18] sm:$0xff] %v5707
        %5836 = vst [vmem:[%s245 + $0x20] sm:$0xff] %v5708
        %5837 = vst [vmem:[%s245 + $0x28] sm:$0xff] %v5709
        %5838 = vst [vmem:[%s245 + $0x30] sm:$0xff] %v5710
        %5839 = vst [vmem:[%s245 + $0x38] sm:$0xff] %v5711
        %5840 = vst [vmem:[%s245 + $0x40] sm:$0xff] %v5712
        %5841 = vst [vmem:[%s245 + $0x48] sm:$0xff] %v5713
        %5842 = vst [vmem:[%s245 + $0x50] sm:$0xff] %v5714
        %5843 = vst [vmem:[%s245 + $0x58] sm:$0xff] %v5715
        %5844 = vst [vmem:[%s245 + $0x60] sm:$0xff] %v5716
        %5845 = vst [vmem:[%s245 + $0x68] sm:$0xff] %v5717
        %5846 = vst [vmem:[%s245 + $0x70] sm:$0xff] %v5718
        %5847 = vst [vmem:[%s245 + $0x78] sm:$0xff] %v5719
        %5848 = vst [vmem:[%s245 + $0x80] sm:$0xff] %v5720
        %5849 = vst [vmem:[%s245 + $0x88] sm:$0xff] %v5721
        %5850 = vst [vmem:[%s245 + $0x90] sm:$0xff] %v5722
        %5851 = vst [vmem:[%s245 + $0x98] sm:$0xff] %v5723
        %5852 = vst [vmem:[%s245 + $0xa0] sm:$0xff] %v5724
        %5853 = vst [vmem:[%s245 + $0xa8] sm:$0xff] %v5725
        %5854 = vst [vmem:[%s245 + $0xb0] sm:$0xff] %v5726
        %5855 = vst [vmem:[%s245 + $0xb8] sm:$0xff] %v5727
        %5856 = vst [vmem:[%s245 + $0xc0] sm:$0xff] %v5728
        %5857 = vst [vmem:[%s245 + $0xc8] sm:$0xff] %v5729
        %5858 = vst [vmem:[%s245 + $0xd0] sm:$0xff] %v5730
        %5859 = vst [vmem:[%s245 + $0xd8] sm:$0xff] %v5731
        %5860 = vst [vmem:[%s245 + $0xe0] sm:$0xff] %v5732
        %5861 = vst [vmem:[%s245 + $0xe8] sm:$0xff] %v5733
        %5862 = vst [vmem:[%s245 + $0xf0] sm:$0xff] %v5734
        %5863 = vst [vmem:[%s245 + $0xf8] sm:$0xff] %v5735
        %5864 = vst [vmem:[%s245 + $0x100] sm:$0xff] %v5736
        %5865 = vst [vmem:[%s245 + $0x108] sm:$0xff] %v5737
        %5866 = vst [vmem:[%s245 + $0x110] sm:$0xff] %v5738
        %5867 = vst [vmem:[%s245 + $0x118] sm:$0xff] %v5739
        %5868 = vst [vmem:[%s245 + $0x120] sm:$0xff] %v5740
        %5869 = vst [vmem:[%s245 + $0x128] sm:$0xff] %v5741
        %5870 = vst [vmem:[%s245 + $0x130] sm:$0xff] %v5742
        %5871 = vst [vmem:[%s245 + $0x138] sm:$0xff] %v5743
        %5872 = vst [vmem:[%s245 + $0x140] sm:$0xff] %v5744
        %5873 = vst [vmem:[%s245 + $0x148] sm:$0xff] %v5745
        %5874 = vst [vmem:[%s245 + $0x150] sm:$0xff] %v5746
        %5875 = vst [vmem:[%s245 + $0x158] sm:$0xff] %v5747
        %5876 = vst [vmem:[%s245 + $0x160] sm:$0xff] %v5748
        %5877 = vst [vmem:[%s245 + $0x168] sm:$0xff] %v5749
        %5878 = vst [vmem:[%s245 + $0x170] sm:$0xff] %v5750
        %5879 = vst [vmem:[%s245 + $0x178] sm:$0xff] %v5751
        %5880 = vst [vmem:[%s245 + $0x180] sm:$0xff] %v5752
        %5881 = vst [vmem:[%s245 + $0x188] sm:$0xff] %v5753
        %5882 = vst [vmem:[%s245 + $0x190] sm:$0xff] %v5754
        %5883 = vst [vmem:[%s245 + $0x198] sm:$0xff] %v5755
        %5884 = vst [vmem:[%s245 + $0x1a0] sm:$0xff] %v5756
        %5885 = vst [vmem:[%s245 + $0x1a8] sm:$0xff] %v5757
        %5886 = vst [vmem:[%s245 + $0x1b0] sm:$0xff] %v5758
        %5887 = vst [vmem:[%s245 + $0x1b8] sm:$0xff] %v5759
        %5888 = vst [vmem:[%s245 + $0x1c0] sm:$0xff] %v5760
        %5889 = vst [vmem:[%s245 + $0x1c8] sm:$0xff] %v5761
        %5890 = vst [vmem:[%s245 + $0x1d0] sm:$0xff] %v5762
        %5891 = vst [vmem:[%s245 + $0x1d8] sm:$0xff] %v5763
        %5892 = vst [vmem:[%s245 + $0x1e0] sm:$0xff] %v5764
        %5893 = vst [vmem:[%s245 + $0x1e8] sm:$0xff] %v5765
        %5894 = vst [vmem:[%s245 + $0x1f0] sm:$0xff] %v5766
        %5895 = vst [vmem:[%s245 + $0x1f8] sm:$0xff] %v5767
        %5896 = vst [vmem:[%s245 + $0x200] sm:$0xff] %v5768
        %5897 = vst [vmem:[%s245 + $0x208] sm:$0xff] %v5769
        %5898 = vst [vmem:[%s245 + $0x210] sm:$0xff] %v5770
        %5899 = vst [vmem:[%s245 + $0x218] sm:$0xff] %v5771
        %5900 = vst [vmem:[%s245 + $0x220] sm:$0xff] %v5772
        %5901 = vst [vmem:[%s245 + $0x228] sm:$0xff] %v5773
        %5902 = vst [vmem:[%s245 + $0x230] sm:$0xff] %v5774
        %5903 = vst [vmem:[%s245 + $0x238] sm:$0xff] %v5775
        %5904 = vst [vmem:[%s245 + $0x240] sm:$0xff] %v5776
        %5905 = vst [vmem:[%s245 + $0x248] sm:$0xff] %v5777
        %5906 = vst [vmem:[%s245 + $0x250] sm:$0xff] %v5778
        %5907 = vst [vmem:[%s245 + $0x258] sm:$0xff] %v5779
        %5908 = vst [vmem:[%s245 + $0x260] sm:$0xff] %v5780
        %5909 = vst [vmem:[%s245 + $0x268] sm:$0xff] %v5781
        %5910 = vst [vmem:[%s245 + $0x270] sm:$0xff] %v5782
        %5911 = vst [vmem:[%s245 + $0x278] sm:$0xff] %v5783
        %5912 = vst [vmem:[%s245 + $0x280] sm:$0xff] %v5784
        %5913 = vst [vmem:[%s245 + $0x288] sm:$0xff] %v5785
        %5914 = vst [vmem:[%s245 + $0x290] sm:$0xff] %v5786
        %5915 = vst [vmem:[%s245 + $0x298] sm:$0xff] %v5787
        %5916 = vst [vmem:[%s245 + $0x2a0] sm:$0xff] %v5788
        %5917 = vst [vmem:[%s245 + $0x2a8] sm:$0xff] %v5789
        %5918 = vst [vmem:[%s245 + $0x2b0] sm:$0xff] %v5790
        %5919 = vst [vmem:[%s245 + $0x2b8] sm:$0xff] %v5791
        %5920 = vst [vmem:[%s245 + $0x2c0] sm:$0xff] %v5792
        %5921 = vst [vmem:[%s245 + $0x2c8] sm:$0xff] %v5793
        %5922 = vst [vmem:[%s245 + $0x2d0] sm:$0xff] %v5794
        %5923 = vst [vmem:[%s245 + $0x2d8] sm:$0xff] %v5795
        %5924 = vst [vmem:[%s245 + $0x2e0] sm:$0xff] %v5796
        %5925 = vst [vmem:[%s245 + $0x2e8] sm:$0xff] %v5797
        %5926 = vst [vmem:[%s245 + $0x2f0] sm:$0xff] %v5798
        %5927 = vst [vmem:[%s245 + $0x2f8] sm:$0xff] %v5799
        %5928 = vst [vmem:[%s245 + $0x300] sm:$0xff] %v5800
        %5929 = vst [vmem:[%s245 + $0x308] sm:$0xff] %v5801
        %5930 = vst [vmem:[%s245 + $0x310] sm:$0xff] %v5802
        %5931 = vst [vmem:[%s245 + $0x318] sm:$0xff] %v5803
        %5932 = vst [vmem:[%s245 + $0x320] sm:$0xff] %v5804
        %5933 = vst [vmem:[%s245 + $0x328] sm:$0xff] %v5805
        %5934 = vst [vmem:[%s245 + $0x330] sm:$0xff] %v5806
        %5935 = vst [vmem:[%s245 + $0x338] sm:$0xff] %v5807
        %5936 = vst [vmem:[%s245 + $0x340] sm:$0xff] %v5808
        %5937 = vst [vmem:[%s245 + $0x348] sm:$0xff] %v5809
        %5938 = vst [vmem:[%s245 + $0x350] sm:$0xff] %v5810
        %5939 = vst [vmem:[%s245 + $0x358] sm:$0xff] %v5811
        %5940 = vst [vmem:[%s245 + $0x360] sm:$0xff] %v5812
        %5941 = vst [vmem:[%s245 + $0x368] sm:$0xff] %v5813
        %5942 = vst [vmem:[%s245 + $0x370] sm:$0xff] %v5814
        %5943 = vst [vmem:[%s245 + $0x378] sm:$0xff] %v5815
        %5944 = vst [vmem:[%s245 + $0x380] sm:$0xff] %v5816
        %5945 = vst [vmem:[%s245 + $0x388] sm:$0xff] %v5817
        %5946 = vst [vmem:[%s245 + $0x390] sm:$0xff] %v5818
        %5947 = vst [vmem:[%s245 + $0x398] sm:$0xff] %v5819
        %5948 = vst [vmem:[%s245 + $0x3a0] sm:$0xff] %v5820
        %5949 = vst [vmem:[%s245 + $0x3a8] sm:$0xff] %v5821
        %5950 = vst [vmem:[%s245 + $0x3b0] sm:$0xff] %v5822
        %5951 = vst [vmem:[%s245 + $0x3b8] sm:$0xff] %v5823
        %5952 = vst [vmem:[%s245 + $0x3c0] sm:$0xff] %v5824
        %5953 = vst [vmem:[%s245 + $0x3c8] sm:$0xff] %v5825
        %5954 = vst [vmem:[%s245 + $0x3d0] sm:$0xff] %v5826
        %5955 = vst [vmem:[%s245 + $0x3d8] sm:$0xff] %v5827
        %5956 = vst [vmem:[%s245 + $0x3e0] sm:$0xff] %v5828
        %5957 = vst [vmem:[%s245 + $0x3e8] sm:$0xff] %v5829
        %5958 = vst [vmem:[%s245 + $0x3f0] sm:$0xff] %v5830
        %5959 = vst [vmem:[%s245 + $0x3f8] sm:$0xff] %v5831
        %s5960 = sand.u32 %s159, 1
        %s5961 = scalar_lea.sflag [#allocation3], %s5960
        %s5962 = sand.u32 %s159, 1
        %s5963 = smul.addr %s5962, 1024
        %s5964 = scalar_lea.vmem [#allocation2], %s5963
        // Predicated region
        $region45: #{tpu_custom_call.1} parent=43 // pred_check
          %p5965 = pneg %p169
        $region46: #{tpu_custom_call.1} parent=43 // pred_check_branch
          %5967 = sbr.rel (%p5965) target = $region48
        $region47: #{tpu_custom_call.1} parent=43 // pred_region
          %s5968 = smul.u32 8, %s20
          %s5970 = ssub.s32 16384, 16384
          %5971 = vsyncadd %s5961, %s5970
          %s5972 = smul.addr %s5968, 16
          %s5973 = smul.addr %s5972, 128
          %s5974 = scalar_lea.hbm %s6, %s5973
          %s5975 = sshll.u32 %s5964, 4
          %s5976 = int_to_ptr.vmem [resolvable:$true] %s5975
          %5981 = dma.vmem_to_hbm [thread:$0]  %s5976, 16384, %s5974, %s5961, 2048, 2048, 128
        $region48: #{tpu_custom_call.1} parent=43 // pred_fallthru
          _
      $region44: #{tpu_custom_call.1} parent=5 // pred_fallthru
        _
      %p5982 = scmp.le.s32.totalorder 2, %s15
      // Predicated region
      $region49: #{tpu_custom_call.1} parent=5 // pred_check
        %p5983 = pneg %p5982
      $region50: #{tpu_custom_call.1} parent=5 // pred_check_branch
        %5985 = sbr.rel (%p5983) target = $region52
      $region51: #{tpu_custom_call.1} parent=5 // pred_region
        %s5986 = ssub.s32 %s15, 2
        // Predicated region
        $region53: #{tpu_custom_call.1} parent=51 // pred_check
          %p5987 = pneg %p175
        $region54: #{tpu_custom_call.1} parent=51 // pred_check_branch
          %5989 = sbr.rel (%p5987) target = $region56
        $region55: #{tpu_custom_call.1} parent=51 // pred_region
          %s5990 = sand.u32 %s160, 1
          %s5991 = scalar_lea.sflag [#allocation3], %s5990
          %s5992 = sand.u32 %s160, 1
          %s5993 = smul.addr %s5992, 1024
          %s5994 = scalar_lea.vmem [#allocation2], %s5993
          %5995 = dma.done %s5991, 16384
        $region56: #{tpu_custom_call.1} parent=51 // pred_fallthru
          _
      $region52: #{tpu_custom_call.1} parent=5 // pred_fallthru
        _
    $region6: #{tpu_custom_call.1} parent=1 // loop_footer
      %s19 = sadd.s32 1, %s15
    $region7: #{tpu_custom_call.1} parent=1 // loop_footer_branch
      %14 = sbr.rel target = $region3
    $region8: #{tpu_custom_call.1} parent=1 // loop_exit
      _
    %5996 = vsyncpa [#allocation3], 1
    %s5997 = scalar_lea.sflag [#allocation3], 1
    %5998 = vsyncpa %s5997, 1

</llo_original>
